<compile_context>
chip_gen: v5e
topology: v5e:2x2
jax: 0.10.0
libtpu: 0.0.40
codegen_flags: <defaults>
</compile_context>

<pallas_src>
import functools
import math

import jax
import jax.numpy as jnp
from jax.experimental import pallas as pl
from jax.experimental.pallas import tpu as pltpu


# ----------------------------- kernel helpers ------------------------------

def _layer_norm(x, w, b, eps=1e-5):
    # x: (S, D) f32, w/b: (1, D) f32
    mu = jnp.mean(x, axis=-1, keepdims=True)
    var = jnp.mean(jnp.square(x - mu), axis=-1, keepdims=True)
    return (x - mu) * jax.lax.rsqrt(var + eps) * w + b


def _mha(q_in, k_in, v_in, wq, bq, wk, bk, wv, bv, wo, ob, *, nhead, compute_dtype):
    """Multi-head attention.

    q_in: (Tq, D) f32; k_in/v_in: (Tk, D) f32.
    wq/wk/wv/wo: lane-dense (D, D) compute_dtype, already transposed for x @ W;
    the 1/sqrt(hd) score scale is folded into wq/bq.  Biases: (1, D) f32.
    Returns (Tq, D) f32.
    """
    Tq, D = q_in.shape
    Tk = k_in.shape[0]
    hd = D // nhead

    # Lane-dense projections: three (T,D)@(D,D) MXU matmuls, f32 accumulation.
    qp = jnp.dot(q_in.astype(compute_dtype), wq, preferred_element_type=jnp.float32) + bq
    kp = jnp.dot(k_in.astype(compute_dtype), wk, preferred_element_type=jnp.float32) + bk
    vp = jnp.dot(v_in.astype(compute_dtype), wv, preferred_element_type=jnp.float32) + bv

    # Split heads only for the score / P@V contractions.
    qh = jnp.transpose(qp.reshape(Tq, nhead, hd), (1, 0, 2)).astype(compute_dtype)  # (H,Tq,hd)
    kh = jnp.transpose(kp.reshape(Tk, nhead, hd), (1, 0, 2)).astype(compute_dtype)  # (H,Tk,hd)
    vh = jnp.transpose(vp.reshape(Tk, nhead, hd), (1, 0, 2)).astype(compute_dtype)  # (H,Tk,hd)

    s = jnp.einsum("hqe,hke->hqk", qh, kh,
                   preferred_element_type=jnp.float32)                 # (H, Tq, Tk)
    s = s - jnp.max(s, axis=-1, keepdims=True)
    p = jnp.exp(s)
    p = p * pl.reciprocal(jnp.sum(p, axis=-1, keepdims=True), approx=True)

    o = jnp.einsum("hqk,hke->hqe", p.astype(compute_dtype), vh,
                   preferred_element_type=jnp.float32)                 # (H, Tq, hd)
    # Merge heads (== concat along features) and project with ONE (T,D)@(D,D) matmul.
    o = jnp.transpose(o, (1, 0, 2)).reshape(Tq, D)
    return jnp.dot(o.astype(compute_dtype), wo, preferred_element_type=jnp.float32) + ob


# -------------------------------- kernel -----------------------------------

def decoder_layer_kernel(
    tgt_ref, mem_ref, qpos_ref, pos_ref,
    sa_wq_ref, sa_bq_ref, sa_wk_ref, sa_bk_ref, sa_wv_ref, sa_bv_ref, sa_wo_ref, sa_ob_ref,
    ca_wq_ref, ca_bq_ref, ca_wk_ref, ca_bk_ref, ca_wv_ref, ca_bv_ref, ca_wo_ref, ca_ob_ref,
    ln1_w_ref, ln1_b_ref, ln2_w_ref, ln2_b_ref, ln3_w_ref, ln3_b_ref,
    w1_ref, b1_ref, w2_ref, b2_ref,
    out_ref,
    *, nhead, compute_dtype,
):
    # One grid step == one batch element; every load/store is a whole lane-dense tile.
    tgt = tgt_ref[...].astype(jnp.float32)     # (T, D)
    mem = mem_ref[...].astype(jnp.float32)     # (S, D)
    qpos = qpos_ref[...].astype(jnp.float32)   # (T, D)
    pos = pos_ref[...].astype(jnp.float32)     # (S, D)

    sa_w = (sa_wq_ref[...], sa_bq_ref[...], sa_wk_ref[...], sa_bk_ref[...],
            sa_wv_ref[...], sa_bv_ref[...], sa_wo_ref[...], sa_ob_ref[...])
    ca_w = (ca_wq_ref[...], ca_bq_ref[...], ca_wk_ref[...], ca_bk_ref[...],
            ca_wv_ref[...], ca_bv_ref[...], ca_wo_ref[...], ca_ob_ref[...])

    # ---- self-attention block (pre-norm); dropout1 = identity ----
    t2 = _layer_norm(tgt, ln1_w_ref[...], ln1_b_ref[...])
    qk = t2 + qpos
    tgt = tgt + _mha(qk, qk, t2, *sa_w, nhead=nhead, compute_dtype=compute_dtype)

    # ---- cross-attention block; dropout2 = identity ----
    t2 = _layer_norm(tgt, ln2_w_ref[...], ln2_b_ref[...])
    tgt = tgt + _mha(t2 + qpos, mem + pos, mem, *ca_w,
                     nhead=nhead, compute_dtype=compute_dtype)

    # ---- feed-forward block; dropout / dropout3 = identity ----
    t2 = _layer_norm(tgt, ln3_w_ref[...], ln3_b_ref[...])
    h = jnp.dot(t2.astype(compute_dtype), w1_ref[...],
                preferred_element_type=jnp.float32) + b1_ref[...]
    h = jnp.maximum(h, 0.0)                    # relu
    ffn = jnp.dot(h.astype(compute_dtype), w2_ref[...],
                  preferred_element_type=jnp.float32) + b2_ref[...]

    out_ref[...] = (tgt + ffn).astype(out_ref.dtype)


# --------------------- host-side parameter preparation ----------------------

def _prepare_params(params, nhead, compute_dtype):
    """Pre-transpose everything into lane-dense 2-D slabs; fold the score scale."""
    D = params["ln1_w"].shape[-1]
    hd = D // nhead
    scale = 1.0 / math.sqrt(hd)
    cdt = compute_dtype

    def attn(in_w, in_b, out_w, out_b):
        # in_w: (3D, D) packed [Wq; Wk; Wv]; in_b: (1, 3D); out_w: (D, D); out_b: (1, D)
        wq = (in_w[0:D].T * scale).astype(cdt)              # (D, D), scale folded in
        bq = (in_b[:, 0:D] * scale).astype(jnp.float32)     # (1, D)
        wk = in_w[D:2 * D].T.astype(cdt)
        bk = in_b[:, D:2 * D].astype(jnp.float32)
        wv = in_w[2 * D:3 * D].T.astype(cdt)
        bv = in_b[:, 2 * D:3 * D].astype(jnp.float32)
        wo = out_w.T.astype(cdt)                            # (D, D)
        ob = out_b.astype(jnp.float32)                      # (1, D)
        return wq, bq, wk, bk, wv, bv, wo, ob

    sa = attn(params["sa_in_w"], params["sa_in_b"], params["sa_out_w"], params["sa_out_b"])
    ca = attn(params["ca_in_w"], params["ca_in_b"], params["ca_out_w"], params["ca_out_b"])

    return (
        *sa, *ca,
        params["ln1_w"].astype(jnp.float32), params["ln1_b"].astype(jnp.float32),
        params["ln2_w"].astype(jnp.float32), params["ln2_b"].astype(jnp.float32),
        params["ln3_w"].astype(jnp.float32), params["ln3_b"].astype(jnp.float32),
        params["lin1_w"].T.astype(cdt), params["lin1_b"].astype(jnp.float32),   # (D, F), (1, F)
        params["lin2_w"].T.astype(cdt), params["lin2_b"].astype(jnp.float32),   # (F, D), (1, D)
    )


# ------------------------------- wrapper ------------------------------------

def transformer_decoder_layer(tgt, memory, params, query_pos, pos, *, nhead,
                              compute_dtype=jnp.bfloat16):
    """tgt/query_pos: (T, B, D); memory/pos: (S, B, D). Returns (T, B, D).

    compute_dtype controls MXU operand dtype (bf16 recommended on all TPU
    generations -- the MXU takes bf16 natively even on v5e); accumulation and all
    elementwise math (LayerNorm / softmax / residuals) stay float32.
    """
    T, B, D = tgt.shape
    S = memory.shape[0]
    prepared = _prepare_params(params, nhead, compute_dtype)

    # Batch-major, lane-dense layout for the kernel (cheap one-time XLA transposes).
    tgt_b = jnp.transpose(tgt, (1, 0, 2))        # (B, T, D)
    mem_b = jnp.transpose(memory, (1, 0, 2))     # (B, S, D)
    qpos_b = jnp.transpose(query_pos, (1, 0, 2))
    pos_b = jnp.transpose(pos, (1, 0, 2))

    act_t_spec = pl.BlockSpec((None, T, D), lambda b: (b, 0, 0))
    act_s_spec = pl.BlockSpec((None, S, D), lambda b: (b, 0, 0))
    w_specs = [pl.BlockSpec(w.shape, lambda b: (0, 0)) for w in prepared]  # grid-invariant

    kernel = functools.partial(decoder_layer_kernel, nhead=nhead,
                               compute_dtype=compute_dtype)
    out_b = pl.pallas_call(
        kernel,
        out_shape=jax.ShapeDtypeStruct((B, T, D), tgt.dtype),
        grid=(B,),
        in_specs=[act_t_spec, act_s_spec, act_t_spec, act_s_spec, *w_specs],
        out_specs=pl.BlockSpec((None, T, D), lambda b: (b, 0, 0)),
        compiler_params=pltpu.CompilerParams(
            dimension_semantics=("parallel",)),   # shards batch across v7x's 2 TCs
    )(tgt_b, mem_b, qpos_b, pos_b, *prepared)

    return jnp.transpose(out_b, (1, 0, 2))       # back to (T, B, D)


# ------------------------- pure-JAX reference -------------------------------

def _ref_layer_norm(x, w, b, eps=1e-5):
    mu = jnp.mean(x, axis=-1, keepdims=True)
    var = jnp.mean((x - mu) ** 2, axis=-1, keepdims=True)
    return (x - mu) / jnp.sqrt(var + eps) * w[0] + b[0]


def _ref_mha(q, k, v, in_w, in_b, out_w, out_b, nhead):
    d = q.shape[-1]
    hd = d // nhead
    qp = q @ in_w[0:d].T + in_b[0, 0:d]
    kp = k @ in_w[d:2 * d].T + in_b[0, d:2 * d]
    vp = v @ in_w[2 * d:].T + in_b[0, 2 * d:]
    Tq, Tk = q.shape[0], k.shape[0]
    qh = qp.reshape(Tq, nhead, hd).transpose(1, 0, 2) / math.sqrt(hd)
    kh = kp.reshape(Tk, nhead, hd).transpose(1, 0, 2)
    vh = vp.reshape(Tk, nhead, hd).transpose(1, 0, 2)
    s = jnp.einsum("hqd,hkd->hqk", qh, kh)
    p = jax.nn.softmax(s, axis=-1)
    o = jnp.einsum("hqk,hkd->hqd", p, vh).transpose(1, 0, 2).reshape(Tq, d)
    return o @ out_w.T + out_b[0]


def reference_forward(tgt, memory, params, query_pos, pos, *, nhead):
    T, B, D = tgt.shape
    outs = []
    for b in range(B):
        t, m = tgt[:, b], memory[:, b]
        qp_, p_ = query_pos[:, b], pos[:, b]
        t2 = _ref_layer_norm(t, params["ln1_w"], params["ln1_b"])
        qk = t2 + qp_
        t = t + _ref_mha(qk, qk, t2, params["sa_in_w"], params["sa_in_b"],
                         params["sa_out_w"], params["sa_out_b"], nhead)
        t2 = _ref_layer_norm(t, params["ln2_w"], params["ln2_b"])
        t = t + _ref_mha(t2 + qp_, m + p_, m, params["ca_in_w"], params["ca_in_b"],
                         params["ca_out_w"], params["ca_out_b"], nhead)
        t2 = _ref_layer_norm(t, params["ln3_w"], params["ln3_b"])
        h = jnp.maximum(t2 @ params["lin1_w"].T + params["lin1_b"][0], 0.0)
        t = t + h @ params["lin2_w"].T + params["lin2_b"][0]
        outs.append(t)
    return jnp.stack(outs, axis=1)


# --------------------------------- main --------------------------------------

if __name__ == "__main__":
    d_model, nhead, dim_ff = 32, 4, 64
    T, S, B = 8, 16, 2

    key = jax.random.PRNGKey(0)
    ks = jax.random.split(key, 16)

    def rnd(k, shape, scale=0.05):
        return (scale * jax.random.normal(k, shape)).astype(jnp.float32)

    params = {
        "sa_in_w": rnd(ks[0], (3 * d_model, d_model)),
        "sa_in_b": rnd(ks[1], (1, 3 * d_model)),
        "sa_out_w": rnd(ks[2], (d_model, d_model)),
        "sa_out_b": rnd(ks[3], (1, d_model)),
        "ca_in_w": rnd(ks[4], (3 * d_model, d_model)),
        "ca_in_b": rnd(ks[5], (1, 3 * d_model)),
        "ca_out_w": rnd(ks[6], (d_model, d_model)),
        "ca_out_b": rnd(ks[7], (1, d_model)),
        "ln1_w": jnp.ones((1, d_model), jnp.float32),
        "ln1_b": jnp.zeros((1, d_model), jnp.float32),
        "ln2_w": jnp.ones((1, d_model), jnp.float32),
        "ln2_b": jnp.zeros((1, d_model), jnp.float32),
        "ln3_w": jnp.ones((1, d_model), jnp.float32),
        "ln3_b": jnp.zeros((1, d_model), jnp.float32),
        "lin1_w": rnd(ks[8], (dim_ff, d_model)),
        "lin1_b": rnd(ks[9], (1, dim_ff)),
        "lin2_w": rnd(ks[10], (d_model, dim_ff)),
        "lin2_b": rnd(ks[11], (1, d_model)),
    }

    tgt = rnd(ks[12], (T, B, d_model), scale=1.0)
    memory = rnd(ks[13], (S, B, d_model), scale=1.0)
    query_pos = rnd(ks[14], (T, B, d_model), scale=1.0)
    pos = rnd(ks[15], (S, B, d_model), scale=1.0)

    ref = reference_forward(tgt, memory, params, query_pos, pos, nhead=nhead)

    # f32 MXU operands — tight check vs. the pure-JAX reference.
    out = transformer_decoder_layer(tgt, memory, params, query_pos, pos,
                                    nhead=nhead, compute_dtype=jnp.float32)
    out = jax.block_until_ready(out)
    assert out.shape == (T, B, d_model)
    assert jnp.allclose(out, ref, atol=5e-3, rtol=5e-3), "f32 kernel mismatch vs reference"

    # bf16 MXU operands, f32 accumulation / elementwise (fast path on all generations).
    out_bf16 = transformer_decoder_layer(tgt, memory, params, query_pos, pos,
                                         nhead=nhead, compute_dtype=jnp.bfloat16)
    out_bf16 = jax.block_until_ready(out_bf16)
    assert jnp.allclose(out_bf16, ref, atol=5e-2, rtol=5e-2), "bf16 kernel mismatch vs reference"

    print("KERNEL_OK")
</pallas_src>

<mosaic_0001>
module attributes {stable_mosaic.version = 11 : i64} {
  func.func @decoder_layer_kernel(%arg0: i32, %arg1: memref<1x8x32xf32, #tpu.memory_space<vmem>>, %arg2: memref<1x16x32xf32, #tpu.memory_space<vmem>>, %arg3: memref<1x8x32xf32, #tpu.memory_space<vmem>>, %arg4: memref<1x16x32xf32, #tpu.memory_space<vmem>>, %arg5: memref<32x32xf32, #tpu.memory_space<vmem>>, %arg6: memref<1x32xf32, #tpu.memory_space<vmem>>, %arg7: memref<32x32xf32, #tpu.memory_space<vmem>>, %arg8: memref<1x32xf32, #tpu.memory_space<vmem>>, %arg9: memref<32x32xf32, #tpu.memory_space<vmem>>, %arg10: memref<1x32xf32, #tpu.memory_space<vmem>>, %arg11: memref<32x32xf32, #tpu.memory_space<vmem>>, %arg12: memref<1x32xf32, #tpu.memory_space<vmem>>, %arg13: memref<32x32xf32, #tpu.memory_space<vmem>>, %arg14: memref<1x32xf32, #tpu.memory_space<vmem>>, %arg15: memref<32x32xf32, #tpu.memory_space<vmem>>, %arg16: memref<1x32xf32, #tpu.memory_space<vmem>>, %arg17: memref<32x32xf32, #tpu.memory_space<vmem>>, %arg18: memref<1x32xf32, #tpu.memory_space<vmem>>, %arg19: memref<32x32xf32, #tpu.memory_space<vmem>>, %arg20: memref<1x32xf32, #tpu.memory_space<vmem>>, %arg21: memref<1x32xf32, #tpu.memory_space<vmem>>, %arg22: memref<1x32xf32, #tpu.memory_space<vmem>>, %arg23: memref<1x32xf32, #tpu.memory_space<vmem>>, %arg24: memref<1x32xf32, #tpu.memory_space<vmem>>, %arg25: memref<1x32xf32, #tpu.memory_space<vmem>>, %arg26: memref<1x32xf32, #tpu.memory_space<vmem>>, %arg27: memref<32x64xf32, #tpu.memory_space<vmem>>, %arg28: memref<1x64xf32, #tpu.memory_space<vmem>>, %arg29: memref<64x32xf32, #tpu.memory_space<vmem>>, %arg30: memref<1x32xf32, #tpu.memory_space<vmem>>, %arg31: memref<1x8x32xf32, #tpu.memory_space<vmem>>) attributes {dimension_semantics = [#tpu.dimension_semantics<parallel>], iteration_bounds = array<i64: 2>, scalar_prefetch = 0 : i64, scratch_operands = 0 : i64, tpu.core_type = #tpu.core_type<tc>, window_params = [{transform_indices = @transform_0, window_bounds = array<i64: 1, 8, 32>}, {transform_indices = @transform_1, window_bounds = array<i64: 1, 16, 32>}, {transform_indices = @transform_2, window_bounds = array<i64: 1, 8, 32>}, {transform_indices = @transform_3, window_bounds = array<i64: 1, 16, 32>}, {pipeline_mode = #tpu.pipeline_mode<synchronous>, transform_indices = @transform_4, window_bounds = array<i64: 32, 32>}, {pipeline_mode = #tpu.pipeline_mode<synchronous>, transform_indices = @transform_5, window_bounds = array<i64: 1, 32>}, {pipeline_mode = #tpu.pipeline_mode<synchronous>, transform_indices = @transform_6, window_bounds = array<i64: 32, 32>}, {pipeline_mode = #tpu.pipeline_mode<synchronous>, transform_indices = @transform_7, window_bounds = array<i64: 1, 32>}, {pipeline_mode = #tpu.pipeline_mode<synchronous>, transform_indices = @transform_8, window_bounds = array<i64: 32, 32>}, {pipeline_mode = #tpu.pipeline_mode<synchronous>, transform_indices = @transform_9, window_bounds = array<i64: 1, 32>}, {pipeline_mode = #tpu.pipeline_mode<synchronous>, transform_indices = @transform_10, window_bounds = array<i64: 32, 32>}, {pipeline_mode = #tpu.pipeline_mode<synchronous>, transform_indices = @transform_11, window_bounds = array<i64: 1, 32>}, {pipeline_mode = #tpu.pipeline_mode<synchronous>, transform_indices = @transform_12, window_bounds = array<i64: 32, 32>}, {pipeline_mode = #tpu.pipeline_mode<synchronous>, transform_indices = @transform_13, window_bounds = array<i64: 1, 32>}, {pipeline_mode = #tpu.pipeline_mode<synchronous>, transform_indices = @transform_14, window_bounds = array<i64: 32, 32>}, {pipeline_mode = #tpu.pipeline_mode<synchronous>, transform_indices = @transform_15, window_bounds = array<i64: 1, 32>}, {pipeline_mode = #tpu.pipeline_mode<synchronous>, transform_indices = @transform_16, window_bounds = array<i64: 32, 32>}, {pipeline_mode = #tpu.pipeline_mode<synchronous>, transform_indices = @transform_17, window_bounds = array<i64: 1, 32>}, {pipeline_mode = #tpu.pipeline_mode<synchronous>, transform_indices = @transform_18, window_bounds = array<i64: 32, 32>}, {pipeline_mode = #tpu.pipeline_mode<synchronous>, transform_indices = @transform_19, window_bounds = array<i64: 1, 32>}, {pipeline_mode = #tpu.pipeline_mode<synchronous>, transform_indices = @transform_20, window_bounds = array<i64: 1, 32>}, {pipeline_mode = #tpu.pipeline_mode<synchronous>, transform_indices = @transform_21, window_bounds = array<i64: 1, 32>}, {pipeline_mode = #tpu.pipeline_mode<synchronous>, transform_indices = @transform_22, window_bounds = array<i64: 1, 32>}, {pipeline_mode = #tpu.pipeline_mode<synchronous>, transform_indices = @transform_23, window_bounds = array<i64: 1, 32>}, {pipeline_mode = #tpu.pipeline_mode<synchronous>, transform_indices = @transform_24, window_bounds = array<i64: 1, 32>}, {pipeline_mode = #tpu.pipeline_mode<synchronous>, transform_indices = @transform_25, window_bounds = array<i64: 1, 32>}, {pipeline_mode = #tpu.pipeline_mode<synchronous>, transform_indices = @transform_26, window_bounds = array<i64: 32, 64>}, {pipeline_mode = #tpu.pipeline_mode<synchronous>, transform_indices = @transform_27, window_bounds = array<i64: 1, 64>}, {pipeline_mode = #tpu.pipeline_mode<synchronous>, transform_indices = @transform_28, window_bounds = array<i64: 64, 32>}, {pipeline_mode = #tpu.pipeline_mode<synchronous>, transform_indices = @transform_29, window_bounds = array<i64: 1, 32>}, {transform_indices = @transform_30, window_bounds = array<i64: 1, 8, 32>}]} {
    %c0 = arith.constant 0 : index
    %c0_0 = arith.constant 0 : index
    %c0_1 = arith.constant 0 : index
    %0 = vector.load %arg1[%c0, %c0_0, %c0_1] : memref<1x8x32xf32, #tpu.memory_space<vmem>>, vector<1x8x32xf32>
    %1 = vector.shape_cast %0 : vector<1x8x32xf32> to vector<8x32xf32>
    %c0_2 = arith.constant 0 : index
    %c0_3 = arith.constant 0 : index
    %c0_4 = arith.constant 0 : index
    %2 = vector.load %arg2[%c0_2, %c0_3, %c0_4] : memref<1x16x32xf32, #tpu.memory_space<vmem>>, vector<1x16x32xf32>
    %3 = vector.shape_cast %2 : vector<1x16x32xf32> to vector<16x32xf32>
    %c0_5 = arith.constant 0 : index
    %c0_6 = arith.constant 0 : index
    %c0_7 = arith.constant 0 : index
    %4 = vector.load %arg3[%c0_5, %c0_6, %c0_7] : memref<1x8x32xf32, #tpu.memory_space<vmem>>, vector<1x8x32xf32>
    %5 = vector.shape_cast %4 : vector<1x8x32xf32> to vector<8x32xf32>
    %c0_8 = arith.constant 0 : index
    %c0_9 = arith.constant 0 : index
    %c0_10 = arith.constant 0 : index
    %6 = vector.load %arg4[%c0_8, %c0_9, %c0_10] : memref<1x16x32xf32, #tpu.memory_space<vmem>>, vector<1x16x32xf32>
    %7 = vector.shape_cast %6 : vector<1x16x32xf32> to vector<16x32xf32>
    %c0_11 = arith.constant 0 : index
    %c0_12 = arith.constant 0 : index
    %8 = vector.load %arg5[%c0_11, %c0_12] : memref<32x32xf32, #tpu.memory_space<vmem>>, vector<32x32xf32>
    %c0_13 = arith.constant 0 : index
    %c0_14 = arith.constant 0 : index
    %9 = vector.load %arg6[%c0_13, %c0_14] : memref<1x32xf32, #tpu.memory_space<vmem>>, vector<1x32xf32>
    %c0_15 = arith.constant 0 : index
    %c0_16 = arith.constant 0 : index
    %10 = vector.load %arg7[%c0_15, %c0_16] : memref<32x32xf32, #tpu.memory_space<vmem>>, vector<32x32xf32>
    %c0_17 = arith.constant 0 : index
    %c0_18 = arith.constant 0 : index
    %11 = vector.load %arg8[%c0_17, %c0_18] : memref<1x32xf32, #tpu.memory_space<vmem>>, vector<1x32xf32>
    %c0_19 = arith.constant 0 : index
    %c0_20 = arith.constant 0 : index
    %12 = vector.load %arg9[%c0_19, %c0_20] : memref<32x32xf32, #tpu.memory_space<vmem>>, vector<32x32xf32>
    %c0_21 = arith.constant 0 : index
    %c0_22 = arith.constant 0 : index
    %13 = vector.load %arg10[%c0_21, %c0_22] : memref<1x32xf32, #tpu.memory_space<vmem>>, vector<1x32xf32>
    %c0_23 = arith.constant 0 : index
    %c0_24 = arith.constant 0 : index
    %14 = vector.load %arg11[%c0_23, %c0_24] : memref<32x32xf32, #tpu.memory_space<vmem>>, vector<32x32xf32>
    %c0_25 = arith.constant 0 : index
    %c0_26 = arith.constant 0 : index
    %15 = vector.load %arg12[%c0_25, %c0_26] : memref<1x32xf32, #tpu.memory_space<vmem>>, vector<1x32xf32>
    %c0_27 = arith.constant 0 : index
    %c0_28 = arith.constant 0 : index
    %16 = vector.load %arg13[%c0_27, %c0_28] : memref<32x32xf32, #tpu.memory_space<vmem>>, vector<32x32xf32>
    %c0_29 = arith.constant 0 : index
    %c0_30 = arith.constant 0 : index
    %17 = vector.load %arg14[%c0_29, %c0_30] : memref<1x32xf32, #tpu.memory_space<vmem>>, vector<1x32xf32>
    %c0_31 = arith.constant 0 : index
    %c0_32 = arith.constant 0 : index
    %18 = vector.load %arg15[%c0_31, %c0_32] : memref<32x32xf32, #tpu.memory_space<vmem>>, vector<32x32xf32>
    %c0_33 = arith.constant 0 : index
    %c0_34 = arith.constant 0 : index
    %19 = vector.load %arg16[%c0_33, %c0_34] : memref<1x32xf32, #tpu.memory_space<vmem>>, vector<1x32xf32>
    %c0_35 = arith.constant 0 : index
    %c0_36 = arith.constant 0 : index
    %20 = vector.load %arg17[%c0_35, %c0_36] : memref<32x32xf32, #tpu.memory_space<vmem>>, vector<32x32xf32>
    %c0_37 = arith.constant 0 : index
    %c0_38 = arith.constant 0 : index
    %21 = vector.load %arg18[%c0_37, %c0_38] : memref<1x32xf32, #tpu.memory_space<vmem>>, vector<1x32xf32>
    %c0_39 = arith.constant 0 : index
    %c0_40 = arith.constant 0 : index
    %22 = vector.load %arg19[%c0_39, %c0_40] : memref<32x32xf32, #tpu.memory_space<vmem>>, vector<32x32xf32>
    %c0_41 = arith.constant 0 : index
    %c0_42 = arith.constant 0 : index
    %23 = vector.load %arg20[%c0_41, %c0_42] : memref<1x32xf32, #tpu.memory_space<vmem>>, vector<1x32xf32>
    %c0_43 = arith.constant 0 : index
    %c0_44 = arith.constant 0 : index
    %24 = vector.load %arg21[%c0_43, %c0_44] : memref<1x32xf32, #tpu.memory_space<vmem>>, vector<1x32xf32>
    %c0_45 = arith.constant 0 : index
    %c0_46 = arith.constant 0 : index
    %25 = vector.load %arg22[%c0_45, %c0_46] : memref<1x32xf32, #tpu.memory_space<vmem>>, vector<1x32xf32>
    %cst = arith.constant dense<0.000000e+00> : vector<8xf32>
    %26 = vector.multi_reduction <add>, %1, %cst [1] : vector<8x32xf32> to vector<8xf32>
    %27 = vector.shape_cast %26 : vector<8xf32> to vector<8x1xf32>
    %cst_47 = arith.constant 3.200000e+01 : f32
    %28 = vector.broadcast %cst_47 : f32 to vector<8x1xf32>
    %29 = arith.divf %27, %28 : vector<8x1xf32>
    %30 = vector.broadcast %29 : vector<8x1xf32> to vector<8x32xf32>
    %31 = arith.subf %1, %30 : vector<8x32xf32>
    %32 = arith.mulf %31, %31 : vector<8x32xf32>
    %cst_48 = arith.constant dense<0.000000e+00> : vector<8xf32>
    %33 = vector.multi_reduction <add>, %32, %cst_48 [1] : vector<8x32xf32> to vector<8xf32>
    %34 = vector.shape_cast %33 : vector<8xf32> to vector<8x1xf32>
    %cst_49 = arith.constant 3.200000e+01 : f32
    %35 = vector.broadcast %cst_49 : f32 to vector<8x1xf32>
    %36 = arith.divf %34, %35 : vector<8x1xf32>
    %37 = vector.broadcast %29 : vector<8x1xf32> to vector<8x32xf32>
    %38 = arith.subf %1, %37 : vector<8x32xf32>
    %cst_50 = arith.constant 9.99999974E-6 : f32
    %39 = vector.broadcast %cst_50 : f32 to vector<8x1xf32>
    %40 = arith.addf %36, %39 : vector<8x1xf32>
    %41 = math.rsqrt %40 : vector<8x1xf32>
    %42 = vector.broadcast %41 : vector<8x1xf32> to vector<8x32xf32>
    %43 = arith.mulf %38, %42 : vector<8x32xf32>
    %44 = vector.broadcast %24 : vector<1x32xf32> to vector<8x32xf32>
    %45 = arith.mulf %43, %44 : vector<8x32xf32>
    %46 = vector.broadcast %25 : vector<1x32xf32> to vector<8x32xf32>
    %47 = arith.addf %45, %46 : vector<8x32xf32>
    %48 = arith.addf %47, %5 : vector<8x32xf32>
    %cst_51 = arith.constant dense<0.000000e+00> : vector<8x32xf32>
    %49 = tpu.matmul %48, %8, %cst_51 {dimension_numbers = #tpu.dot_dimension_numbers<[1], [0], [0], [1], [0, 0, 1, 1], [], []>} : vector<8x32xf32>, vector<32x32xf32>, vector<8x32xf32> -> vector<8x32xf32>
    %50 = vector.broadcast %9 : vector<1x32xf32> to vector<8x32xf32>
    %51 = arith.addf %49, %50 : vector<8x32xf32>
    %cst_52 = arith.constant dense<0.000000e+00> : vector<8x32xf32>
    %52 = tpu.matmul %48, %10, %cst_52 {dimension_numbers = #tpu.dot_dimension_numbers<[1], [0], [0], [1], [0, 0, 1, 1], [], []>} : vector<8x32xf32>, vector<32x32xf32>, vector<8x32xf32> -> vector<8x32xf32>
    %53 = vector.broadcast %11 : vector<1x32xf32> to vector<8x32xf32>
    %54 = arith.addf %52, %53 : vector<8x32xf32>
    %cst_53 = arith.constant dense<0.000000e+00> : vector<8x32xf32>
    %55 = tpu.matmul %47, %12, %cst_53 {dimension_numbers = #tpu.dot_dimension_numbers<[1], [0], [0], [1], [0, 0, 1, 1], [], []>} : vector<8x32xf32>, vector<32x32xf32>, vector<8x32xf32> -> vector<8x32xf32>
    %56 = vector.broadcast %13 : vector<1x32xf32> to vector<8x32xf32>
    %57 = arith.addf %55, %56 : vector<8x32xf32>
    %58 = vector.shape_cast %51 : vector<8x32xf32> to vector<8x4x8xf32>
    %59 = tpu.transpose %58, [1, 0, 2] : vector<8x4x8xf32> -> vector<4x8x8xf32>
    %60 = vector.shape_cast %54 : vector<8x32xf32> to vector<8x4x8xf32>
    %61 = tpu.transpose %60, [1, 0, 2] : vector<8x4x8xf32> -> vector<4x8x8xf32>
    %62 = vector.shape_cast %57 : vector<8x32xf32> to vector<8x4x8xf32>
    %63 = tpu.transpose %62, [1, 0, 2] : vector<8x4x8xf32> -> vector<4x8x8xf32>
    "tpu.trace_start"() <{level = 10 : i32, message = "hqe,hke->hqk"}> : () -> ()
    %cst_54 = arith.constant dense<0.000000e+00> : vector<4x8x8xf32>
    %64 = tpu.matmul %59, %61, %cst_54 {dimension_numbers = #tpu.dot_dimension_numbers<[2], [2], [1], [1], [0, 0, 0, 1, 1, 1], [0], [0]>} : vector<4x8x8xf32>, vector<4x8x8xf32>, vector<4x8x8xf32> -> vector<4x8x8xf32>
    "tpu.trace_stop"() : () -> ()
    %cst_55 = arith.constant dense<0xFF800000> : vector<4x8xf32>
    %65 = vector.multi_reduction <maximumf>, %64, %cst_55 [2] : vector<4x8x8xf32> to vector<4x8xf32>
    %66 = vector.shape_cast %65 : vector<4x8xf32> to vector<4x8x1xf32>
    %67 = vector.broadcast %66 : vector<4x8x1xf32> to vector<4x8x8xf32>
    %68 = arith.subf %64, %67 : vector<4x8x8xf32>
    %69 = math.exp %68 : vector<4x8x8xf32>
    %cst_56 = arith.constant dense<0.000000e+00> : vector<4x8xf32>
    %70 = vector.multi_reduction <add>, %69, %cst_56 [2] : vector<4x8x8xf32> to vector<4x8xf32>
    %71 = vector.shape_cast %70 : vector<4x8xf32> to vector<4x8x1xf32>
    %72 = tpu.reciprocal %71 {approx = true} : vector<4x8x1xf32> -> vector<4x8x1xf32>
    %73 = vector.broadcast %72 : vector<4x8x1xf32> to vector<4x8x8xf32>
    %74 = arith.mulf %69, %73 : vector<4x8x8xf32>
    "tpu.trace_start"() <{level = 10 : i32, message = "hqk,hke->hqe"}> : () -> ()
    %cst_57 = arith.constant dense<0.000000e+00> : vector<4x8x8xf32>
    %75 = tpu.matmul %74, %63, %cst_57 {dimension_numbers = #tpu.dot_dimension_numbers<[2], [1], [1], [2], [0, 0, 0, 1, 1, 2], [0], [0]>} : vector<4x8x8xf32>, vector<4x8x8xf32>, vector<4x8x8xf32> -> vector<4x8x8xf32>
    "tpu.trace_stop"() : () -> ()
    %76 = tpu.transpose %75, [1, 0, 2] : vector<4x8x8xf32> -> vector<8x4x8xf32>
    %77 = vector.shape_cast %76 : vector<8x4x8xf32> to vector<8x32xf32>
    %cst_58 = arith.constant dense<0.000000e+00> : vector<8x32xf32>
    %78 = tpu.matmul %77, %14, %cst_58 {dimension_numbers = #tpu.dot_dimension_numbers<[1], [0], [0], [1], [0, 0, 1, 1], [], []>} : vector<8x32xf32>, vector<32x32xf32>, vector<8x32xf32> -> vector<8x32xf32>
    %79 = vector.broadcast %15 : vector<1x32xf32> to vector<8x32xf32>
    %80 = arith.addf %78, %79 : vector<8x32xf32>
    %81 = arith.addf %1, %80 : vector<8x32xf32>
    %c0_59 = arith.constant 0 : index
    %c0_60 = arith.constant 0 : index
    %82 = vector.load %arg23[%c0_59, %c0_60] : memref<1x32xf32, #tpu.memory_space<vmem>>, vector<1x32xf32>
    %c0_61 = arith.constant 0 : index
    %c0_62 = arith.constant 0 : index
    %83 = vector.load %arg24[%c0_61, %c0_62] : memref<1x32xf32, #tpu.memory_space<vmem>>, vector<1x32xf32>
    %cst_63 = arith.constant dense<0.000000e+00> : vector<8xf32>
    %84 = vector.multi_reduction <add>, %81, %cst_63 [1] : vector<8x32xf32> to vector<8xf32>
    %85 = vector.shape_cast %84 : vector<8xf32> to vector<8x1xf32>
    %cst_64 = arith.constant 3.200000e+01 : f32
    %86 = vector.broadcast %cst_64 : f32 to vector<8x1xf32>
    %87 = arith.divf %85, %86 : vector<8x1xf32>
    %88 = vector.broadcast %87 : vector<8x1xf32> to vector<8x32xf32>
    %89 = arith.subf %81, %88 : vector<8x32xf32>
    %90 = arith.mulf %89, %89 : vector<8x32xf32>
    %cst_65 = arith.constant dense<0.000000e+00> : vector<8xf32>
    %91 = vector.multi_reduction <add>, %90, %cst_65 [1] : vector<8x32xf32> to vector<8xf32>
    %92 = vector.shape_cast %91 : vector<8xf32> to vector<8x1xf32>
    %cst_66 = arith.constant 3.200000e+01 : f32
    %93 = vector.broadcast %cst_66 : f32 to vector<8x1xf32>
    %94 = arith.divf %92, %93 : vector<8x1xf32>
    %95 = vector.broadcast %87 : vector<8x1xf32> to vector<8x32xf32>
    %96 = arith.subf %81, %95 : vector<8x32xf32>
    %cst_67 = arith.constant 9.99999974E-6 : f32
    %97 = vector.broadcast %cst_67 : f32 to vector<8x1xf32>
    %98 = arith.addf %94, %97 : vector<8x1xf32>
    %99 = math.rsqrt %98 : vector<8x1xf32>
    %100 = vector.broadcast %99 : vector<8x1xf32> to vector<8x32xf32>
    %101 = arith.mulf %96, %100 : vector<8x32xf32>
    %102 = vector.broadcast %82 : vector<1x32xf32> to vector<8x32xf32>
    %103 = arith.mulf %101, %102 : vector<8x32xf32>
    %104 = vector.broadcast %83 : vector<1x32xf32> to vector<8x32xf32>
    %105 = arith.addf %103, %104 : vector<8x32xf32>
    %106 = arith.addf %105, %5 : vector<8x32xf32>
    %107 = arith.addf %3, %7 : vector<16x32xf32>
    %cst_68 = arith.constant dense<0.000000e+00> : vector<8x32xf32>
    %108 = tpu.matmul %106, %16, %cst_68 {dimension_numbers = #tpu.dot_dimension_numbers<[1], [0], [0], [1], [0, 0, 1, 1], [], []>} : vector<8x32xf32>, vector<32x32xf32>, vector<8x32xf32> -> vector<8x32xf32>
    %109 = vector.broadcast %17 : vector<1x32xf32> to vector<8x32xf32>
    %110 = arith.addf %108, %109 : vector<8x32xf32>
    %cst_69 = arith.constant dense<0.000000e+00> : vector<16x32xf32>
    %111 = tpu.matmul %107, %18, %cst_69 {dimension_numbers = #tpu.dot_dimension_numbers<[1], [0], [0], [1], [0, 0, 1, 1], [], []>} : vector<16x32xf32>, vector<32x32xf32>, vector<16x32xf32> -> vector<16x32xf32>
    %112 = vector.broadcast %19 : vector<1x32xf32> to vector<16x32xf32>
    %113 = arith.addf %111, %112 : vector<16x32xf32>
    %cst_70 = arith.constant dense<0.000000e+00> : vector<16x32xf32>
    %114 = tpu.matmul %3, %20, %cst_70 {dimension_numbers = #tpu.dot_dimension_numbers<[1], [0], [0], [1], [0, 0, 1, 1], [], []>} : vector<16x32xf32>, vector<32x32xf32>, vector<16x32xf32> -> vector<16x32xf32>
    %115 = vector.broadcast %21 : vector<1x32xf32> to vector<16x32xf32>
    %116 = arith.addf %114, %115 : vector<16x32xf32>
    %117 = vector.shape_cast %110 : vector<8x32xf32> to vector<8x4x8xf32>
    %118 = tpu.transpose %117, [1, 0, 2] : vector<8x4x8xf32> -> vector<4x8x8xf32>
    %119 = vector.shape_cast %113 : vector<16x32xf32> to vector<16x4x8xf32>
    %120 = tpu.transpose %119, [1, 0, 2] : vector<16x4x8xf32> -> vector<4x16x8xf32>
    %121 = vector.shape_cast %116 : vector<16x32xf32> to vector<16x4x8xf32>
    %122 = tpu.transpose %121, [1, 0, 2] : vector<16x4x8xf32> -> vector<4x16x8xf32>
    "tpu.trace_start"() <{level = 10 : i32, message = "hqe,hke->hqk"}> : () -> ()
    %cst_71 = arith.constant dense<0.000000e+00> : vector<4x8x16xf32>
    %123 = tpu.matmul %118, %120, %cst_71 {dimension_numbers = #tpu.dot_dimension_numbers<[2], [2], [1], [1], [0, 0, 0, 1, 1, 1], [0], [0]>} : vector<4x8x8xf32>, vector<4x16x8xf32>, vector<4x8x16xf32> -> vector<4x8x16xf32>
    "tpu.trace_stop"() : () -> ()
    %cst_72 = arith.constant dense<0xFF800000> : vector<4x8xf32>
    %124 = vector.multi_reduction <maximumf>, %123, %cst_72 [2] : vector<4x8x16xf32> to vector<4x8xf32>
    %125 = vector.shape_cast %124 : vector<4x8xf32> to vector<4x8x1xf32>
    %126 = vector.broadcast %125 : vector<4x8x1xf32> to vector<4x8x16xf32>
    %127 = arith.subf %123, %126 : vector<4x8x16xf32>
    %128 = math.exp %127 : vector<4x8x16xf32>
    %cst_73 = arith.constant dense<0.000000e+00> : vector<4x8xf32>
    %129 = vector.multi_reduction <add>, %128, %cst_73 [2] : vector<4x8x16xf32> to vector<4x8xf32>
    %130 = vector.shape_cast %129 : vector<4x8xf32> to vector<4x8x1xf32>
    %131 = tpu.reciprocal %130 {approx = true} : vector<4x8x1xf32> -> vector<4x8x1xf32>
    %132 = vector.broadcast %131 : vector<4x8x1xf32> to vector<4x8x16xf32>
    %133 = arith.mulf %128, %132 : vector<4x8x16xf32>
    "tpu.trace_start"() <{level = 10 : i32, message = "hqk,hke->hqe"}> : () -> ()
    %cst_74 = arith.constant dense<0.000000e+00> : vector<4x8x8xf32>
    %134 = tpu.matmul %133, %122, %cst_74 {dimension_numbers = #tpu.dot_dimension_numbers<[2], [1], [1], [2], [0, 0, 0, 1, 1, 2], [0], [0]>} : vector<4x8x16xf32>, vector<4x16x8xf32>, vector<4x8x8xf32> -> vector<4x8x8xf32>
    "tpu.trace_stop"() : () -> ()
    %135 = tpu.transpose %134, [1, 0, 2] : vector<4x8x8xf32> -> vector<8x4x8xf32>
    %136 = vector.shape_cast %135 : vector<8x4x8xf32> to vector<8x32xf32>
    %cst_75 = arith.constant dense<0.000000e+00> : vector<8x32xf32>
    %137 = tpu.matmul %136, %22, %cst_75 {dimension_numbers = #tpu.dot_dimension_numbers<[1], [0], [0], [1], [0, 0, 1, 1], [], []>} : vector<8x32xf32>, vector<32x32xf32>, vector<8x32xf32> -> vector<8x32xf32>
    %138 = vector.broadcast %23 : vector<1x32xf32> to vector<8x32xf32>
    %139 = arith.addf %137, %138 : vector<8x32xf32>
    %140 = arith.addf %81, %139 : vector<8x32xf32>
    %c0_76 = arith.constant 0 : index
    %c0_77 = arith.constant 0 : index
    %141 = vector.load %arg25[%c0_76, %c0_77] : memref<1x32xf32, #tpu.memory_space<vmem>>, vector<1x32xf32>
    %c0_78 = arith.constant 0 : index
    %c0_79 = arith.constant 0 : index
    %142 = vector.load %arg26[%c0_78, %c0_79] : memref<1x32xf32, #tpu.memory_space<vmem>>, vector<1x32xf32>
    %cst_80 = arith.constant dense<0.000000e+00> : vector<8xf32>
    %143 = vector.multi_reduction <add>, %140, %cst_80 [1] : vector<8x32xf32> to vector<8xf32>
    %144 = vector.shape_cast %143 : vector<8xf32> to vector<8x1xf32>
    %cst_81 = arith.constant 3.200000e+01 : f32
    %145 = vector.broadcast %cst_81 : f32 to vector<8x1xf32>
    %146 = arith.divf %144, %145 : vector<8x1xf32>
    %147 = vector.broadcast %146 : vector<8x1xf32> to vector<8x32xf32>
    %148 = arith.subf %140, %147 : vector<8x32xf32>
    %149 = arith.mulf %148, %148 : vector<8x32xf32>
    %cst_82 = arith.constant dense<0.000000e+00> : vector<8xf32>
    %150 = vector.multi_reduction <add>, %149, %cst_82 [1] : vector<8x32xf32> to vector<8xf32>
    %151 = vector.shape_cast %150 : vector<8xf32> to vector<8x1xf32>
    %cst_83 = arith.constant 3.200000e+01 : f32
    %152 = vector.broadcast %cst_83 : f32 to vector<8x1xf32>
    %153 = arith.divf %151, %152 : vector<8x1xf32>
    %154 = vector.broadcast %146 : vector<8x1xf32> to vector<8x32xf32>
    %155 = arith.subf %140, %154 : vector<8x32xf32>
    %cst_84 = arith.constant 9.99999974E-6 : f32
    %156 = vector.broadcast %cst_84 : f32 to vector<8x1xf32>
    %157 = arith.addf %153, %156 : vector<8x1xf32>
    %158 = math.rsqrt %157 : vector<8x1xf32>
    %159 = vector.broadcast %158 : vector<8x1xf32> to vector<8x32xf32>
    %160 = arith.mulf %155, %159 : vector<8x32xf32>
    %161 = vector.broadcast %141 : vector<1x32xf32> to vector<8x32xf32>
    %162 = arith.mulf %160, %161 : vector<8x32xf32>
    %163 = vector.broadcast %142 : vector<1x32xf32> to vector<8x32xf32>
    %164 = arith.addf %162, %163 : vector<8x32xf32>
    %c0_85 = arith.constant 0 : index
    %c0_86 = arith.constant 0 : index
    %165 = vector.load %arg27[%c0_85, %c0_86] : memref<32x64xf32, #tpu.memory_space<vmem>>, vector<32x64xf32>
    %cst_87 = arith.constant dense<0.000000e+00> : vector<8x64xf32>
    %166 = tpu.matmul %164, %165, %cst_87 {dimension_numbers = #tpu.dot_dimension_numbers<[1], [0], [0], [1], [0, 0, 1, 1], [], []>} : vector<8x32xf32>, vector<32x64xf32>, vector<8x64xf32> -> vector<8x64xf32>
    %c0_88 = arith.constant 0 : index
    %c0_89 = arith.constant 0 : index
    %167 = vector.load %arg28[%c0_88, %c0_89] : memref<1x64xf32, #tpu.memory_space<vmem>>, vector<1x64xf32>
    %168 = vector.broadcast %167 : vector<1x64xf32> to vector<8x64xf32>
    %169 = arith.addf %166, %168 : vector<8x64xf32>
    %cst_90 = arith.constant 0.000000e+00 : f32
    %170 = vector.broadcast %cst_90 : f32 to vector<8x64xf32>
    %171 = arith.maximumf %169, %170 : vector<8x64xf32>
    %c0_91 = arith.constant 0 : index
    %c0_92 = arith.constant 0 : index
    %172 = vector.load %arg29[%c0_91, %c0_92] : memref<64x32xf32, #tpu.memory_space<vmem>>, vector<64x32xf32>
    %cst_93 = arith.constant dense<0.000000e+00> : vector<8x32xf32>
    %173 = tpu.matmul %171, %172, %cst_93 {dimension_numbers = #tpu.dot_dimension_numbers<[1], [0], [0], [1], [0, 0, 1, 1], [], []>} : vector<8x64xf32>, vector<64x32xf32>, vector<8x32xf32> -> vector<8x32xf32>
    %c0_94 = arith.constant 0 : index
    %c0_95 = arith.constant 0 : index
    %174 = vector.load %arg30[%c0_94, %c0_95] : memref<1x32xf32, #tpu.memory_space<vmem>>, vector<1x32xf32>
    %175 = vector.broadcast %174 : vector<1x32xf32> to vector<8x32xf32>
    %176 = arith.addf %173, %175 : vector<8x32xf32>
    %177 = arith.addf %140, %176 : vector<8x32xf32>
    %c0_96 = arith.constant 0 : index
    %c0_97 = arith.constant 0 : index
    %c0_98 = arith.constant 0 : index
    %178 = vector.load %arg31[%c0_96, %c0_97, %c0_98] : memref<1x8x32xf32, #tpu.memory_space<vmem>>, vector<1x8x32xf32>
    %179 = vector.shape_cast %178 : vector<1x8x32xf32> to vector<8x32xf32>
    %180 = vector.shape_cast %177 : vector<8x32xf32> to vector<1x8x32xf32>
    tpu.vector_store %arg31[%c0_96, %c0_97, %c0_98], %180 {strides = array<i32>} : memref<1x8x32xf32, #tpu.memory_space<vmem>>, vector<1x8x32xf32>,
    return
  }
  func.func @transform_0(%arg0: i32) -> (i32, i32, i32) {
    %c0_i32 = arith.constant 0 : i32
    %c0_i32_0 = arith.constant 0 : i32
    %c0_i32_1 = arith.constant 0 : i32
    return %arg0, %c0_i32, %c0_i32_0 : i32, i32, i32
  }
  func.func @transform_1(%arg0: i32) -> (i32, i32, i32) {
    %c0_i32 = arith.constant 0 : i32
    %c0_i32_0 = arith.constant 0 : i32
    %c0_i32_1 = arith.constant 0 : i32
    return %arg0, %c0_i32, %c0_i32_0 : i32, i32, i32
  }
  func.func @transform_2(%arg0: i32) -> (i32, i32, i32) {
    %c0_i32 = arith.constant 0 : i32
    %c0_i32_0 = arith.constant 0 : i32
    %c0_i32_1 = arith.constant 0 : i32
    return %arg0, %c0_i32, %c0_i32_0 : i32, i32, i32
  }
  func.func @transform_3(%arg0: i32) -> (i32, i32, i32) {
    %c0_i32 = arith.constant 0 : i32
    %c0_i32_0 = arith.constant 0 : i32
    %c0_i32_1 = arith.constant 0 : i32
    return %arg0, %c0_i32, %c0_i32_0 : i32, i32, i32
  }
  func.func @transform_4(%arg0: i32) -> (i32, i32) {
    %c0_i32 = arith.constant 0 : i32
    %c0_i32_0 = arith.constant 0 : i32
    %c0_i32_1 = arith.constant 0 : i32
    return %c0_i32, %c0_i32_0 : i32, i32
  }
  func.func @transform_5(%arg0: i32) -> (i32, i32) {
    %c0_i32 = arith.constant 0 : i32
    %c0_i32_0 = arith.constant 0 : i32
    %c0_i32_1 = arith.constant 0 : i32
    return %c0_i32, %c0_i32_0 : i32, i32
  }
  func.func @transform_6(%arg0: i32) -> (i32, i32) {
    %c0_i32 = arith.constant 0 : i32
    %c0_i32_0 = arith.constant 0 : i32
    %c0_i32_1 = arith.constant 0 : i32
    return %c0_i32, %c0_i32_0 : i32, i32
  }
  func.func @transform_7(%arg0: i32) -> (i32, i32) {
    %c0_i32 = arith.constant 0 : i32
    %c0_i32_0 = arith.constant 0 : i32
    %c0_i32_1 = arith.constant 0 : i32
    return %c0_i32, %c0_i32_0 : i32, i32
  }
  func.func @transform_8(%arg0: i32) -> (i32, i32) {
    %c0_i32 = arith.constant 0 : i32
    %c0_i32_0 = arith.constant 0 : i32
    %c0_i32_1 = arith.constant 0 : i32
    return %c0_i32, %c0_i32_0 : i32, i32
  }
  func.func @transform_9(%arg0: i32) -> (i32, i32) {
    %c0_i32 = arith.constant 0 : i32
    %c0_i32_0 = arith.constant 0 : i32
    %c0_i32_1 = arith.constant 0 : i32
    return %c0_i32, %c0_i32_0 : i32, i32
  }
  func.func @transform_10(%arg0: i32) -> (i32, i32) {
    %c0_i32 = arith.constant 0 : i32
    %c0_i32_0 = arith.constant 0 : i32
    %c0_i32_1 = arith.constant 0 : i32
    return %c0_i32, %c0_i32_0 : i32, i32
  }
  func.func @transform_11(%arg0: i32) -> (i32, i32) {
    %c0_i32 = arith.constant 0 : i32
    %c0_i32_0 = arith.constant 0 : i32
    %c0_i32_1 = arith.constant 0 : i32
    return %c0_i32, %c0_i32_0 : i32, i32
  }
  func.func @transform_12(%arg0: i32) -> (i32, i32) {
    %c0_i32 = arith.constant 0 : i32
    %c0_i32_0 = arith.constant 0 : i32
    %c0_i32_1 = arith.constant 0 : i32
    return %c0_i32, %c0_i32_0 : i32, i32
  }
  func.func @transform_13(%arg0: i32) -> (i32, i32) {
    %c0_i32 = arith.constant 0 : i32
    %c0_i32_0 = arith.constant 0 : i32
    %c0_i32_1 = arith.constant 0 : i32
    return %c0_i32, %c0_i32_0 : i32, i32
  }
  func.func @transform_14(%arg0: i32) -> (i32, i32) {
    %c0_i32 = arith.constant 0 : i32
    %c0_i32_0 = arith.constant 0 : i32
    %c0_i32_1 = arith.constant 0 : i32
    return %c0_i32, %c0_i32_0 : i32, i32
  }
  func.func @transform_15(%arg0: i32) -> (i32, i32) {
    %c0_i32 = arith.constant 0 : i32
    %c0_i32_0 = arith.constant 0 : i32
    %c0_i32_1 = arith.constant 0 : i32
    return %c0_i32, %c0_i32_0 : i32, i32
  }
  func.func @transform_16(%arg0: i32) -> (i32, i32) {
    %c0_i32 = arith.constant 0 : i32
    %c0_i32_0 = arith.constant 0 : i32
    %c0_i32_1 = arith.constant 0 : i32
    return %c0_i32, %c0_i32_0 : i32, i32
  }
  func.func @transform_17(%arg0: i32) -> (i32, i32) {
    %c0_i32 = arith.constant 0 : i32
    %c0_i32_0 = arith.constant 0 : i32
    %c0_i32_1 = arith.constant 0 : i32
    return %c0_i32, %c0_i32_0 : i32, i32
  }
  func.func @transform_18(%arg0: i32) -> (i32, i32) {
    %c0_i32 = arith.constant 0 : i32
    %c0_i32_0 = arith.constant 0 : i32
    %c0_i32_1 = arith.constant 0 : i32
    return %c0_i32, %c0_i32_0 : i32, i32
  }
  func.func @transform_19(%arg0: i32) -> (i32, i32) {
    %c0_i32 = arith.constant 0 : i32
    %c0_i32_0 = arith.constant 0 : i32
    %c0_i32_1 = arith.constant 0 : i32
    return %c0_i32, %c0_i32_0 : i32, i32
  }
  func.func @transform_20(%arg0: i32) -> (i32, i32) {
    %c0_i32 = arith.constant 0 : i32
    %c0_i32_0 = arith.constant 0 : i32
    %c0_i32_1 = arith.constant 0 : i32
    return %c0_i32, %c0_i32_0 : i32, i32
  }
  func.func @transform_21(%arg0: i32) -> (i32, i32) {
    %c0_i32 = arith.constant 0 : i32
    %c0_i32_0 = arith.constant 0 : i32
    %c0_i32_1 = arith.constant 0 : i32
    return %c0_i32, %c0_i32_0 : i32, i32
  }
  func.func @transform_22(%arg0: i32) -> (i32, i32) {
    %c0_i32 = arith.constant 0 : i32
    %c0_i32_0 = arith.constant 0 : i32
    %c0_i32_1 = arith.constant 0 : i32
    return %c0_i32, %c0_i32_0 : i32, i32
  }
  func.func @transform_23(%arg0: i32) -> (i32, i32) {
    %c0_i32 = arith.constant 0 : i32
    %c0_i32_0 = arith.constant 0 : i32
    %c0_i32_1 = arith.constant 0 : i32
    return %c0_i32, %c0_i32_0 : i32, i32
  }
  func.func @transform_24(%arg0: i32) -> (i32, i32) {
    %c0_i32 = arith.constant 0 : i32
    %c0_i32_0 = arith.constant 0 : i32
    %c0_i32_1 = arith.constant 0 : i32
    return %c0_i32, %c0_i32_0 : i32, i32
  }
  func.func @transform_25(%arg0: i32) -> (i32, i32) {
    %c0_i32 = arith.constant 0 : i32
    %c0_i32_0 = arith.constant 0 : i32
    %c0_i32_1 = arith.constant 0 : i32
    return %c0_i32, %c0_i32_0 : i32, i32
  }
  func.func @transform_26(%arg0: i32) -> (i32, i32) {
    %c0_i32 = arith.constant 0 : i32
    %c0_i32_0 = arith.constant 0 : i32
    %c0_i32_1 = arith.constant 0 : i32
    return %c0_i32, %c0_i32_0 : i32, i32
  }
  func.func @transform_27(%arg0: i32) -> (i32, i32) {
    %c0_i32 = arith.constant 0 : i32
    %c0_i32_0 = arith.constant 0 : i32
    %c0_i32_1 = arith.constant 0 : i32
    return %c0_i32, %c0_i32_0 : i32, i32
  }
  func.func @transform_28(%arg0: i32) -> (i32, i32) {
    %c0_i32 = arith.constant 0 : i32
    %c0_i32_0 = arith.constant 0 : i32
    %c0_i32_1 = arith.constant 0 : i32
    return %c0_i32, %c0_i32_0 : i32, i32
  }
  func.func @transform_29(%arg0: i32) -> (i32, i32) {
    %c0_i32 = arith.constant 0 : i32
    %c0_i32_0 = arith.constant 0 : i32
    %c0_i32_1 = arith.constant 0 : i32
    return %c0_i32, %c0_i32_0 : i32, i32
  }
  func.func @transform_30(%arg0: i32) -> (i32, i32, i32) {
    %c0_i32 = arith.constant 0 : i32
    %c0_i32_0 = arith.constant 0 : i32
    %c0_i32_1 = arith.constant 0 : i32
    return %arg0, %c0_i32, %c0_i32_0 : i32, i32, i32
  }
}

</mosaic_0001>

<llo_original>
// kernel: tpu_custom_call.1
$region0: #{tpu_custom_call.1}
  #allocation0 [shape = 'u32[]', space=smem, size = 0x4, offset = 0x4, fixed_abs, tag = 'smem constant byte address 0x4 - core index']
  #allocation1 [shape = 'u32[72,128]{1,0:T(1,128)}', space=vmem, size = 0x9000, scoped, tag = 'internal scratch']
  %s0 = inlined_call_operand.smem [shape: u32[31], index: -1, kind: input, shape index: {}]
  %s1 = sld [smem:[%s0]]
  %s2 = scalar_lea.smem %s0, 1
  %s3 = sld [smem:[%s2]]
  %s4 = scalar_lea.smem %s0, 2
  %s5 = sld [smem:[%s4]]
  %s6 = scalar_lea.smem %s0, 3
  %s7 = sld [smem:[%s6]]
  %s8 = scalar_lea.smem %s0, 4
  %s9 = sld [smem:[%s8]]
  %s10 = scalar_lea.smem %s0, 5
  %s11 = sld [smem:[%s10]]
  %s12 = scalar_lea.smem %s0, 6
  %s13 = sld [smem:[%s12]]
  %s14 = scalar_lea.smem %s0, 7
  %s15 = sld [smem:[%s14]]
  %s16 = scalar_lea.smem %s0, 8
  %s17 = sld [smem:[%s16]]
  %s18 = scalar_lea.smem %s0, 9
  %s19 = sld [smem:[%s18]]
  %s20 = scalar_lea.smem %s0, 10
  %s21 = sld [smem:[%s20]]
  %s22 = scalar_lea.smem %s0, 11
  %s23 = sld [smem:[%s22]]
  %s24 = scalar_lea.smem %s0, 12
  %s25 = sld [smem:[%s24]]
  %s26 = scalar_lea.smem %s0, 13
  %s27 = sld [smem:[%s26]]
  %s28 = scalar_lea.smem %s0, 14
  %s29 = sld [smem:[%s28]]
  %s30 = scalar_lea.smem %s0, 15
  %s31 = sld [smem:[%s30]]
  %s32 = scalar_lea.smem %s0, 16
  %s33 = sld [smem:[%s32]]
  %s34 = scalar_lea.smem %s0, 17
  %s35 = sld [smem:[%s34]]
  %s36 = scalar_lea.smem %s0, 18
  %s37 = sld [smem:[%s36]]
  %s38 = scalar_lea.smem %s0, 19
  %s39 = sld [smem:[%s38]]
  %s40 = scalar_lea.smem %s0, 20
  %s41 = sld [smem:[%s40]]
  %s42 = scalar_lea.smem %s0, 21
  %s43 = sld [smem:[%s42]]
  %s44 = scalar_lea.smem %s0, 22
  %s45 = sld [smem:[%s44]]
  %s46 = scalar_lea.smem %s0, 23
  %s47 = sld [smem:[%s46]]
  %s48 = scalar_lea.smem %s0, 24
  %s49 = sld [smem:[%s48]]
  %s50 = scalar_lea.smem %s0, 25
  %s51 = sld [smem:[%s50]]
  %s52 = scalar_lea.smem %s0, 26
  %s53 = sld [smem:[%s52]]
  %s54 = scalar_lea.smem %s0, 27
  %s55 = sld [smem:[%s54]]
  %s56 = scalar_lea.smem %s0, 28
  %s57 = sld [smem:[%s56]]
  %s58 = scalar_lea.smem %s0, 29
  %s59 = sld [smem:[%s58]]
  %s60 = scalar_lea.smem %s0, 30
  %s61 = sld [smem:[%s60]]
  %s62 = sld [smem:[#allocation0]]
  $region193: #{tpu_custom_call.1} parent=0
    _
  %s64 = ssub.s32 1, %s62
  %s65 = scalar_select 0, %s64, %s62
  $region1: #{tpu_custom_call.1} parent=0
    #allocation2 [shape = 'u8[8192]{0}', space=vmem, size = 0x2000, scoped, tag = 'input window, operand 0']
    #allocation3 [shape = 's32[2]{0}', space=sflag, size = 0x8, scoped, tag = 'scoped memory for tpu_custom_call.1']
    #allocation4 [shape = 's32[2]{0}', space=sflag, size = 0x8, scoped, tag = 'scoped memory for tpu_custom_call.1']
    #allocation5 [shape = 'u8[8192]{0}', space=vmem, size = 0x2000, scoped, tag = 'input window, operand 2']
    #allocation6 [shape = 's32[2]{0}', space=sflag, size = 0x8, scoped, tag = 'scoped memory for tpu_custom_call.1']
    #allocation7 [shape = 'u8[16384]{0}', space=vmem, size = 0x4000, scoped, tag = 'input window, operand 6, single buffered']
    #allocation8 [shape = 'u8[16384]{0}', space=vmem, size = 0x4000, scoped, tag = 'input window, operand 8, single buffered']
    #allocation9 [shape = 's32[1]{0}', space=sflag, size = 0x4, scoped, tag = 'scoped memory for tpu_custom_call.1']
    #allocation10 [shape = 'u8[16384]{0}', space=vmem, size = 0x4000, scoped, tag = 'input window, operand 10, single buffered']
    #allocation11 [shape = 'u8[16384]{0}', space=vmem, size = 0x4000, scoped, tag = 'input window, operand 12, single buffered']
    #allocation12 [shape = 's32[1]{0}', space=sflag, size = 0x4, scoped, tag = 'scoped memory for tpu_custom_call.1']
    #allocation13 [shape = 'u8[16384]{0}', space=vmem, size = 0x4000, scoped, tag = 'input window, operand 14, single buffered']
    #allocation14 [shape = 'u8[16384]{0}', space=vmem, size = 0x4000, scoped, tag = 'input window, operand 16, single buffered']
    #allocation15 [shape = 's32[1]{0}', space=sflag, size = 0x4, scoped, tag = 'scoped memory for tpu_custom_call.1']
    #allocation16 [shape = 'u8[16384]{0}', space=vmem, size = 0x4000, scoped, tag = 'input window, operand 18, single buffered']
    #allocation17 [shape = 'u8[16384]{0}', space=vmem, size = 0x4000, scoped, tag = 'input window, operand 26, single buffered']
    #allocation18 [shape = 's32[1]{0}', space=sflag, size = 0x4, scoped, tag = 'scoped memory for tpu_custom_call.1']
    #allocation19 [shape = 'u8[8192]{0}', space=vmem, size = 0x2000, scoped, tag = 'output window, operand 0']
    %66 = vsyncpa [#allocation3], 0
    %s67 = scalar_lea.sflag [#allocation3], 1
    %68 = vsyncpa %s67, 0
    %69 = vsyncpa [#allocation6], 0
    %s70 = scalar_lea.sflag [#allocation6], 1
    %71 = vsyncpa %s70, 0
    %72 = vsyncpa [#allocation9], 0
    %73 = vsyncpa [#allocation12], 0
    %74 = vsyncpa [#allocation15], 0
    %75 = vsyncpa [#allocation18], 0
    %76 = vsyncpa [#allocation4], 0
    %s77 = scalar_lea.sflag [#allocation4], 1
    %78 = vsyncpa %s77, 0
    loop: start=0, step=1, limit=4
    $region2: #{tpu_custom_call.1} parent=1 // loop_pre_header
      _
    $region3: #{tpu_custom_call.1} parent=1 // loop_header
      %s80 = sphi 0, %s84
      %p81 = scmp.ge.s32.totalorder %s80, 4
      %s90 = sphi 0, %s92
      %s93 = sphi 0, %s90
      %s94 = sphi 0, %s93
      %s110 = sphi 0, %s94
      %s116 = sphi 0, %s118
      %s119 = sphi 0, %s116
      %s120 = sphi 0, %s119
      %s136 = sphi 0, %s120
      %s142 = sphi 0, %s144
      %s145 = sphi 0, %s142
      %s146 = sphi 0, %s145
      %s162 = sphi 0, %s146
      %s168 = sphi 0, %s170
      %s171 = sphi 0, %s168
      %s172 = sphi 0, %s171
      %s188 = sphi 0, %s172
      %s192 = sphi 0, %s192
      %s194 = sphi 0, %s192
      %s195 = sphi 0, %s194
      %s209 = sphi 0, %s195
      %s213 = sphi 0, %s213
      %s215 = sphi 0, %s213
      %s216 = sphi 0, %s215
      %s230 = sphi 0, %s216
      %s234 = sphi 0, %s234
      %s236 = sphi 0, %s234
      %s237 = sphi 0, %s236
      %s251 = sphi 0, %s237
      %s255 = sphi 0, %s255
      %s257 = sphi 0, %s255
      %s258 = sphi 0, %s257
      %s272 = sphi 0, %s258
      %s276 = sphi 0, %s276
      %s278 = sphi 0, %s276
      %s279 = sphi 0, %s278
      %s293 = sphi 0, %s279
      %s297 = sphi 0, %s297
      %s299 = sphi 0, %s297
      %s300 = sphi 0, %s299
      %s314 = sphi 0, %s300
      %s318 = sphi 0, %s318
      %s320 = sphi 0, %s318
      %s321 = sphi 0, %s320
      %s335 = sphi 0, %s321
      %s339 = sphi 0, %s339
      %s341 = sphi 0, %s339
      %s342 = sphi 0, %s341
      %s356 = sphi 0, %s342
      %s360 = sphi 0, %s360
      %s362 = sphi 0, %s360
      %s363 = sphi 0, %s362
      %s377 = sphi 0, %s363
      %s381 = sphi 0, %s381
      %s383 = sphi 0, %s381
      %s384 = sphi 0, %s383
      %s398 = sphi 0, %s384
      %s402 = sphi 0, %s402
      %s404 = sphi 0, %s402
      %s405 = sphi 0, %s404
      %s419 = sphi 0, %s405
      %s423 = sphi 0, %s423
      %s425 = sphi 0, %s423
      %s426 = sphi 0, %s425
      %s440 = sphi 0, %s426
      %s444 = sphi 0, %s444
      %s446 = sphi 0, %s444
      %s447 = sphi 0, %s446
      %s461 = sphi 0, %s447
      %s465 = sphi 0, %s465
      %s467 = sphi 0, %s465
      %s468 = sphi 0, %s467
      %s482 = sphi 0, %s468
      %s486 = sphi 0, %s486
      %s488 = sphi 0, %s486
      %s489 = sphi 0, %s488
      %s503 = sphi 0, %s489
      %s507 = sphi 0, %s507
      %s509 = sphi 0, %s507
      %s510 = sphi 0, %s509
      %s524 = sphi 0, %s510
      %s528 = sphi 0, %s528
      %s530 = sphi 0, %s528
      %s531 = sphi 0, %s530
      %s545 = sphi 0, %s531
      %s549 = sphi 0, %s549
      %s551 = sphi 0, %s549
      %s552 = sphi 0, %s551
      %s566 = sphi 0, %s552
      %s570 = sphi 0, %s570
      %s572 = sphi 0, %s570
      %s573 = sphi 0, %s572
      %s587 = sphi 0, %s573
      %s591 = sphi 0, %s591
      %s593 = sphi 0, %s591
      %s594 = sphi 0, %s593
      %s608 = sphi 0, %s594
      %s612 = sphi 0, %s612
      %s614 = sphi 0, %s612
      %s615 = sphi 0, %s614
      %s629 = sphi 0, %s615
      %s633 = sphi 0, %s633
      %s635 = sphi 0, %s633
      %s636 = sphi 0, %s635
      %s650 = sphi 0, %s636
      %s654 = sphi 0, %s654
      %s656 = sphi 0, %s654
      %s657 = sphi 0, %s656
      %s671 = sphi 0, %s657
      %s675 = sphi 0, %s675
      %s677 = sphi 0, %s675
      %s678 = sphi 0, %s677
      %s692 = sphi 0, %s678
      %s696 = sphi 0, %s696
      %s698 = sphi 0, %s696
      %s699 = sphi 0, %s698
      %s713 = sphi 0, %s699
      %s717 = sphi 0, %s717
      %s719 = sphi 0, %s717
      %s720 = sphi 0, %s719
      %s734 = sphi 0, %s720
      %s740 = sphi 0, %s742
      %s743 = sphi 0, %s740
      %s744 = sphi 0, %s743
      %s760 = sphi 0, %s744
    $region4: #{tpu_custom_call.1} parent=1 // loop_header_branch
      %83 = sbr.rel (%p81) target = $region8
    $region5: #{tpu_custom_call.1} parent=1 // loop_body
      %s85 = ssub.s32 %s80, 1
      %s86 = ssub.s32 %s80, 2
      %s87 = sadd.s32 %s80, 1
      %s88 = ssub.s32 %s80, %s87
      %p89 = scmp.eq.s32.totalorder %s88, 0
      %s91 = sadd.s32 %s90, 1
      %s92 = scalar_select %p89, %s90, %s91
      %p95 = pneg %p89
      %p96 = scmp.eq.s32.totalorder %s80, 1
      %p97 = por %p95, %p96
      %p98 = scmp.ne.s32.totalorder %s90, %s93
      %p99 = scmp.eq.s32.totalorder %s80, 0
      %p100 = por %p98, %p99
      %p101 = scmp.ne.s32.totalorder %s90, %s93
      %p102 = scmp.eq.s32.totalorder %s85, 1
      %p103 = por %p101, %p102
      %p104 = scmp.ne.s32.totalorder %s93, %s94
      %p105 = scmp.eq.s32.totalorder %s85, 0
      %p106 = por %p104, %p105
      %p107 = scmp.ne.s32.totalorder %s93, %s94
      %p108 = scmp.eq.s32.totalorder %s86, 1
      %p109 = por %p107, %p108
      %p111 = scmp.ne.s32.totalorder %s94, %s110
      %p112 = scmp.eq.s32.totalorder %s86, 0
      %p113 = por %p111, %p112
      %s114 = ssub.s32 %s80, %s87
      %p115 = scmp.eq.s32.totalorder %s114, 0
      %s117 = sadd.s32 %s116, 1
      %s118 = scalar_select %p115, %s116, %s117
      %p121 = pneg %p115
      %p122 = scmp.eq.s32.totalorder %s80, 1
      %p123 = por %p121, %p122
      %p124 = scmp.ne.s32.totalorder %s116, %s119
      %p125 = scmp.eq.s32.totalorder %s80, 0
      %p126 = por %p124, %p125
      %p127 = scmp.ne.s32.totalorder %s116, %s119
      %p128 = scmp.eq.s32.totalorder %s85, 1
      %p129 = por %p127, %p128
      %p130 = scmp.ne.s32.totalorder %s119, %s120
      %p131 = scmp.eq.s32.totalorder %s85, 0
      %p132 = por %p130, %p131
      %p133 = scmp.ne.s32.totalorder %s119, %s120
      %p134 = scmp.eq.s32.totalorder %s86, 1
      %p135 = por %p133, %p134
      %p137 = scmp.ne.s32.totalorder %s120, %s136
      %p138 = scmp.eq.s32.totalorder %s86, 0
      %p139 = por %p137, %p138
      %s140 = ssub.s32 %s80, %s87
      %p141 = scmp.eq.s32.totalorder %s140, 0
      %s143 = sadd.s32 %s142, 1
      %s144 = scalar_select %p141, %s142, %s143
      %p147 = pneg %p141
      %p148 = scmp.eq.s32.totalorder %s80, 1
      %p149 = por %p147, %p148
      %p150 = scmp.ne.s32.totalorder %s142, %s145
      %p151 = scmp.eq.s32.totalorder %s80, 0
      %p152 = por %p150, %p151
      %p153 = scmp.ne.s32.totalorder %s142, %s145
      %p154 = scmp.eq.s32.totalorder %s85, 1
      %p155 = por %p153, %p154
      %p156 = scmp.ne.s32.totalorder %s145, %s146
      %p157 = scmp.eq.s32.totalorder %s85, 0
      %p158 = por %p156, %p157
      %p159 = scmp.ne.s32.totalorder %s145, %s146
      %p160 = scmp.eq.s32.totalorder %s86, 1
      %p161 = por %p159, %p160
      %p163 = scmp.ne.s32.totalorder %s146, %s162
      %p164 = scmp.eq.s32.totalorder %s86, 0
      %p165 = por %p163, %p164
      %s166 = ssub.s32 %s80, %s87
      %p167 = scmp.eq.s32.totalorder %s166, 0
      %s169 = sadd.s32 %s168, 1
      %s170 = scalar_select %p167, %s168, %s169
      %p173 = pneg %p167
      %p174 = scmp.eq.s32.totalorder %s80, 1
      %p175 = por %p173, %p174
      %p176 = scmp.ne.s32.totalorder %s168, %s171
      %p177 = scmp.eq.s32.totalorder %s80, 0
      %p178 = por %p176, %p177
      %p179 = scmp.ne.s32.totalorder %s168, %s171
      %p180 = scmp.eq.s32.totalorder %s85, 1
      %p181 = por %p179, %p180
      %p182 = scmp.ne.s32.totalorder %s171, %s172
      %p183 = scmp.eq.s32.totalorder %s85, 0
      %p184 = por %p182, %p183
      %p185 = scmp.ne.s32.totalorder %s171, %s172
      %p186 = scmp.eq.s32.totalorder %s86, 1
      %p187 = por %p185, %p186
      %p189 = scmp.ne.s32.totalorder %s172, %s188
      %p190 = scmp.eq.s32.totalorder %s86, 0
      %p191 = por %p189, %p190
      %s193 = sadd.s32 %s192, 1
      %p196 = scmp.eq.s32.totalorder %s80, 1
      %p197 = scmp.ne.s32.totalorder %s192, %s194
      %p198 = scmp.eq.s32.totalorder %s80, 0
      %p199 = por %p197, %p198
      %p200 = scmp.ne.s32.totalorder %s192, %s194
      %p201 = scmp.eq.s32.totalorder %s85, 1
      %p202 = por %p200, %p201
      %p203 = scmp.ne.s32.totalorder %s194, %s195
      %p204 = scmp.eq.s32.totalorder %s85, 0
      %p205 = por %p203, %p204
      %p206 = scmp.ne.s32.totalorder %s194, %s195
      %p207 = scmp.eq.s32.totalorder %s86, 1
      %p208 = por %p206, %p207
      %p210 = scmp.ne.s32.totalorder %s195, %s209
      %p211 = scmp.eq.s32.totalorder %s86, 0
      %p212 = por %p210, %p211
      %s214 = sadd.s32 %s213, 1
      %p217 = scmp.eq.s32.totalorder %s80, 1
      %p218 = scmp.ne.s32.totalorder %s213, %s215
      %p219 = scmp.eq.s32.totalorder %s80, 0
      %p220 = por %p218, %p219
      %p221 = scmp.ne.s32.totalorder %s213, %s215
      %p222 = scmp.eq.s32.totalorder %s85, 1
      %p223 = por %p221, %p222
      %p224 = scmp.ne.s32.totalorder %s215, %s216
      %p225 = scmp.eq.s32.totalorder %s85, 0
      %p226 = por %p224, %p225
      %p227 = scmp.ne.s32.totalorder %s215, %s216
      %p228 = scmp.eq.s32.totalorder %s86, 1
      %p229 = por %p227, %p228
      %p231 = scmp.ne.s32.totalorder %s216, %s230
      %p232 = scmp.eq.s32.totalorder %s86, 0
      %p233 = por %p231, %p232
      %s235 = sadd.s32 %s234, 1
      %p238 = scmp.eq.s32.totalorder %s80, 1
      %p239 = scmp.ne.s32.totalorder %s234, %s236
      %p240 = scmp.eq.s32.totalorder %s80, 0
      %p241 = por %p239, %p240
      %p242 = scmp.ne.s32.totalorder %s234, %s236
      %p243 = scmp.eq.s32.totalorder %s85, 1
      %p244 = por %p242, %p243
      %p245 = scmp.ne.s32.totalorder %s236, %s237
      %p246 = scmp.eq.s32.totalorder %s85, 0
      %p247 = por %p245, %p246
      %p248 = scmp.ne.s32.totalorder %s236, %s237
      %p249 = scmp.eq.s32.totalorder %s86, 1
      %p250 = por %p248, %p249
      %p252 = scmp.ne.s32.totalorder %s237, %s251
      %p253 = scmp.eq.s32.totalorder %s86, 0
      %p254 = por %p252, %p253
      %s256 = sadd.s32 %s255, 1
      %p259 = scmp.eq.s32.totalorder %s80, 1
      %p260 = scmp.ne.s32.totalorder %s255, %s257
      %p261 = scmp.eq.s32.totalorder %s80, 0
      %p262 = por %p260, %p261
      %p263 = scmp.ne.s32.totalorder %s255, %s257
      %p264 = scmp.eq.s32.totalorder %s85, 1
      %p265 = por %p263, %p264
      %p266 = scmp.ne.s32.totalorder %s257, %s258
      %p267 = scmp.eq.s32.totalorder %s85, 0
      %p268 = por %p266, %p267
      %p269 = scmp.ne.s32.totalorder %s257, %s258
      %p270 = scmp.eq.s32.totalorder %s86, 1
      %p271 = por %p269, %p270
      %p273 = scmp.ne.s32.totalorder %s258, %s272
      %p274 = scmp.eq.s32.totalorder %s86, 0
      %p275 = por %p273, %p274
      %s277 = sadd.s32 %s276, 1
      %p280 = scmp.eq.s32.totalorder %s80, 1
      %p281 = scmp.ne.s32.totalorder %s276, %s278
      %p282 = scmp.eq.s32.totalorder %s80, 0
      %p283 = por %p281, %p282
      %p284 = scmp.ne.s32.totalorder %s276, %s278
      %p285 = scmp.eq.s32.totalorder %s85, 1
      %p286 = por %p284, %p285
      %p287 = scmp.ne.s32.totalorder %s278, %s279
      %p288 = scmp.eq.s32.totalorder %s85, 0
      %p289 = por %p287, %p288
      %p290 = scmp.ne.s32.totalorder %s278, %s279
      %p291 = scmp.eq.s32.totalorder %s86, 1
      %p292 = por %p290, %p291
      %p294 = scmp.ne.s32.totalorder %s279, %s293
      %p295 = scmp.eq.s32.totalorder %s86, 0
      %p296 = por %p294, %p295
      %s298 = sadd.s32 %s297, 1
      %p301 = scmp.eq.s32.totalorder %s80, 1
      %p302 = scmp.ne.s32.totalorder %s297, %s299
      %p303 = scmp.eq.s32.totalorder %s80, 0
      %p304 = por %p302, %p303
      %p305 = scmp.ne.s32.totalorder %s297, %s299
      %p306 = scmp.eq.s32.totalorder %s85, 1
      %p307 = por %p305, %p306
      %p308 = scmp.ne.s32.totalorder %s299, %s300
      %p309 = scmp.eq.s32.totalorder %s85, 0
      %p310 = por %p308, %p309
      %p311 = scmp.ne.s32.totalorder %s299, %s300
      %p312 = scmp.eq.s32.totalorder %s86, 1
      %p313 = por %p311, %p312
      %p315 = scmp.ne.s32.totalorder %s300, %s314
      %p316 = scmp.eq.s32.totalorder %s86, 0
      %p317 = por %p315, %p316
      %s319 = sadd.s32 %s318, 1
      %p322 = scmp.eq.s32.totalorder %s80, 1
      %p323 = scmp.ne.s32.totalorder %s318, %s320
      %p324 = scmp.eq.s32.totalorder %s80, 0
      %p325 = por %p323, %p324
      %p326 = scmp.ne.s32.totalorder %s318, %s320
      %p327 = scmp.eq.s32.totalorder %s85, 1
      %p328 = por %p326, %p327
      %p329 = scmp.ne.s32.totalorder %s320, %s321
      %p330 = scmp.eq.s32.totalorder %s85, 0
      %p331 = por %p329, %p330
      %p332 = scmp.ne.s32.totalorder %s320, %s321
      %p333 = scmp.eq.s32.totalorder %s86, 1
      %p334 = por %p332, %p333
      %p336 = scmp.ne.s32.totalorder %s321, %s335
      %p337 = scmp.eq.s32.totalorder %s86, 0
      %p338 = por %p336, %p337
      %s340 = sadd.s32 %s339, 1
      %p343 = scmp.eq.s32.totalorder %s80, 1
      %p344 = scmp.ne.s32.totalorder %s339, %s341
      %p345 = scmp.eq.s32.totalorder %s80, 0
      %p346 = por %p344, %p345
      %p347 = scmp.ne.s32.totalorder %s339, %s341
      %p348 = scmp.eq.s32.totalorder %s85, 1
      %p349 = por %p347, %p348
      %p350 = scmp.ne.s32.totalorder %s341, %s342
      %p351 = scmp.eq.s32.totalorder %s85, 0
      %p352 = por %p350, %p351
      %p353 = scmp.ne.s32.totalorder %s341, %s342
      %p354 = scmp.eq.s32.totalorder %s86, 1
      %p355 = por %p353, %p354
      %p357 = scmp.ne.s32.totalorder %s342, %s356
      %p358 = scmp.eq.s32.totalorder %s86, 0
      %p359 = por %p357, %p358
      %s361 = sadd.s32 %s360, 1
      %p364 = scmp.eq.s32.totalorder %s80, 1
      %p365 = scmp.ne.s32.totalorder %s360, %s362
      %p366 = scmp.eq.s32.totalorder %s80, 0
      %p367 = por %p365, %p366
      %p368 = scmp.ne.s32.totalorder %s360, %s362
      %p369 = scmp.eq.s32.totalorder %s85, 1
      %p370 = por %p368, %p369
      %p371 = scmp.ne.s32.totalorder %s362, %s363
      %p372 = scmp.eq.s32.totalorder %s85, 0
      %p373 = por %p371, %p372
      %p374 = scmp.ne.s32.totalorder %s362, %s363
      %p375 = scmp.eq.s32.totalorder %s86, 1
      %p376 = por %p374, %p375
      %p378 = scmp.ne.s32.totalorder %s363, %s377
      %p379 = scmp.eq.s32.totalorder %s86, 0
      %p380 = por %p378, %p379
      %s382 = sadd.s32 %s381, 1
      %p385 = scmp.eq.s32.totalorder %s80, 1
      %p386 = scmp.ne.s32.totalorder %s381, %s383
      %p387 = scmp.eq.s32.totalorder %s80, 0
      %p388 = por %p386, %p387
      %p389 = scmp.ne.s32.totalorder %s381, %s383
      %p390 = scmp.eq.s32.totalorder %s85, 1
      %p391 = por %p389, %p390
      %p392 = scmp.ne.s32.totalorder %s383, %s384
      %p393 = scmp.eq.s32.totalorder %s85, 0
      %p394 = por %p392, %p393
      %p395 = scmp.ne.s32.totalorder %s383, %s384
      %p396 = scmp.eq.s32.totalorder %s86, 1
      %p397 = por %p395, %p396
      %p399 = scmp.ne.s32.totalorder %s384, %s398
      %p400 = scmp.eq.s32.totalorder %s86, 0
      %p401 = por %p399, %p400
      %s403 = sadd.s32 %s402, 1
      %p406 = scmp.eq.s32.totalorder %s80, 1
      %p407 = scmp.ne.s32.totalorder %s402, %s404
      %p408 = scmp.eq.s32.totalorder %s80, 0
      %p409 = por %p407, %p408
      %p410 = scmp.ne.s32.totalorder %s402, %s404
      %p411 = scmp.eq.s32.totalorder %s85, 1
      %p412 = por %p410, %p411
      %p413 = scmp.ne.s32.totalorder %s404, %s405
      %p414 = scmp.eq.s32.totalorder %s85, 0
      %p415 = por %p413, %p414
      %p416 = scmp.ne.s32.totalorder %s404, %s405
      %p417 = scmp.eq.s32.totalorder %s86, 1
      %p418 = por %p416, %p417
      %p420 = scmp.ne.s32.totalorder %s405, %s419
      %p421 = scmp.eq.s32.totalorder %s86, 0
      %p422 = por %p420, %p421
      %s424 = sadd.s32 %s423, 1
      %p427 = scmp.eq.s32.totalorder %s80, 1
      %p428 = scmp.ne.s32.totalorder %s423, %s425
      %p429 = scmp.eq.s32.totalorder %s80, 0
      %p430 = por %p428, %p429
      %p431 = scmp.ne.s32.totalorder %s423, %s425
      %p432 = scmp.eq.s32.totalorder %s85, 1
      %p433 = por %p431, %p432
      %p434 = scmp.ne.s32.totalorder %s425, %s426
      %p435 = scmp.eq.s32.totalorder %s85, 0
      %p436 = por %p434, %p435
      %p437 = scmp.ne.s32.totalorder %s425, %s426
      %p438 = scmp.eq.s32.totalorder %s86, 1
      %p439 = por %p437, %p438
      %p441 = scmp.ne.s32.totalorder %s426, %s440
      %p442 = scmp.eq.s32.totalorder %s86, 0
      %p443 = por %p441, %p442
      %s445 = sadd.s32 %s444, 1
      %p448 = scmp.eq.s32.totalorder %s80, 1
      %p449 = scmp.ne.s32.totalorder %s444, %s446
      %p450 = scmp.eq.s32.totalorder %s80, 0
      %p451 = por %p449, %p450
      %p452 = scmp.ne.s32.totalorder %s444, %s446
      %p453 = scmp.eq.s32.totalorder %s85, 1
      %p454 = por %p452, %p453
      %p455 = scmp.ne.s32.totalorder %s446, %s447
      %p456 = scmp.eq.s32.totalorder %s85, 0
      %p457 = por %p455, %p456
      %p458 = scmp.ne.s32.totalorder %s446, %s447
      %p459 = scmp.eq.s32.totalorder %s86, 1
      %p460 = por %p458, %p459
      %p462 = scmp.ne.s32.totalorder %s447, %s461
      %p463 = scmp.eq.s32.totalorder %s86, 0
      %p464 = por %p462, %p463
      %s466 = sadd.s32 %s465, 1
      %p469 = scmp.eq.s32.totalorder %s80, 1
      %p470 = scmp.ne.s32.totalorder %s465, %s467
      %p471 = scmp.eq.s32.totalorder %s80, 0
      %p472 = por %p470, %p471
      %p473 = scmp.ne.s32.totalorder %s465, %s467
      %p474 = scmp.eq.s32.totalorder %s85, 1
      %p475 = por %p473, %p474
      %p476 = scmp.ne.s32.totalorder %s467, %s468
      %p477 = scmp.eq.s32.totalorder %s85, 0
      %p478 = por %p476, %p477
      %p479 = scmp.ne.s32.totalorder %s467, %s468
      %p480 = scmp.eq.s32.totalorder %s86, 1
      %p481 = por %p479, %p480
      %p483 = scmp.ne.s32.totalorder %s468, %s482
      %p484 = scmp.eq.s32.totalorder %s86, 0
      %p485 = por %p483, %p484
      %s487 = sadd.s32 %s486, 1
      %p490 = scmp.eq.s32.totalorder %s80, 1
      %p491 = scmp.ne.s32.totalorder %s486, %s488
      %p492 = scmp.eq.s32.totalorder %s80, 0
      %p493 = por %p491, %p492
      %p494 = scmp.ne.s32.totalorder %s486, %s488
      %p495 = scmp.eq.s32.totalorder %s85, 1
      %p496 = por %p494, %p495
      %p497 = scmp.ne.s32.totalorder %s488, %s489
      %p498 = scmp.eq.s32.totalorder %s85, 0
      %p499 = por %p497, %p498
      %p500 = scmp.ne.s32.totalorder %s488, %s489
      %p501 = scmp.eq.s32.totalorder %s86, 1
      %p502 = por %p500, %p501
      %p504 = scmp.ne.s32.totalorder %s489, %s503
      %p505 = scmp.eq.s32.totalorder %s86, 0
      %p506 = por %p504, %p505
      %s508 = sadd.s32 %s507, 1
      %p511 = scmp.eq.s32.totalorder %s80, 1
      %p512 = scmp.ne.s32.totalorder %s507, %s509
      %p513 = scmp.eq.s32.totalorder %s80, 0
      %p514 = por %p512, %p513
      %p515 = scmp.ne.s32.totalorder %s507, %s509
      %p516 = scmp.eq.s32.totalorder %s85, 1
      %p517 = por %p515, %p516
      %p518 = scmp.ne.s32.totalorder %s509, %s510
      %p519 = scmp.eq.s32.totalorder %s85, 0
      %p520 = por %p518, %p519
      %p521 = scmp.ne.s32.totalorder %s509, %s510
      %p522 = scmp.eq.s32.totalorder %s86, 1
      %p523 = por %p521, %p522
      %p525 = scmp.ne.s32.totalorder %s510, %s524
      %p526 = scmp.eq.s32.totalorder %s86, 0
      %p527 = por %p525, %p526
      %s529 = sadd.s32 %s528, 1
      %p532 = scmp.eq.s32.totalorder %s80, 1
      %p533 = scmp.ne.s32.totalorder %s528, %s530
      %p534 = scmp.eq.s32.totalorder %s80, 0
      %p535 = por %p533, %p534
      %p536 = scmp.ne.s32.totalorder %s528, %s530
      %p537 = scmp.eq.s32.totalorder %s85, 1
      %p538 = por %p536, %p537
      %p539 = scmp.ne.s32.totalorder %s530, %s531
      %p540 = scmp.eq.s32.totalorder %s85, 0
      %p541 = por %p539, %p540
      %p542 = scmp.ne.s32.totalorder %s530, %s531
      %p543 = scmp.eq.s32.totalorder %s86, 1
      %p544 = por %p542, %p543
      %p546 = scmp.ne.s32.totalorder %s531, %s545
      %p547 = scmp.eq.s32.totalorder %s86, 0
      %p548 = por %p546, %p547
      %s550 = sadd.s32 %s549, 1
      %p553 = scmp.eq.s32.totalorder %s80, 1
      %p554 = scmp.ne.s32.totalorder %s549, %s551
      %p555 = scmp.eq.s32.totalorder %s80, 0
      %p556 = por %p554, %p555
      %p557 = scmp.ne.s32.totalorder %s549, %s551
      %p558 = scmp.eq.s32.totalorder %s85, 1
      %p559 = por %p557, %p558
      %p560 = scmp.ne.s32.totalorder %s551, %s552
      %p561 = scmp.eq.s32.totalorder %s85, 0
      %p562 = por %p560, %p561
      %p563 = scmp.ne.s32.totalorder %s551, %s552
      %p564 = scmp.eq.s32.totalorder %s86, 1
      %p565 = por %p563, %p564
      %p567 = scmp.ne.s32.totalorder %s552, %s566
      %p568 = scmp.eq.s32.totalorder %s86, 0
      %p569 = por %p567, %p568
      %s571 = sadd.s32 %s570, 1
      %p574 = scmp.eq.s32.totalorder %s80, 1
      %p575 = scmp.ne.s32.totalorder %s570, %s572
      %p576 = scmp.eq.s32.totalorder %s80, 0
      %p577 = por %p575, %p576
      %p578 = scmp.ne.s32.totalorder %s570, %s572
      %p579 = scmp.eq.s32.totalorder %s85, 1
      %p580 = por %p578, %p579
      %p581 = scmp.ne.s32.totalorder %s572, %s573
      %p582 = scmp.eq.s32.totalorder %s85, 0
      %p583 = por %p581, %p582
      %p584 = scmp.ne.s32.totalorder %s572, %s573
      %p585 = scmp.eq.s32.totalorder %s86, 1
      %p586 = por %p584, %p585
      %p588 = scmp.ne.s32.totalorder %s573, %s587
      %p589 = scmp.eq.s32.totalorder %s86, 0
      %p590 = por %p588, %p589
      %s592 = sadd.s32 %s591, 1
      %p595 = scmp.eq.s32.totalorder %s80, 1
      %p596 = scmp.ne.s32.totalorder %s591, %s593
      %p597 = scmp.eq.s32.totalorder %s80, 0
      %p598 = por %p596, %p597
      %p599 = scmp.ne.s32.totalorder %s591, %s593
      %p600 = scmp.eq.s32.totalorder %s85, 1
      %p601 = por %p599, %p600
      %p602 = scmp.ne.s32.totalorder %s593, %s594
      %p603 = scmp.eq.s32.totalorder %s85, 0
      %p604 = por %p602, %p603
      %p605 = scmp.ne.s32.totalorder %s593, %s594
      %p606 = scmp.eq.s32.totalorder %s86, 1
      %p607 = por %p605, %p606
      %p609 = scmp.ne.s32.totalorder %s594, %s608
      %p610 = scmp.eq.s32.totalorder %s86, 0
      %p611 = por %p609, %p610
      %s613 = sadd.s32 %s612, 1
      %p616 = scmp.eq.s32.totalorder %s80, 1
      %p617 = scmp.ne.s32.totalorder %s612, %s614
      %p618 = scmp.eq.s32.totalorder %s80, 0
      %p619 = por %p617, %p618
      %p620 = scmp.ne.s32.totalorder %s612, %s614
      %p621 = scmp.eq.s32.totalorder %s85, 1
      %p622 = por %p620, %p621
      %p623 = scmp.ne.s32.totalorder %s614, %s615
      %p624 = scmp.eq.s32.totalorder %s85, 0
      %p625 = por %p623, %p624
      %p626 = scmp.ne.s32.totalorder %s614, %s615
      %p627 = scmp.eq.s32.totalorder %s86, 1
      %p628 = por %p626, %p627
      %p630 = scmp.ne.s32.totalorder %s615, %s629
      %p631 = scmp.eq.s32.totalorder %s86, 0
      %p632 = por %p630, %p631
      %s634 = sadd.s32 %s633, 1
      %p637 = scmp.eq.s32.totalorder %s80, 1
      %p638 = scmp.ne.s32.totalorder %s633, %s635
      %p639 = scmp.eq.s32.totalorder %s80, 0
      %p640 = por %p638, %p639
      %p641 = scmp.ne.s32.totalorder %s633, %s635
      %p642 = scmp.eq.s32.totalorder %s85, 1
      %p643 = por %p641, %p642
      %p644 = scmp.ne.s32.totalorder %s635, %s636
      %p645 = scmp.eq.s32.totalorder %s85, 0
      %p646 = por %p644, %p645
      %p647 = scmp.ne.s32.totalorder %s635, %s636
      %p648 = scmp.eq.s32.totalorder %s86, 1
      %p649 = por %p647, %p648
      %p651 = scmp.ne.s32.totalorder %s636, %s650
      %p652 = scmp.eq.s32.totalorder %s86, 0
      %p653 = por %p651, %p652
      %s655 = sadd.s32 %s654, 1
      %p658 = scmp.eq.s32.totalorder %s80, 1
      %p659 = scmp.ne.s32.totalorder %s654, %s656
      %p660 = scmp.eq.s32.totalorder %s80, 0
      %p661 = por %p659, %p660
      %p662 = scmp.ne.s32.totalorder %s654, %s656
      %p663 = scmp.eq.s32.totalorder %s85, 1
      %p664 = por %p662, %p663
      %p665 = scmp.ne.s32.totalorder %s656, %s657
      %p666 = scmp.eq.s32.totalorder %s85, 0
      %p667 = por %p665, %p666
      %p668 = scmp.ne.s32.totalorder %s656, %s657
      %p669 = scmp.eq.s32.totalorder %s86, 1
      %p670 = por %p668, %p669
      %p672 = scmp.ne.s32.totalorder %s657, %s671
      %p673 = scmp.eq.s32.totalorder %s86, 0
      %p674 = por %p672, %p673
      %s676 = sadd.s32 %s675, 1
      %p679 = scmp.eq.s32.totalorder %s80, 1
      %p680 = scmp.ne.s32.totalorder %s675, %s677
      %p681 = scmp.eq.s32.totalorder %s80, 0
      %p682 = por %p680, %p681
      %p683 = scmp.ne.s32.totalorder %s675, %s677
      %p684 = scmp.eq.s32.totalorder %s85, 1
      %p685 = por %p683, %p684
      %p686 = scmp.ne.s32.totalorder %s677, %s678
      %p687 = scmp.eq.s32.totalorder %s85, 0
      %p688 = por %p686, %p687
      %p689 = scmp.ne.s32.totalorder %s677, %s678
      %p690 = scmp.eq.s32.totalorder %s86, 1
      %p691 = por %p689, %p690
      %p693 = scmp.ne.s32.totalorder %s678, %s692
      %p694 = scmp.eq.s32.totalorder %s86, 0
      %p695 = por %p693, %p694
      %s697 = sadd.s32 %s696, 1
      %p700 = scmp.eq.s32.totalorder %s80, 1
      %p701 = scmp.ne.s32.totalorder %s696, %s698
      %p702 = scmp.eq.s32.totalorder %s80, 0
      %p703 = por %p701, %p702
      %p704 = scmp.ne.s32.totalorder %s696, %s698
      %p705 = scmp.eq.s32.totalorder %s85, 1
      %p706 = por %p704, %p705
      %p707 = scmp.ne.s32.totalorder %s698, %s699
      %p708 = scmp.eq.s32.totalorder %s85, 0
      %p709 = por %p707, %p708
      %p710 = scmp.ne.s32.totalorder %s698, %s699
      %p711 = scmp.eq.s32.totalorder %s86, 1
      %p712 = por %p710, %p711
      %p714 = scmp.ne.s32.totalorder %s699, %s713
      %p715 = scmp.eq.s32.totalorder %s86, 0
      %p716 = por %p714, %p715
      %s718 = sadd.s32 %s717, 1
      %p721 = scmp.eq.s32.totalorder %s80, 1
      %p722 = scmp.ne.s32.totalorder %s717, %s719
      %p723 = scmp.eq.s32.totalorder %s80, 0
      %p724 = por %p722, %p723
      %p725 = scmp.ne.s32.totalorder %s717, %s719
      %p726 = scmp.eq.s32.totalorder %s85, 1
      %p727 = por %p725, %p726
      %p728 = scmp.ne.s32.totalorder %s719, %s720
      %p729 = scmp.eq.s32.totalorder %s85, 0
      %p730 = por %p728, %p729
      %p731 = scmp.ne.s32.totalorder %s719, %s720
      %p732 = scmp.eq.s32.totalorder %s86, 1
      %p733 = por %p731, %p732
      %p735 = scmp.ne.s32.totalorder %s720, %s734
      %p736 = scmp.eq.s32.totalorder %s86, 0
      %p737 = por %p735, %p736
      %s738 = ssub.s32 %s80, %s87
      %p739 = scmp.eq.s32.totalorder %s738, 0
      %s741 = sadd.s32 %s740, 1
      %s742 = scalar_select %p739, %s740, %s741
      %p745 = pneg %p739
      %p746 = scmp.eq.s32.totalorder %s80, 1
      %p747 = por %p745, %p746
      %p748 = scmp.ne.s32.totalorder %s740, %s743
      %p749 = scmp.eq.s32.totalorder %s80, 0
      %p750 = por %p748, %p749
      %p751 = scmp.ne.s32.totalorder %s740, %s743
      %p752 = scmp.eq.s32.totalorder %s85, 1
      %p753 = por %p751, %p752
      %p754 = scmp.ne.s32.totalorder %s743, %s744
      %p755 = scmp.eq.s32.totalorder %s85, 0
      %p756 = por %p754, %p755
      %p757 = scmp.ne.s32.totalorder %s743, %s744
      %p758 = scmp.eq.s32.totalorder %s86, 1
      %p759 = por %p757, %p758
      %p761 = scmp.ne.s32.totalorder %s744, %s760
      %p762 = scmp.eq.s32.totalorder %s86, 0
      %p763 = por %p761, %p762
      %p764 = scmp.le.s32.totalorder 1, %s80
      %p765 = scmp.lt.s32.totalorder %s80, 3
      %p766 = pnand %p764, %p765
      %p767 = pneg %p766
      // Predicated region
      $region9: #{tpu_custom_call.1} parent=5 // pred_check
        _
      $region10: #{tpu_custom_call.1} parent=5 // pred_check_branch
        %769 = sbr.rel (%p766) target = $region12
      $region11: #{tpu_custom_call.1} parent=5 // pred_region
        %s770 = ssub.s32 %s80, 1
        // Predicated region
        $region13: #{tpu_custom_call.1} parent=11 // pred_check
          %p771 = pneg %p205
        $region14: #{tpu_custom_call.1} parent=11 // pred_check_branch
          %773 = sbr.rel (%p771) target = $region16
        $region15: #{tpu_custom_call.1} parent=11 // pred_region
          _
        $region16: #{tpu_custom_call.1} parent=11 // pred_fallthru
          _
        // Predicated region
        $region17: #{tpu_custom_call.1} parent=11 // pred_check
          %p774 = pneg %p226
        $region18: #{tpu_custom_call.1} parent=11 // pred_check_branch
          %776 = sbr.rel (%p774) target = $region20
        $region19: #{tpu_custom_call.1} parent=11 // pred_region
          _
        $region20: #{tpu_custom_call.1} parent=11 // pred_fallthru
          _
        // Predicated region
        $region21: #{tpu_custom_call.1} parent=11 // pred_check
          %p777 = pneg %p247
        $region22: #{tpu_custom_call.1} parent=11 // pred_check_branch
          %779 = sbr.rel (%p777) target = $region24
        $region23: #{tpu_custom_call.1} parent=11 // pred_region
          %781 = vsyncadd [#allocation6], 0
          %s782 = sshll.u32 %s13, 4
          %s783 = int_to_ptr.hbm [resolvable:$true] %s782
          %s784 = sshll.u32 [#allocation7], 4
          %s785 = int_to_ptr.vmem [resolvable:$true] %s784
          %790 = dma.hbm_to_vmem [thread:$0]  %s783, 512, %s785, [#allocation6], 128, 128, 8
        $region24: #{tpu_custom_call.1} parent=11 // pred_fallthru
          _
        // Predicated region
        $region25: #{tpu_custom_call.1} parent=11 // pred_check
          %p791 = pneg %p268
        $region26: #{tpu_custom_call.1} parent=11 // pred_check_branch
          %793 = sbr.rel (%p791) target = $region28
        $region27: #{tpu_custom_call.1} parent=11 // pred_region
          _
        $region28: #{tpu_custom_call.1} parent=11 // pred_fallthru
          _
        // Predicated region
        $region29: #{tpu_custom_call.1} parent=11 // pred_check
          %p794 = pneg %p289
        $region30: #{tpu_custom_call.1} parent=11 // pred_check_branch
          %796 = sbr.rel (%p794) target = $region32
        $region31: #{tpu_custom_call.1} parent=11 // pred_region
          %798 = vsyncadd [#allocation9], 0
          %s799 = sshll.u32 %s17, 4
          %s800 = int_to_ptr.hbm [resolvable:$true] %s799
          %s801 = sshll.u32 [#allocation8], 4
          %s802 = int_to_ptr.vmem [resolvable:$true] %s801
          %807 = dma.hbm_to_vmem [thread:$0]  %s800, 512, %s802, [#allocation9], 128, 128, 8
        $region32: #{tpu_custom_call.1} parent=11 // pred_fallthru
          _
        // Predicated region
        $region33: #{tpu_custom_call.1} parent=11 // pred_check
          %p808 = pneg %p310
        $region34: #{tpu_custom_call.1} parent=11 // pred_check_branch
          %810 = sbr.rel (%p808) target = $region36
        $region35: #{tpu_custom_call.1} parent=11 // pred_region
          _
        $region36: #{tpu_custom_call.1} parent=11 // pred_fallthru
          _
        // Predicated region
        $region37: #{tpu_custom_call.1} parent=11 // pred_check
          %p811 = pneg %p331
        $region38: #{tpu_custom_call.1} parent=11 // pred_check_branch
          %813 = sbr.rel (%p811) target = $region40
        $region39: #{tpu_custom_call.1} parent=11 // pred_region
          %815 = vsyncadd [#allocation9], 0
          %s816 = sshll.u32 %s21, 4
          %s817 = int_to_ptr.hbm [resolvable:$true] %s816
          %s818 = sshll.u32 [#allocation10], 4
          %s819 = int_to_ptr.vmem [resolvable:$true] %s818
          %824 = dma.hbm_to_vmem [thread:$0]  %s817, 512, %s819, [#allocation9], 128, 128, 8
        $region40: #{tpu_custom_call.1} parent=11 // pred_fallthru
          _
        // Predicated region
        $region41: #{tpu_custom_call.1} parent=11 // pred_check
          %p825 = pneg %p352
        $region42: #{tpu_custom_call.1} parent=11 // pred_check_branch
          %827 = sbr.rel (%p825) target = $region44
        $region43: #{tpu_custom_call.1} parent=11 // pred_region
          _
        $region44: #{tpu_custom_call.1} parent=11 // pred_fallthru
          _
        // Predicated region
        $region45: #{tpu_custom_call.1} parent=11 // pred_check
          %p828 = pneg %p373
        $region46: #{tpu_custom_call.1} parent=11 // pred_check_branch
          %830 = sbr.rel (%p828) target = $region48
        $region47: #{tpu_custom_call.1} parent=11 // pred_region
          %832 = vsyncadd [#allocation12], 0
          %s833 = sshll.u32 %s25, 4
          %s834 = int_to_ptr.hbm [resolvable:$true] %s833
          %s835 = sshll.u32 [#allocation11], 4
          %s836 = int_to_ptr.vmem [resolvable:$true] %s835
          %841 = dma.hbm_to_vmem [thread:$0]  %s834, 512, %s836, [#allocation12], 128, 128, 8
        $region48: #{tpu_custom_call.1} parent=11 // pred_fallthru
          _
        // Predicated region
        $region49: #{tpu_custom_call.1} parent=11 // pred_check
          %p842 = pneg %p394
        $region50: #{tpu_custom_call.1} parent=11 // pred_check_branch
          %844 = sbr.rel (%p842) target = $region52
        $region51: #{tpu_custom_call.1} parent=11 // pred_region
          _
        $region52: #{tpu_custom_call.1} parent=11 // pred_fallthru
          _
        // Predicated region
        $region53: #{tpu_custom_call.1} parent=11 // pred_check
          %p845 = pneg %p415
        $region54: #{tpu_custom_call.1} parent=11 // pred_check_branch
          %847 = sbr.rel (%p845) target = $region56
        $region55: #{tpu_custom_call.1} parent=11 // pred_region
          %849 = vsyncadd [#allocation12], 0
          %s850 = sshll.u32 %s29, 4
          %s851 = int_to_ptr.hbm [resolvable:$true] %s850
          %s852 = sshll.u32 [#allocation13], 4
          %s853 = int_to_ptr.vmem [resolvable:$true] %s852
          %858 = dma.hbm_to_vmem [thread:$0]  %s851, 512, %s853, [#allocation12], 128, 128, 8
        $region56: #{tpu_custom_call.1} parent=11 // pred_fallthru
          _
        // Predicated region
        $region57: #{tpu_custom_call.1} parent=11 // pred_check
          %p859 = pneg %p436
        $region58: #{tpu_custom_call.1} parent=11 // pred_check_branch
          %861 = sbr.rel (%p859) target = $region60
        $region59: #{tpu_custom_call.1} parent=11 // pred_region
          _
        $region60: #{tpu_custom_call.1} parent=11 // pred_fallthru
          _
        // Predicated region
        $region61: #{tpu_custom_call.1} parent=11 // pred_check
          %p862 = pneg %p457
        $region62: #{tpu_custom_call.1} parent=11 // pred_check_branch
          %864 = sbr.rel (%p862) target = $region64
        $region63: #{tpu_custom_call.1} parent=11 // pred_region
          %866 = vsyncadd [#allocation15], 0
          %s867 = sshll.u32 %s33, 4
          %s868 = int_to_ptr.hbm [resolvable:$true] %s867
          %s869 = sshll.u32 [#allocation14], 4
          %s870 = int_to_ptr.vmem [resolvable:$true] %s869
          %875 = dma.hbm_to_vmem [thread:$0]  %s868, 512, %s870, [#allocation15], 128, 128, 8
        $region64: #{tpu_custom_call.1} parent=11 // pred_fallthru
          _
        // Predicated region
        $region65: #{tpu_custom_call.1} parent=11 // pred_check
          %p876 = pneg %p478
        $region66: #{tpu_custom_call.1} parent=11 // pred_check_branch
          %878 = sbr.rel (%p876) target = $region68
        $region67: #{tpu_custom_call.1} parent=11 // pred_region
          _
        $region68: #{tpu_custom_call.1} parent=11 // pred_fallthru
          _
        // Predicated region
        $region69: #{tpu_custom_call.1} parent=11 // pred_check
          %p879 = pneg %p499
        $region70: #{tpu_custom_call.1} parent=11 // pred_check_branch
          %881 = sbr.rel (%p879) target = $region72
        $region71: #{tpu_custom_call.1} parent=11 // pred_region
          %883 = vsyncadd [#allocation15], 0
          %s884 = sshll.u32 %s37, 4
          %s885 = int_to_ptr.hbm [resolvable:$true] %s884
          %s886 = sshll.u32 [#allocation16], 4
          %s887 = int_to_ptr.vmem [resolvable:$true] %s886
          %892 = dma.hbm_to_vmem [thread:$0]  %s885, 512, %s887, [#allocation15], 128, 128, 8
        $region72: #{tpu_custom_call.1} parent=11 // pred_fallthru
          _
        // Predicated region
        $region73: #{tpu_custom_call.1} parent=11 // pred_check
          %p893 = pneg %p520
        $region74: #{tpu_custom_call.1} parent=11 // pred_check_branch
          %895 = sbr.rel (%p893) target = $region76
        $region75: #{tpu_custom_call.1} parent=11 // pred_region
          _
        $region76: #{tpu_custom_call.1} parent=11 // pred_fallthru
          _
        // Predicated region
        $region77: #{tpu_custom_call.1} parent=11 // pred_check
          %p896 = pneg %p541
        $region78: #{tpu_custom_call.1} parent=11 // pred_check_branch
          %898 = sbr.rel (%p896) target = $region80
        $region79: #{tpu_custom_call.1} parent=11 // pred_region
          _
        $region80: #{tpu_custom_call.1} parent=11 // pred_fallthru
          _
        // Predicated region
        $region81: #{tpu_custom_call.1} parent=11 // pred_check
          %p899 = pneg %p562
        $region82: #{tpu_custom_call.1} parent=11 // pred_check_branch
          %901 = sbr.rel (%p899) target = $region84
        $region83: #{tpu_custom_call.1} parent=11 // pred_region
          _
        $region84: #{tpu_custom_call.1} parent=11 // pred_fallthru
          _
        // Predicated region
        $region85: #{tpu_custom_call.1} parent=11 // pred_check
          %p902 = pneg %p583
        $region86: #{tpu_custom_call.1} parent=11 // pred_check_branch
          %904 = sbr.rel (%p902) target = $region88
        $region87: #{tpu_custom_call.1} parent=11 // pred_region
          _
        $region88: #{tpu_custom_call.1} parent=11 // pred_fallthru
          _
        // Predicated region
        $region89: #{tpu_custom_call.1} parent=11 // pred_check
          %p905 = pneg %p604
        $region90: #{tpu_custom_call.1} parent=11 // pred_check_branch
          %907 = sbr.rel (%p905) target = $region92
        $region91: #{tpu_custom_call.1} parent=11 // pred_region
          _
        $region92: #{tpu_custom_call.1} parent=11 // pred_fallthru
          _
        // Predicated region
        $region93: #{tpu_custom_call.1} parent=11 // pred_check
          %p908 = pneg %p625
        $region94: #{tpu_custom_call.1} parent=11 // pred_check_branch
          %910 = sbr.rel (%p908) target = $region96
        $region95: #{tpu_custom_call.1} parent=11 // pred_region
          _
        $region96: #{tpu_custom_call.1} parent=11 // pred_fallthru
          _
        // Predicated region
        $region97: #{tpu_custom_call.1} parent=11 // pred_check
          %p911 = pneg %p646
        $region98: #{tpu_custom_call.1} parent=11 // pred_check_branch
          %913 = sbr.rel (%p911) target = $region100
        $region99: #{tpu_custom_call.1} parent=11 // pred_region
          _
        $region100: #{tpu_custom_call.1} parent=11 // pred_fallthru
          _
        // Predicated region
        $region101: #{tpu_custom_call.1} parent=11 // pred_check
          %p914 = pneg %p667
        $region102: #{tpu_custom_call.1} parent=11 // pred_check_branch
          %916 = sbr.rel (%p914) target = $region104
        $region103: #{tpu_custom_call.1} parent=11 // pred_region
          %918 = vsyncadd [#allocation18], 0
          %s919 = sshll.u32 %s53, 4
          %s920 = int_to_ptr.hbm [resolvable:$true] %s919
          %s921 = sshll.u32 [#allocation17], 4
          %s922 = int_to_ptr.vmem [resolvable:$true] %s921
          %927 = dma.hbm_to_vmem [thread:$0]  %s920, 512, %s922, [#allocation18], 128, 128, 8
        $region104: #{tpu_custom_call.1} parent=11 // pred_fallthru
          _
        // Predicated region
        $region105: #{tpu_custom_call.1} parent=11 // pred_check
          %p928 = pneg %p688
        $region106: #{tpu_custom_call.1} parent=11 // pred_check_branch
          %930 = sbr.rel (%p928) target = $region108
        $region107: #{tpu_custom_call.1} parent=11 // pred_region
          _
        $region108: #{tpu_custom_call.1} parent=11 // pred_fallthru
          _
        // Predicated region
        $region109: #{tpu_custom_call.1} parent=11 // pred_check
          %p931 = pneg %p709
        $region110: #{tpu_custom_call.1} parent=11 // pred_check_branch
          %933 = sbr.rel (%p931) target = $region112
        $region111: #{tpu_custom_call.1} parent=11 // pred_region
          _
        $region112: #{tpu_custom_call.1} parent=11 // pred_fallthru
          _
        // Predicated region
        $region113: #{tpu_custom_call.1} parent=11 // pred_check
          %p934 = pneg %p730
        $region114: #{tpu_custom_call.1} parent=11 // pred_check_branch
          %936 = sbr.rel (%p934) target = $region116
        $region115: #{tpu_custom_call.1} parent=11 // pred_region
          _
        $region116: #{tpu_custom_call.1} parent=11 // pred_fallthru
          _
      $region12: #{tpu_custom_call.1} parent=5 // pred_fallthru
        _
      %p937 = scmp.lt.s32.totalorder %s80, 2
      // Predicated region
      $region117: #{tpu_custom_call.1} parent=5 // pred_check
        %p938 = pneg %p937
      $region118: #{tpu_custom_call.1} parent=5 // pred_check_branch
        %940 = sbr.rel (%p938) target = $region120
      $region119: #{tpu_custom_call.1} parent=5 // pred_region
        // Predicated region
        $region121: #{tpu_custom_call.1} parent=119 // pred_check
          %p941 = pneg %p100
        $region122: #{tpu_custom_call.1} parent=119 // pred_check_branch
          %943 = sbr.rel (%p941) target = $region124
        $region123: #{tpu_custom_call.1} parent=119 // pred_region
          %s944 = sand.u32 %s90, 1
          %s945 = scalar_lea.sflag [#allocation3], %s944
          %s946 = sand.u32 %s90, 1
          %s947 = smul.addr %s946, 8
          %s948 = scalar_lea.vmem [#allocation2], %s947
          %950 = vsyncadd %s945, 0
          %s951 = smul.addr %s80, 8
          %s952 = scalar_lea.hbm %s1, %s951
          %s954 = sshll.u32 %s952, 4
          %s955 = int_to_ptr.hbm [resolvable:$true] %s954
          %s956 = sshll.u32 %s948, 4
          %s957 = int_to_ptr.vmem [resolvable:$true] %s956
          %959 = dma.hbm_to_vmem [thread:$0]  %s955, 128, %s957, %s945
        $region124: #{tpu_custom_call.1} parent=119 // pred_fallthru
          _
        // Predicated region
        $region125: #{tpu_custom_call.1} parent=119 // pred_check
          %p960 = pneg %p126
        $region126: #{tpu_custom_call.1} parent=119 // pred_check_branch
          %962 = sbr.rel (%p960) target = $region128
        $region127: #{tpu_custom_call.1} parent=119 // pred_region
          %p963 = scmp.lt.s32.totalorder %s80, 1
          %s964 = scalar_select %p963, %s80, 1
          %s965 = smul.addr %s964, 2
          %s966 = smul.addr %s965, 8
          %s967 = scalar_lea.vmem %s3, %s966
        $region128: #{tpu_custom_call.1} parent=119 // pred_fallthru
          _
        // Predicated region
        $region129: #{tpu_custom_call.1} parent=119 // pred_check
          %p968 = pneg %p152
        $region130: #{tpu_custom_call.1} parent=119 // pred_check_branch
          %970 = sbr.rel (%p968) target = $region132
        $region131: #{tpu_custom_call.1} parent=119 // pred_region
          %s971 = sand.u32 %s80, 1
          %s972 = scalar_lea.sflag [#allocation6], %s971
          %s973 = sand.u32 %s142, 1
          %s974 = smul.addr %s973, 8
          %s975 = scalar_lea.vmem [#allocation5], %s974
          %977 = vsyncadd %s972, 0
          %s978 = smul.addr %s80, 8
          %s979 = scalar_lea.hbm %s5, %s978
          %s981 = sshll.u32 %s979, 4
          %s982 = int_to_ptr.hbm [resolvable:$true] %s981
          %s983 = sshll.u32 %s975, 4
          %s984 = int_to_ptr.vmem [resolvable:$true] %s983
          %986 = dma.hbm_to_vmem [thread:$0]  %s982, 128, %s984, %s972
        $region132: #{tpu_custom_call.1} parent=119 // pred_fallthru
          _
        // Predicated region
        $region133: #{tpu_custom_call.1} parent=119 // pred_check
          %p987 = pneg %p178
        $region134: #{tpu_custom_call.1} parent=119 // pred_check_branch
          %989 = sbr.rel (%p987) target = $region136
        $region135: #{tpu_custom_call.1} parent=119 // pred_region
          %p990 = scmp.lt.s32.totalorder %s80, 1
          %s991 = scalar_select %p990, %s80, 1
          %s992 = smul.addr %s991, 2
          %s993 = smul.addr %s992, 8
          %s994 = scalar_lea.vmem %s7, %s993
        $region136: #{tpu_custom_call.1} parent=119 // pred_fallthru
          _
      $region120: #{tpu_custom_call.1} parent=5 // pred_fallthru
        _
      %p995 = scmp.le.s32.totalorder 1, %s80
      %p996 = scmp.lt.s32.totalorder %s80, 3
      %p997 = pnand %p995, %p996
      %p998 = pneg %p997
      // Predicated region
      $region137: #{tpu_custom_call.1} parent=5 // pred_check
        _
      $region138: #{tpu_custom_call.1} parent=5 // pred_check_branch
        %1000 = sbr.rel (%p997) target = $region140
      $region139: #{tpu_custom_call.1} parent=5 // pred_region
        %s1001 = ssub.s32 %s80, 1
        %s1002 = sand.u32 %s93, 1
        %s1003 = scalar_lea.sflag [#allocation3], %s1002
        %s1004 = sand.u32 %s93, 1
        %s1005 = smul.addr %s1004, 8
        %s1006 = scalar_lea.vmem [#allocation2], %s1005
        // Predicated region
        $region141: #{tpu_custom_call.1} parent=139 // pred_check
          %p1007 = pneg %p106
        $region142: #{tpu_custom_call.1} parent=139 // pred_check_branch
          %1009 = sbr.rel (%p1007) target = $region144
        $region143: #{tpu_custom_call.1} parent=139 // pred_region
          %1011 = dma.done %s1003, 128
        $region144: #{tpu_custom_call.1} parent=139 // pred_fallthru
          _
        %s1012 = sand.u32 %s85, 1
        %s1013 = scalar_lea.sflag [#allocation6], %s1012
        %s1014 = sand.u32 %s145, 1
        %s1015 = smul.addr %s1014, 8
        %s1016 = scalar_lea.vmem [#allocation5], %s1015
        // Predicated region
        $region145: #{tpu_custom_call.1} parent=139 // pred_check
          %p1017 = pneg %p158
        $region146: #{tpu_custom_call.1} parent=139 // pred_check_branch
          %1019 = sbr.rel (%p1017) target = $region148
        $region147: #{tpu_custom_call.1} parent=139 // pred_region
          %1021 = dma.done %s1013, 128
        $region148: #{tpu_custom_call.1} parent=139 // pred_fallthru
          _
        // Predicated region
        $region149: #{tpu_custom_call.1} parent=139 // pred_check
          %p1022 = pneg %p247
        $region150: #{tpu_custom_call.1} parent=139 // pred_check_branch
          %1024 = sbr.rel (%p1022) target = $region152
        $region151: #{tpu_custom_call.1} parent=139 // pred_region
          %1026 = dma.done [#allocation6], 512
        $region152: #{tpu_custom_call.1} parent=139 // pred_fallthru
          _
        // Predicated region
        $region153: #{tpu_custom_call.1} parent=139 // pred_check
          %p1027 = pneg %p289
        $region154: #{tpu_custom_call.1} parent=139 // pred_check_branch
          %1029 = sbr.rel (%p1027) target = $region156
        $region155: #{tpu_custom_call.1} parent=139 // pred_region
          %1031 = dma.done [#allocation9], 512
        $region156: #{tpu_custom_call.1} parent=139 // pred_fallthru
          _
        // Predicated region
        $region157: #{tpu_custom_call.1} parent=139 // pred_check
          %p1032 = pneg %p331
        $region158: #{tpu_custom_call.1} parent=139 // pred_check_branch
          %1034 = sbr.rel (%p1032) target = $region160
        $region159: #{tpu_custom_call.1} parent=139 // pred_region
          %1036 = dma.done [#allocation9], 512
        $region160: #{tpu_custom_call.1} parent=139 // pred_fallthru
          _
        // Predicated region
        $region161: #{tpu_custom_call.1} parent=139 // pred_check
          %p1037 = pneg %p373
        $region162: #{tpu_custom_call.1} parent=139 // pred_check_branch
          %1039 = sbr.rel (%p1037) target = $region164
        $region163: #{tpu_custom_call.1} parent=139 // pred_region
          %1041 = dma.done [#allocation12], 512
        $region164: #{tpu_custom_call.1} parent=139 // pred_fallthru
          _
        // Predicated region
        $region165: #{tpu_custom_call.1} parent=139 // pred_check
          %p1042 = pneg %p415
        $region166: #{tpu_custom_call.1} parent=139 // pred_check_branch
          %1044 = sbr.rel (%p1042) target = $region168
        $region167: #{tpu_custom_call.1} parent=139 // pred_region
          %1046 = dma.done [#allocation12], 512
        $region168: #{tpu_custom_call.1} parent=139 // pred_fallthru
          _
        // Predicated region
        $region169: #{tpu_custom_call.1} parent=139 // pred_check
          %p1047 = pneg %p457
        $region170: #{tpu_custom_call.1} parent=139 // pred_check_branch
          %1049 = sbr.rel (%p1047) target = $region172
        $region171: #{tpu_custom_call.1} parent=139 // pred_region
          %1051 = dma.done [#allocation15], 512
        $region172: #{tpu_custom_call.1} parent=139 // pred_fallthru
          _
        // Predicated region
        $region173: #{tpu_custom_call.1} parent=139 // pred_check
          %p1052 = pneg %p499
        $region174: #{tpu_custom_call.1} parent=139 // pred_check_branch
          %1054 = sbr.rel (%p1052) target = $region176
        $region175: #{tpu_custom_call.1} parent=139 // pred_region
          %1056 = dma.done [#allocation15], 512
        $region176: #{tpu_custom_call.1} parent=139 // pred_fallthru
          _
        // Predicated region
        $region177: #{tpu_custom_call.1} parent=139 // pred_check
          %p1057 = pneg %p667
        $region178: #{tpu_custom_call.1} parent=139 // pred_check_branch
          %1059 = sbr.rel (%p1057) target = $region180
        $region179: #{tpu_custom_call.1} parent=139 // pred_region
          %1061 = dma.done [#allocation18], 512
        $region180: #{tpu_custom_call.1} parent=139 // pred_fallthru
          _
        %s1062 = sand.u32 %s93, 1
        %s1063 = scalar_lea.sflag [#allocation3], %s1062
        %s1064 = sand.u32 %s93, 1
        %s1065 = smul.addr %s1064, 8
        %s1066 = scalar_lea.vmem [#allocation2], %s1065
        %p1067 = pneg %p106
        %p1068 = pneg %p103
        %p1069 = scmp.lt.s32.totalorder %s85, 1
        %s1070 = scalar_select %p1069, %s85, 1
        %s1071 = smul.addr %s1070, 2
        %s1072 = smul.addr %s1071, 8
        %s1073 = scalar_lea.vmem %s3, %s1072
        %p1074 = pneg %p132
        %p1075 = pneg %p129
        %s1076 = sand.u32 %s85, 1
        %s1077 = scalar_lea.sflag [#allocation6], %s1076
        %s1078 = sand.u32 %s145, 1
        %s1079 = smul.addr %s1078, 8
        %s1080 = scalar_lea.vmem [#allocation5], %s1079
        %p1081 = pneg %p158
        %p1082 = pneg %p155
        %p1083 = scmp.lt.s32.totalorder %s85, 1
        %s1084 = scalar_select %p1083, %s85, 1
        %s1085 = smul.addr %s1084, 2
        %s1086 = smul.addr %s1085, 8
        %s1087 = scalar_lea.vmem %s7, %s1086
        %p1088 = pneg %p184
        %p1089 = pneg %p181
        %p1090 = pneg %p205
        %p1091 = pneg %p202
        %p1092 = pneg %p226
        %p1093 = pneg %p223
        %p1094 = pneg %p247
        %p1095 = pneg %p244
        %p1096 = pneg %p268
        %p1097 = pneg %p265
        %p1098 = pneg %p289
        %p1099 = pneg %p286
        %p1100 = pneg %p310
        %p1101 = pneg %p307
        %p1102 = pneg %p331
        %p1103 = pneg %p328
        %p1104 = pneg %p352
        %p1105 = pneg %p349
        %p1106 = pneg %p373
        %p1107 = pneg %p370
        %p1108 = pneg %p394
        %p1109 = pneg %p391
        %p1110 = pneg %p415
        %p1111 = pneg %p412
        %p1112 = pneg %p436
        %p1113 = pneg %p433
        %p1114 = pneg %p457
        %p1115 = pneg %p454
        %p1116 = pneg %p478
        %p1117 = pneg %p475
        %p1118 = pneg %p499
        %p1119 = pneg %p496
        %p1120 = pneg %p520
        %p1121 = pneg %p517
        %p1122 = pneg %p541
        %p1123 = pneg %p538
        %p1124 = pneg %p562
        %p1125 = pneg %p559
        %p1126 = pneg %p583
        %p1127 = pneg %p580
        %p1128 = pneg %p604
        %p1129 = pneg %p601
        %p1130 = pneg %p625
        %p1131 = pneg %p622
        %p1132 = pneg %p646
        %p1133 = pneg %p643
        %p1134 = pneg %p667
        %p1135 = pneg %p664
        %p1136 = pneg %p688
        %p1137 = pneg %p685
        %p1138 = pneg %p709
        %p1139 = pneg %p706
        %p1140 = pneg %p730
        %p1141 = pneg %p727
        %p1142 = pneg %p756
        %p1143 = pneg %p753
        %s1144 = sand.u32 %s743, 1
        %s1145 = scalar_lea.sflag [#allocation4], %s1144
        %s1146 = sand.u32 %s743, 1
        %s1147 = smul.addr %s1146, 8
        %s1148 = scalar_lea.vmem [#allocation19], %s1147
        %p1149 = scmp.lt.s32.totalorder %s85, 1
        %s1150 = scalar_select %p1149, %s85, 1
        %s1151 = smul.addr %s1150, 2
        %s1152 = smul.addr %s1151, 8
        %s1153 = scalar_lea.vmem %s3, %s1152
        %p1154 = scmp.lt.s32.totalorder %s85, 1
        %s1155 = scalar_select %p1154, %s85, 1
        %s1156 = smul.addr %s1155, 2
        %s1157 = smul.addr %s1156, 8
        %s1158 = scalar_lea.vmem %s7, %s1157
        %v1159 = vld [vmem:[%s1006] sm:$0xff]
        %v1160 = vld [vmem:[%s1153] sm:$0xff]
        %v1161 = vld [vmem:[%s1153 + $0x8] sm:$0xff]
        %v1162 = vld [vmem:[%s1016] sm:$0xff]
        %v1163 = vld [vmem:[%s1158] sm:$0xff]
        %v1164 = vld [vmem:[%s1158 + $0x8] sm:$0xff]
        %v1165 = vld [vmem:[%s9] sm:$0xff]
        %v1166 = vld [vmem:[%s9 + $0x8] sm:$0xff]
        %v1167 = vld [vmem:[%s9 + $0x10] sm:$0xff]
        %v1168 = vld [vmem:[%s9 + $0x18] sm:$0xff]
        %v1169 = vld [vmem:[%s11] sm:$0x1]
        %v1170 = vld [vmem:[#allocation7] sm:$0xff]
        %v1171 = vld [vmem:[#allocation7 + $0x8] sm:$0xff]
        %v1172 = vld [vmem:[#allocation7 + $0x10] sm:$0xff]
        %v1173 = vld [vmem:[#allocation7 + $0x18] sm:$0xff]
        %v1174 = vld [vmem:[%s15] sm:$0x1]
        %v1175 = vld [vmem:[#allocation8] sm:$0xff]
        %v1176 = vld [vmem:[#allocation8 + $0x8] sm:$0xff]
        %v1177 = vld [vmem:[#allocation8 + $0x10] sm:$0xff]
        %v1178 = vld [vmem:[#allocation8 + $0x18] sm:$0xff]
        %v1179 = vld [vmem:[%s19] sm:$0x1]
        %v1180 = vld [vmem:[#allocation10] sm:$0xff]
        %v1181 = vld [vmem:[#allocation10 + $0x8] sm:$0xff]
        %v1182 = vld [vmem:[#allocation10 + $0x10] sm:$0xff]
        %v1183 = vld [vmem:[#allocation10 + $0x18] sm:$0xff]
        %v1184 = vld [vmem:[%s23] sm:$0x1]
        %v1185 = vld [vmem:[#allocation11] sm:$0xff]
        %v1186 = vld [vmem:[#allocation11 + $0x8] sm:$0xff]
        %v1187 = vld [vmem:[#allocation11 + $0x10] sm:$0xff]
        %v1188 = vld [vmem:[#allocation11 + $0x18] sm:$0xff]
        %v1189 = vld [vmem:[%s27] sm:$0x1]
        %v1190 = vld [vmem:[#allocation13] sm:$0xff]
        %v1191 = vld [vmem:[#allocation13 + $0x8] sm:$0xff]
        %v1192 = vld [vmem:[#allocation13 + $0x10] sm:$0xff]
        %v1193 = vld [vmem:[#allocation13 + $0x18] sm:$0xff]
        %v1194 = vld [vmem:[%s31] sm:$0x1]
        %v1195 = vld [vmem:[#allocation14] sm:$0xff]
        %v1196 = vld [vmem:[#allocation14 + $0x8] sm:$0xff]
        %v1197 = vld [vmem:[#allocation14 + $0x10] sm:$0xff]
        %v1198 = vld [vmem:[#allocation14 + $0x18] sm:$0xff]
        %v1199 = vld [vmem:[%s35] sm:$0x1]
        %v1200 = vld [vmem:[#allocation16] sm:$0xff]
        %v1201 = vld [vmem:[#allocation16 + $0x8] sm:$0xff]
        %v1202 = vld [vmem:[#allocation16 + $0x10] sm:$0xff]
        %v1203 = vld [vmem:[#allocation16 + $0x18] sm:$0xff]
        %v1204 = vld [vmem:[%s39] sm:$0x1]
        %v1205 = vld [vmem:[%s41] sm:$0x1]
        %v1206 = vld [vmem:[%s43] sm:$0x1]
        %vm1207 = vcmask 261120
        %v1208 = vsel %vm1207, %v1159, 0.0
        %1209 = vadd.xlane.f32.xlu0 %v1208
        %v1210 = vpop.xlane.xlu0 %1209
        %v1211 = vrcp.pop 32.0
        %v1212 = vmul.f32 32.0, %v1211
        %v1213 = vsub.f32 1.0, %v1212
        %v1214 = vmul.f32 %v1211, %v1213
        %v1215 = vadd.f32 %v1211, %v1214
        %vm1216 = vweird.f32 %v1211
        %v1217 = vsel %vm1216, %v1211, %v1215
        %v1218 = vmul.f32 %v1210, %v1217
        %v1219 = vsub.f32 %v1159, %v1218
        %v1220 = vmul.f32 %v1219, %v1219
        %v1221 = vsel %vm1207, %v1220, 0.0
        %1222 = vadd.xlane.f32.xlu0 %v1221
        %v1223 = vpop.xlane.xlu0 %1222
        %v1224 = vmul.f32 %v1223, %v1217
        %v1225 = vadd.f32 %v1224, 1e-05
        %v1226 = vrsqrt.pop %v1225
        %v1227 = vmul.f32 %v1226, %v1225
        %v1228 = vmul.f32 %v1227, %v1226
        %v1229 = vmul.f32 0.5, %v1228
        %v1230 = vsub.f32 1.5, %v1229
        %v1231 = vmul.f32 %v1226, %v1230
        %vm1232 = vweird.f32 %v1225
        %vm1233 = vweird.f32 %v1226
        %vm1234 = vmor %vm1232, %vm1233
        %v1235 = vsel %vm1234, %v1226, %v1231
        %v1236 = vmul.f32 %v1219, %v1235
        %v1238 = vperm.slane %v1205, 0
        %v1240 = vmul.f32 %v1236, %v1238
        %v1242 = vperm.slane %v1206, 0
        %v1244 = vadd.f32 %v1240, %v1242
        %v1245 = vadd.f32 %v1244, %v1162
        %v1247 = vperm.slane %v1169, 0
        %v1250 = vsel %vm1207, %v1245, 0
        %1252 = vmatpush.msra.mxu0 0.0
        %1253 = vmatpush.msra.mxu0 0.0
        %1254 = vmatpush.msra.mxu0 0.0
        %1255 = vmatpush.msra.mxu0 0.0
        %1256 = vmatpush.msra.mxu0 0.0
        %1257 = vmatpush.msra.mxu0 0.0
        %1258 = vmatpush.msra.mxu0 0.0
        %1259 = vmatpush.msra.mxu0 0.0
        %1260 = vmatpush.msra.mxu0 0.0
        %1261 = vmatpush.msra.mxu0 0.0
        %1262 = vmatpush.msra.mxu0 0.0
        %1263 = vmatpush.msra.mxu0 0.0
        %1264 = vmatpush.msra.mxu0 %v1168
        %1265 = vmatpush.msra.mxu0 %v1167
        %1266 = vmatpush.msra.mxu0 %v1166
        %1267 = vmatpush.msra.mxu0 %v1165
        %1268 = vmatmul.f32.gmra.mxu0 %v1250
        %v1269 = vpop.f32.mrf.mxu0
        %v1270 = vadd.f32 %v1247, %v1269
        %1271 = vdwg.mxu0
        %v1273 = vperm.slane %v1174, 0
        %1275 = vmatpush.msra.mxu0 0.0
        %1276 = vmatpush.msra.mxu0 0.0
        %1277 = vmatpush.msra.mxu0 0.0
        %1278 = vmatpush.msra.mxu0 0.0
        %1279 = vmatpush.msra.mxu0 0.0
        %1280 = vmatpush.msra.mxu0 0.0
        %1281 = vmatpush.msra.mxu0 0.0
        %1282 = vmatpush.msra.mxu0 0.0
        %1283 = vmatpush.msra.mxu0 0.0
        %1284 = vmatpush.msra.mxu0 0.0
        %1285 = vmatpush.msra.mxu0 0.0
        %1286 = vmatpush.msra.mxu0 0.0
        %1287 = vmatpush.msra.mxu0 %v1173
        %1288 = vmatpush.msra.mxu0 %v1172
        %1289 = vmatpush.msra.mxu0 %v1171
        %1290 = vmatpush.msra.mxu0 %v1170
        %1291 = vmatmul.f32.gmra.mxu0 %v1250
        %v1292 = vpop.f32.mrf.mxu0
        %v1293 = vadd.f32 %v1273, %v1292
        %1294 = vdwg.mxu0
        %v1296 = vperm.slane %v1179, 0
        %v1299 = vsel %vm1207, %v1244, 0
        %1301 = vmatpush.msra.mxu0 0.0
        %1302 = vmatpush.msra.mxu0 0.0
        %1303 = vmatpush.msra.mxu0 0.0
        %1304 = vmatpush.msra.mxu0 0.0
        %1305 = vmatpush.msra.mxu0 0.0
        %1306 = vmatpush.msra.mxu0 0.0
        %1307 = vmatpush.msra.mxu0 0.0
        %1308 = vmatpush.msra.mxu0 0.0
        %1309 = vmatpush.msra.mxu0 0.0
        %1310 = vmatpush.msra.mxu0 0.0
        %1311 = vmatpush.msra.mxu0 0.0
        %1312 = vmatpush.msra.mxu0 0.0
        %1313 = vmatpush.msra.mxu0 %v1178
        %1314 = vmatpush.msra.mxu0 %v1177
        %1315 = vmatpush.msra.mxu0 %v1176
        %1316 = vmatpush.msra.mxu0 %v1175
        %1317 = vmatmul.f32.gmra.mxu0 %v1299
        %v1318 = vpop.f32.mrf.mxu0
        %v1319 = vadd.f32 %v1296, %v1318
        %1320 = vdwg.mxu0
        %1322 = vrot.lane.b32.xlu0 %v1270, 120
        %v1323 = vpop.permute.xlu0 %1322
        %1325 = vrot.lane.b32.xlu0 %v1270, 112
        %v1326 = vpop.permute.xlu0 %1325
        %1328 = vrot.lane.b32.xlu0 %v1270, 104
        %v1329 = vpop.permute.xlu0 %1328
        %v1331 = vrot.slane %v1326, 4
        %vm1332 = vcmask 1047556
        %v1333 = vsel %vm1332, %v1331, %v1270
        %v1334 = vrot.slane %v1270, 4
        %v1335 = vsel %vm1332, %v1326, %v1334
        %v1337 = vunpack.c.l.s4 1983009808
        %v1338 = vunpack.c.0.s8 %v1337
        %v1339 = vperm.slane %v1333, %v1338
        %v1341 = vunpack.c.l.s4 1983009808
        %v1342 = vunpack.c.0.s8 %v1341
        %v1343 = vperm.slane %v1335, %v1342
        %v1344 = vrot.slane %v1329, 4
        %v1345 = vsel %vm1332, %v1344, %v1323
        %v1346 = vrot.slane %v1323, 4
        %v1347 = vsel %vm1332, %v1329, %v1346
        %v1349 = vunpack.c.l.s4 1983009808
        %v1350 = vunpack.c.0.s8 %v1349
        %v1351 = vperm.slane %v1345, %v1350
        %v1353 = vunpack.c.l.s4 1983009808
        %v1354 = vunpack.c.0.s8 %v1353
        %v1355 = vperm.slane %v1347, %v1354
        %v1356 = vrot.slane %v1351, 4
        %v1357 = vsel %vm1332, %v1356, %v1339
        %v1358 = vrot.slane %v1339, 4
        %v1359 = vsel %vm1332, %v1351, %v1358
        %v1361 = vunpack.c.l.s4 1934713408
        %v1362 = vunpack.c.0.s8 %v1361
        %v1363 = vperm.slane %v1357, %v1362
        %v1365 = vunpack.c.l.s4 1934713408
        %v1366 = vunpack.c.0.s8 %v1365
        %v1367 = vperm.slane %v1359, %v1366
        %v1368 = vrot.slane %v1355, 4
        %v1369 = vsel %vm1332, %v1368, %v1343
        %v1370 = vrot.slane %v1343, 4
        %v1371 = vsel %vm1332, %v1355, %v1370
        %v1373 = vunpack.c.l.s4 1934713408
        %v1374 = vunpack.c.0.s8 %v1373
        %v1375 = vperm.slane %v1369, %v1374
        %v1377 = vunpack.c.l.s4 1934713408
        %v1378 = vunpack.c.0.s8 %v1377
        %v1379 = vperm.slane %v1371, %v1378
        %v1380 = vrot.slane %v1363, 4
        %v1381 = vsel %vm1332, 0.0, %v1380
        %v1382 = vrot.slane %v1367, 4
        %v1383 = vsel %vm1332, 0.0, %v1382
        %v1384 = vrot.slane %v1375, 4
        %v1385 = vsel %vm1332, 0.0, %v1384
        %v1386 = vrot.slane %v1379, 4
        %v1387 = vsel %vm1332, 0.0, %v1386
        %v1388 = vsel %vm1332, %v1382, %v1363
        %v1390 = vunpack.c.l.s4 1983009808
        %v1391 = vunpack.c.0.s8 %v1390
        %v1392 = vperm.slane %v1388, %v1391
        %v1393 = vrot.slane %v1383, 4
        %v1394 = vsel %vm1332, %v1393, %v1381
        %v1396 = vunpack.c.l.s4 1983009808
        %v1397 = vunpack.c.0.s8 %v1396
        %v1398 = vperm.slane %v1394, %v1397
        %v1399 = vsel %vm1332, %v1386, %v1375
        %v1401 = vunpack.c.l.s4 1983009808
        %v1402 = vunpack.c.0.s8 %v1401
        %v1403 = vperm.slane %v1399, %v1402
        %v1404 = vrot.slane %v1387, 4
        %v1405 = vsel %vm1332, %v1404, %v1385
        %v1407 = vunpack.c.l.s4 1983009808
        %v1408 = vunpack.c.0.s8 %v1407
        %v1409 = vperm.slane %v1405, %v1408
        %v1410 = vrot.slane %v1398, 4
        %v1411 = vsel %vm1332, %v1410, %v1392
        %v1412 = vrot.slane %v1392, 4
        %v1413 = vsel %vm1332, %v1398, %v1412
        %v1415 = vunpack.c.l.s4 1934713408
        %v1416 = vunpack.c.0.s8 %v1415
        %v1417 = vperm.slane %v1411, %v1416
        %v1419 = vunpack.c.l.s4 1934713408
        %v1420 = vunpack.c.0.s8 %v1419
        %v1421 = vperm.slane %v1413, %v1420
        %v1422 = vrot.slane %v1409, 4
        %v1423 = vsel %vm1332, %v1422, %v1403
        %v1424 = vrot.slane %v1403, 4
        %v1425 = vsel %vm1332, %v1409, %v1424
        %v1427 = vunpack.c.l.s4 1934713408
        %v1428 = vunpack.c.0.s8 %v1427
        %v1429 = vperm.slane %v1423, %v1428
        %v1431 = vunpack.c.l.s4 1934713408
        %v1432 = vunpack.c.0.s8 %v1431
        %v1433 = vperm.slane %v1425, %v1432
        %v1434 = vrot.slane %v1429, 4
        %v1435 = vsel %vm1332, %v1434, %v1417
        %v1436 = vrot.slane %v1417, 4
        %v1437 = vsel %vm1332, %v1429, %v1436
        %v1438 = vrot.slane %v1433, 4
        %v1439 = vsel %vm1332, %v1438, %v1421
        %v1440 = vrot.slane %v1421, 4
        %v1441 = vsel %vm1332, %v1433, %v1440
        %1443 = vrot.lane.b32.xlu0 %v1293, 120
        %v1444 = vpop.permute.xlu0 %1443
        %1446 = vrot.lane.b32.xlu0 %v1293, 112
        %v1447 = vpop.permute.xlu0 %1446
        %1449 = vrot.lane.b32.xlu0 %v1293, 104
        %v1450 = vpop.permute.xlu0 %1449
        %v1452 = vrot.slane %v1447, 4
        %v1453 = vsel %vm1332, %v1452, %v1293
        %v1454 = vrot.slane %v1293, 4
        %v1455 = vsel %vm1332, %v1447, %v1454
        %v1457 = vunpack.c.l.s4 1983009808
        %v1458 = vunpack.c.0.s8 %v1457
        %v1459 = vperm.slane %v1453, %v1458
        %v1461 = vunpack.c.l.s4 1983009808
        %v1462 = vunpack.c.0.s8 %v1461
        %v1463 = vperm.slane %v1455, %v1462
        %v1464 = vrot.slane %v1450, 4
        %v1465 = vsel %vm1332, %v1464, %v1444
        %v1466 = vrot.slane %v1444, 4
        %v1467 = vsel %vm1332, %v1450, %v1466
        %v1469 = vunpack.c.l.s4 1983009808
        %v1470 = vunpack.c.0.s8 %v1469
        %v1471 = vperm.slane %v1465, %v1470
        %v1473 = vunpack.c.l.s4 1983009808
        %v1474 = vunpack.c.0.s8 %v1473
        %v1475 = vperm.slane %v1467, %v1474
        %v1476 = vrot.slane %v1471, 4
        %v1477 = vsel %vm1332, %v1476, %v1459
        %v1478 = vrot.slane %v1459, 4
        %v1479 = vsel %vm1332, %v1471, %v1478
        %v1481 = vunpack.c.l.s4 1934713408
        %v1482 = vunpack.c.0.s8 %v1481
        %v1483 = vperm.slane %v1477, %v1482
        %v1485 = vunpack.c.l.s4 1934713408
        %v1486 = vunpack.c.0.s8 %v1485
        %v1487 = vperm.slane %v1479, %v1486
        %v1488 = vrot.slane %v1475, 4
        %v1489 = vsel %vm1332, %v1488, %v1463
        %v1490 = vrot.slane %v1463, 4
        %v1491 = vsel %vm1332, %v1475, %v1490
        %v1493 = vunpack.c.l.s4 1934713408
        %v1494 = vunpack.c.0.s8 %v1493
        %v1495 = vperm.slane %v1489, %v1494
        %v1497 = vunpack.c.l.s4 1934713408
        %v1498 = vunpack.c.0.s8 %v1497
        %v1499 = vperm.slane %v1491, %v1498
        %v1500 = vrot.slane %v1483, 4
        %v1501 = vsel %vm1332, 0.0, %v1500
        %v1502 = vrot.slane %v1487, 4
        %v1503 = vsel %vm1332, 0.0, %v1502
        %v1504 = vrot.slane %v1495, 4
        %v1505 = vsel %vm1332, 0.0, %v1504
        %v1506 = vrot.slane %v1499, 4
        %v1507 = vsel %vm1332, 0.0, %v1506
        %v1508 = vsel %vm1332, %v1502, %v1483
        %v1510 = vunpack.c.l.s4 1983009808
        %v1511 = vunpack.c.0.s8 %v1510
        %v1512 = vperm.slane %v1508, %v1511
        %v1513 = vrot.slane %v1503, 4
        %v1514 = vsel %vm1332, %v1513, %v1501
        %v1516 = vunpack.c.l.s4 1983009808
        %v1517 = vunpack.c.0.s8 %v1516
        %v1518 = vperm.slane %v1514, %v1517
        %v1519 = vsel %vm1332, %v1506, %v1495
        %v1521 = vunpack.c.l.s4 1983009808
        %v1522 = vunpack.c.0.s8 %v1521
        %v1523 = vperm.slane %v1519, %v1522
        %v1524 = vrot.slane %v1507, 4
        %v1525 = vsel %vm1332, %v1524, %v1505
        %v1527 = vunpack.c.l.s4 1983009808
        %v1528 = vunpack.c.0.s8 %v1527
        %v1529 = vperm.slane %v1525, %v1528
        %v1530 = vrot.slane %v1518, 4
        %v1531 = vsel %vm1332, %v1530, %v1512
        %v1532 = vrot.slane %v1512, 4
        %v1533 = vsel %vm1332, %v1518, %v1532
        %v1535 = vunpack.c.l.s4 1934713408
        %v1536 = vunpack.c.0.s8 %v1535
        %v1537 = vperm.slane %v1531, %v1536
        %v1539 = vunpack.c.l.s4 1934713408
        %v1540 = vunpack.c.0.s8 %v1539
        %v1541 = vperm.slane %v1533, %v1540
        %v1542 = vrot.slane %v1529, 4
        %v1543 = vsel %vm1332, %v1542, %v1523
        %v1544 = vrot.slane %v1523, 4
        %v1545 = vsel %vm1332, %v1529, %v1544
        %v1547 = vunpack.c.l.s4 1934713408
        %v1548 = vunpack.c.0.s8 %v1547
        %v1549 = vperm.slane %v1543, %v1548
        %v1551 = vunpack.c.l.s4 1934713408
        %v1552 = vunpack.c.0.s8 %v1551
        %v1553 = vperm.slane %v1545, %v1552
        %v1554 = vrot.slane %v1549, 4
        %v1555 = vsel %vm1332, %v1554, %v1537
        %v1556 = vrot.slane %v1537, 4
        %v1557 = vsel %vm1332, %v1549, %v1556
        %v1558 = vrot.slane %v1553, 4
        %v1559 = vsel %vm1332, %v1558, %v1541
        %v1560 = vrot.slane %v1541, 4
        %v1561 = vsel %vm1332, %v1553, %v1560
        %1563 = vrot.lane.b32.xlu0 %v1319, 120
        %v1564 = vpop.permute.xlu0 %1563
        %1566 = vrot.lane.b32.xlu0 %v1319, 112
        %v1567 = vpop.permute.xlu0 %1566
        %1569 = vrot.lane.b32.xlu0 %v1319, 104
        %v1570 = vpop.permute.xlu0 %1569
        %v1572 = vrot.slane %v1567, 4
        %v1573 = vsel %vm1332, %v1572, %v1319
        %v1574 = vrot.slane %v1319, 4
        %v1575 = vsel %vm1332, %v1567, %v1574
        %v1577 = vunpack.c.l.s4 1983009808
        %v1578 = vunpack.c.0.s8 %v1577
        %v1579 = vperm.slane %v1573, %v1578
        %v1581 = vunpack.c.l.s4 1983009808
        %v1582 = vunpack.c.0.s8 %v1581
        %v1583 = vperm.slane %v1575, %v1582
        %v1584 = vrot.slane %v1570, 4
        %v1585 = vsel %vm1332, %v1584, %v1564
        %v1586 = vrot.slane %v1564, 4
        %v1587 = vsel %vm1332, %v1570, %v1586
        %v1589 = vunpack.c.l.s4 1983009808
        %v1590 = vunpack.c.0.s8 %v1589
        %v1591 = vperm.slane %v1585, %v1590
        %v1593 = vunpack.c.l.s4 1983009808
        %v1594 = vunpack.c.0.s8 %v1593
        %v1595 = vperm.slane %v1587, %v1594
        %v1596 = vrot.slane %v1591, 4
        %v1597 = vsel %vm1332, %v1596, %v1579
        %v1598 = vrot.slane %v1579, 4
        %v1599 = vsel %vm1332, %v1591, %v1598
        %v1601 = vunpack.c.l.s4 1934713408
        %v1602 = vunpack.c.0.s8 %v1601
        %v1603 = vperm.slane %v1597, %v1602
        %v1605 = vunpack.c.l.s4 1934713408
        %v1606 = vunpack.c.0.s8 %v1605
        %v1607 = vperm.slane %v1599, %v1606
        %v1608 = vrot.slane %v1595, 4
        %v1609 = vsel %vm1332, %v1608, %v1583
        %v1610 = vrot.slane %v1583, 4
        %v1611 = vsel %vm1332, %v1595, %v1610
        %v1613 = vunpack.c.l.s4 1934713408
        %v1614 = vunpack.c.0.s8 %v1613
        %v1615 = vperm.slane %v1609, %v1614
        %v1617 = vunpack.c.l.s4 1934713408
        %v1618 = vunpack.c.0.s8 %v1617
        %v1619 = vperm.slane %v1611, %v1618
        %v1620 = vrot.slane %v1603, 4
        %v1621 = vsel %vm1332, 0.0, %v1620
        %v1622 = vrot.slane %v1607, 4
        %v1623 = vsel %vm1332, 0.0, %v1622
        %v1624 = vrot.slane %v1615, 4
        %v1625 = vsel %vm1332, 0.0, %v1624
        %v1626 = vrot.slane %v1619, 4
        %v1627 = vsel %vm1332, 0.0, %v1626
        %v1628 = vsel %vm1332, %v1622, %v1603
        %v1630 = vunpack.c.l.s4 1983009808
        %v1631 = vunpack.c.0.s8 %v1630
        %v1632 = vperm.slane %v1628, %v1631
        %v1633 = vrot.slane %v1623, 4
        %v1634 = vsel %vm1332, %v1633, %v1621
        %v1636 = vunpack.c.l.s4 1983009808
        %v1637 = vunpack.c.0.s8 %v1636
        %v1638 = vperm.slane %v1634, %v1637
        %v1639 = vsel %vm1332, %v1626, %v1615
        %v1641 = vunpack.c.l.s4 1983009808
        %v1642 = vunpack.c.0.s8 %v1641
        %v1643 = vperm.slane %v1639, %v1642
        %v1644 = vrot.slane %v1627, 4
        %v1645 = vsel %vm1332, %v1644, %v1625
        %v1647 = vunpack.c.l.s4 1983009808
        %v1648 = vunpack.c.0.s8 %v1647
        %v1649 = vperm.slane %v1645, %v1648
        %v1650 = vrot.slane %v1638, 4
        %v1651 = vsel %vm1332, %v1650, %v1632
        %v1652 = vrot.slane %v1632, 4
        %v1653 = vsel %vm1332, %v1638, %v1652
        %v1655 = vunpack.c.l.s4 1934713408
        %v1656 = vunpack.c.0.s8 %v1655
        %v1657 = vperm.slane %v1651, %v1656
        %v1659 = vunpack.c.l.s4 1934713408
        %v1660 = vunpack.c.0.s8 %v1659
        %v1661 = vperm.slane %v1653, %v1660
        %v1662 = vrot.slane %v1649, 4
        %v1663 = vsel %vm1332, %v1662, %v1643
        %v1664 = vrot.slane %v1643, 4
        %v1665 = vsel %vm1332, %v1649, %v1664
        %v1667 = vunpack.c.l.s4 1934713408
        %v1668 = vunpack.c.0.s8 %v1667
        %v1669 = vperm.slane %v1663, %v1668
        %v1671 = vunpack.c.l.s4 1934713408
        %v1672 = vunpack.c.0.s8 %v1671
        %v1673 = vperm.slane %v1665, %v1672
        %v1674 = vrot.slane %v1669, 4
        %v1675 = vsel %vm1332, %v1674, %v1657
        %v1676 = vrot.slane %v1657, 4
        %v1677 = vsel %vm1332, %v1669, %v1676
        %v1678 = vrot.slane %v1673, 4
        %v1679 = vsel %vm1332, %v1678, %v1661
        %v1680 = vrot.slane %v1661, 4
        %v1681 = vsel %vm1332, %v1673, %v1680
        %vm1682 = vcmask 64512
        %v1684 = vsel %vm1682, %v1435, 0
        %v1687 = vsel %vm1682, %v1555, 0
        %1689 = vmatpush.xpose.msra.mxu0 0.0
        %1690 = vmatpush.xpose.msra.mxu0 0.0
        %1691 = vmatpush.xpose.msra.mxu0 0.0
        %1692 = vmatpush.xpose.msra.mxu0 0.0
        %1693 = vmatpush.xpose.msra.mxu0 0.0
        %1694 = vmatpush.xpose.msra.mxu0 0.0
        %1695 = vmatpush.xpose.msra.mxu0 0.0
        %1696 = vmatpush.xpose.msra.mxu0 0.0
        %1697 = vmatpush.xpose.msra.mxu0 0.0
        %1698 = vmatpush.xpose.msra.mxu0 0.0
        %1699 = vmatpush.xpose.msra.mxu0 0.0
        %1700 = vmatpush.xpose.msra.mxu0 0.0
        %1701 = vmatpush.xpose.msra.mxu0 0.0
        %1702 = vmatpush.xpose.msra.mxu0 0.0
        %1703 = vmatpush.xpose.msra.mxu0 0.0
        %1704 = vmatpush.xpose.msra.mxu0 %v1687
        %1705 = vmatmul.f32.gmra.mxu0 %v1684
        %v1706 = vpop.f32.mrf.mxu0
        %v1707 = vadd.f32 0.0, %v1706
        %1708 = vdwg.mxu0
        %v1710 = vsel %vm1682, %v1437, 0
        %v1713 = vsel %vm1682, %v1557, 0
        %1715 = vmatpush.xpose.msra.mxu0 0.0
        %1716 = vmatpush.xpose.msra.mxu0 0.0
        %1717 = vmatpush.xpose.msra.mxu0 0.0
        %1718 = vmatpush.xpose.msra.mxu0 0.0
        %1719 = vmatpush.xpose.msra.mxu0 0.0
        %1720 = vmatpush.xpose.msra.mxu0 0.0
        %1721 = vmatpush.xpose.msra.mxu0 0.0
        %1722 = vmatpush.xpose.msra.mxu0 0.0
        %1723 = vmatpush.xpose.msra.mxu0 0.0
        %1724 = vmatpush.xpose.msra.mxu0 0.0
        %1725 = vmatpush.xpose.msra.mxu0 0.0
        %1726 = vmatpush.xpose.msra.mxu0 0.0
        %1727 = vmatpush.xpose.msra.mxu0 0.0
        %1728 = vmatpush.xpose.msra.mxu0 0.0
        %1729 = vmatpush.xpose.msra.mxu0 0.0
        %1730 = vmatpush.xpose.msra.mxu0 %v1713
        %1731 = vmatmul.f32.gmra.mxu0 %v1710
        %v1732 = vpop.f32.mrf.mxu0
        %v1733 = vadd.f32 0.0, %v1732
        %1734 = vdwg.mxu0
        %v1736 = vsel %vm1682, %v1439, 0
        %v1739 = vsel %vm1682, %v1559, 0
        %1741 = vmatpush.xpose.msra.mxu0 0.0
        %1742 = vmatpush.xpose.msra.mxu0 0.0
        %1743 = vmatpush.xpose.msra.mxu0 0.0
        %1744 = vmatpush.xpose.msra.mxu0 0.0
        %1745 = vmatpush.xpose.msra.mxu0 0.0
        %1746 = vmatpush.xpose.msra.mxu0 0.0
        %1747 = vmatpush.xpose.msra.mxu0 0.0
        %1748 = vmatpush.xpose.msra.mxu0 0.0
        %1749 = vmatpush.xpose.msra.mxu0 0.0
        %1750 = vmatpush.xpose.msra.mxu0 0.0
        %1751 = vmatpush.xpose.msra.mxu0 0.0
        %1752 = vmatpush.xpose.msra.mxu0 0.0
        %1753 = vmatpush.xpose.msra.mxu0 0.0
        %1754 = vmatpush.xpose.msra.mxu0 0.0
        %1755 = vmatpush.xpose.msra.mxu0 0.0
        %1756 = vmatpush.xpose.msra.mxu0 %v1739
        %1757 = vmatmul.f32.gmra.mxu0 %v1736
        %v1758 = vpop.f32.mrf.mxu0
        %v1759 = vadd.f32 0.0, %v1758
        %1760 = vdwg.mxu0
        %v1762 = vsel %vm1682, %v1441, 0
        %v1765 = vsel %vm1682, %v1561, 0
        %1767 = vmatpush.xpose.msra.mxu0 0.0
        %1768 = vmatpush.xpose.msra.mxu0 0.0
        %1769 = vmatpush.xpose.msra.mxu0 0.0
        %1770 = vmatpush.xpose.msra.mxu0 0.0
        %1771 = vmatpush.xpose.msra.mxu0 0.0
        %1772 = vmatpush.xpose.msra.mxu0 0.0
        %1773 = vmatpush.xpose.msra.mxu0 0.0
        %1774 = vmatpush.xpose.msra.mxu0 0.0
        %1775 = vmatpush.xpose.msra.mxu0 0.0
        %1776 = vmatpush.xpose.msra.mxu0 0.0
        %1777 = vmatpush.xpose.msra.mxu0 0.0
        %1778 = vmatpush.xpose.msra.mxu0 0.0
        %1779 = vmatpush.xpose.msra.mxu0 0.0
        %1780 = vmatpush.xpose.msra.mxu0 0.0
        %1781 = vmatpush.xpose.msra.mxu0 0.0
        %1782 = vmatpush.xpose.msra.mxu0 %v1765
        %1783 = vmatmul.f32.gmra.mxu0 %v1762
        %v1784 = vpop.f32.mrf.mxu0
        %v1785 = vadd.f32 0.0, %v1784
        %1786 = vdwg.mxu0
        %v1787 = vsel %vm1682, %v1707, -inf
        %1788 = vmax.xlane.f32.xlu0 %v1787
        %v1789 = vpop.xlane.xlu0 %1788
        %v1790 = vsel %vm1682, %v1733, -inf
        %1791 = vmax.xlane.f32.xlu0 %v1790
        %v1792 = vpop.xlane.xlu0 %1791
        %v1793 = vsel %vm1682, %v1759, -inf
        %1794 = vmax.xlane.f32.xlu0 %v1793
        %v1795 = vpop.xlane.xlu0 %1794
        %v1796 = vsel %vm1682, %v1785, -inf
        %1797 = vmax.xlane.f32.xlu0 %v1796
        %v1798 = vpop.xlane.xlu0 %1797
        %v1799 = vsub.f32 %v1707, %v1789
        %v1800 = vsub.f32 %v1733, %v1792
        %v1801 = vsub.f32 %v1759, %v1795
        %v1802 = vsub.f32 %v1785, %v1798
        %v1803 = vmul.f32 %v1799, 1.442695
        %v1804 = vpow.pop %v1803
        %v1805 = vmul.f32 %v1800, 1.442695
        %v1806 = vpow.pop %v1805
        %v1807 = vmul.f32 %v1801, 1.442695
        %v1808 = vpow.pop %v1807
        %v1809 = vmul.f32 %v1802, 1.442695
        %v1810 = vpow.pop %v1809
        %v1811 = vsel %vm1682, %v1804, 0.0
        %1812 = vadd.xlane.f32.xlu0 %v1811
        %v1813 = vpop.xlane.xlu0 %1812
        %v1814 = vsel %vm1682, %v1806, 0.0
        %1815 = vadd.xlane.f32.xlu0 %v1814
        %v1816 = vpop.xlane.xlu0 %1815
        %v1817 = vsel %vm1682, %v1808, 0.0
        %1818 = vadd.xlane.f32.xlu0 %v1817
        %v1819 = vpop.xlane.xlu0 %1818
        %v1820 = vsel %vm1682, %v1810, 0.0
        %1821 = vadd.xlane.f32.xlu0 %v1820
        %v1822 = vpop.xlane.xlu0 %1821
        %v1823 = vrcp.pop %v1813
        %v1824 = vrcp.pop %v1816
        %v1825 = vrcp.pop %v1819
        %v1826 = vrcp.pop %v1822
        %v1827 = vmul.f32 %v1804, %v1823
        %v1828 = vmul.f32 %v1806, %v1824
        %v1829 = vmul.f32 %v1808, %v1825
        %v1830 = vmul.f32 %v1810, %v1826
        %v1832 = vsel %vm1682, %v1827, 0
        %1834 = vmatpush.msra.mxu0 0.0
        %1835 = vmatpush.msra.mxu0 0.0
        %1836 = vmatpush.msra.mxu0 0.0
        %1837 = vmatpush.msra.mxu0 0.0
        %1838 = vmatpush.msra.mxu0 0.0
        %1839 = vmatpush.msra.mxu0 0.0
        %1840 = vmatpush.msra.mxu0 0.0
        %1841 = vmatpush.msra.mxu0 0.0
        %1842 = vmatpush.msra.mxu0 0.0
        %1843 = vmatpush.msra.mxu0 0.0
        %1844 = vmatpush.msra.mxu0 0.0
        %1845 = vmatpush.msra.mxu0 0.0
        %1846 = vmatpush.msra.mxu0 0.0
        %1847 = vmatpush.msra.mxu0 0.0
        %1848 = vmatpush.msra.mxu0 0.0
        %1849 = vmatpush.msra.mxu0 %v1675
        %1850 = vmatmul.f32.gmra.mxu0 %v1832
        %v1851 = vpop.f32.mrf.mxu0
        %v1852 = vadd.f32 0.0, %v1851
        %1853 = vdwg.mxu0
        %v1855 = vsel %vm1682, %v1828, 0
        %1857 = vmatpush.msra.mxu0 0.0
        %1858 = vmatpush.msra.mxu0 0.0
        %1859 = vmatpush.msra.mxu0 0.0
        %1860 = vmatpush.msra.mxu0 0.0
        %1861 = vmatpush.msra.mxu0 0.0
        %1862 = vmatpush.msra.mxu0 0.0
        %1863 = vmatpush.msra.mxu0 0.0
        %1864 = vmatpush.msra.mxu0 0.0
        %1865 = vmatpush.msra.mxu0 0.0
        %1866 = vmatpush.msra.mxu0 0.0
        %1867 = vmatpush.msra.mxu0 0.0
        %1868 = vmatpush.msra.mxu0 0.0
        %1869 = vmatpush.msra.mxu0 0.0
        %1870 = vmatpush.msra.mxu0 0.0
        %1871 = vmatpush.msra.mxu0 0.0
        %1872 = vmatpush.msra.mxu0 %v1677
        %1873 = vmatmul.f32.gmra.mxu0 %v1855
        %v1874 = vpop.f32.mrf.mxu0
        %v1875 = vadd.f32 0.0, %v1874
        %1876 = vdwg.mxu0
        %v1878 = vsel %vm1682, %v1829, 0
        %1880 = vmatpush.msra.mxu0 0.0
        %1881 = vmatpush.msra.mxu0 0.0
        %1882 = vmatpush.msra.mxu0 0.0
        %1883 = vmatpush.msra.mxu0 0.0
        %1884 = vmatpush.msra.mxu0 0.0
        %1885 = vmatpush.msra.mxu0 0.0
        %1886 = vmatpush.msra.mxu0 0.0
        %1887 = vmatpush.msra.mxu0 0.0
        %1888 = vmatpush.msra.mxu0 0.0
        %1889 = vmatpush.msra.mxu0 0.0
        %1890 = vmatpush.msra.mxu0 0.0
        %1891 = vmatpush.msra.mxu0 0.0
        %1892 = vmatpush.msra.mxu0 0.0
        %1893 = vmatpush.msra.mxu0 0.0
        %1894 = vmatpush.msra.mxu0 0.0
        %1895 = vmatpush.msra.mxu0 %v1679
        %1896 = vmatmul.f32.gmra.mxu0 %v1878
        %v1897 = vpop.f32.mrf.mxu0
        %v1898 = vadd.f32 0.0, %v1897
        %1899 = vdwg.mxu0
        %v1901 = vsel %vm1682, %v1830, 0
        %1903 = vmatpush.msra.mxu0 0.0
        %1904 = vmatpush.msra.mxu0 0.0
        %1905 = vmatpush.msra.mxu0 0.0
        %1906 = vmatpush.msra.mxu0 0.0
        %1907 = vmatpush.msra.mxu0 0.0
        %1908 = vmatpush.msra.mxu0 0.0
        %1909 = vmatpush.msra.mxu0 0.0
        %1910 = vmatpush.msra.mxu0 0.0
        %1911 = vmatpush.msra.mxu0 0.0
        %1912 = vmatpush.msra.mxu0 0.0
        %1913 = vmatpush.msra.mxu0 0.0
        %1914 = vmatpush.msra.mxu0 0.0
        %1915 = vmatpush.msra.mxu0 0.0
        %1916 = vmatpush.msra.mxu0 0.0
        %1917 = vmatpush.msra.mxu0 0.0
        %1918 = vmatpush.msra.mxu0 %v1681
        %1919 = vmatmul.f32.gmra.mxu0 %v1901
        %v1920 = vpop.f32.mrf.mxu0
        %v1921 = vadd.f32 0.0, %v1920
        %1922 = vdwg.mxu0
        %v1923 = vrot.slane %v1898, 4
        %v1924 = vsel %vm1332, %v1923, %v1852
        %v1925 = vrot.slane %v1852, 4
        %v1926 = vsel %vm1332, %v1898, %v1925
        %v1928 = vunpack.c.l.s4 1983009808
        %v1929 = vunpack.c.0.s8 %v1928
        %v1930 = vperm.slane %v1924, %v1929
        %v1932 = vunpack.c.l.s4 1983009808
        %v1933 = vunpack.c.0.s8 %v1932
        %v1934 = vperm.slane %v1926, %v1933
        %v1935 = vrot.slane %v1921, 4
        %v1936 = vsel %vm1332, %v1935, %v1875
        %v1937 = vrot.slane %v1875, 4
        %v1938 = vsel %vm1332, %v1921, %v1937
        %v1940 = vunpack.c.l.s4 1983009808
        %v1941 = vunpack.c.0.s8 %v1940
        %v1942 = vperm.slane %v1936, %v1941
        %v1944 = vunpack.c.l.s4 1983009808
        %v1945 = vunpack.c.0.s8 %v1944
        %v1946 = vperm.slane %v1938, %v1945
        %v1947 = vrot.slane %v1942, 4
        %v1948 = vsel %vm1332, %v1947, %v1930
        %v1949 = vrot.slane %v1930, 4
        %v1950 = vsel %vm1332, %v1942, %v1949
        %v1952 = vunpack.c.l.s4 1934713408
        %v1953 = vunpack.c.0.s8 %v1952
        %v1954 = vperm.slane %v1948, %v1953
        %v1956 = vunpack.c.l.s4 1934713408
        %v1957 = vunpack.c.0.s8 %v1956
        %v1958 = vperm.slane %v1950, %v1957
        %v1959 = vrot.slane %v1946, 4
        %v1960 = vsel %vm1332, %v1959, %v1934
        %v1961 = vrot.slane %v1934, 4
        %v1962 = vsel %vm1332, %v1946, %v1961
        %v1964 = vunpack.c.l.s4 1934713408
        %v1965 = vunpack.c.0.s8 %v1964
        %v1966 = vperm.slane %v1960, %v1965
        %v1968 = vunpack.c.l.s4 1934713408
        %v1969 = vunpack.c.0.s8 %v1968
        %v1970 = vperm.slane %v1962, %v1969
        %v1971 = vrot.slane %v1954, 4
        %v1972 = vsel %vm1332, 0.0, %v1971
        %v1973 = vrot.slane %v1958, 4
        %v1974 = vsel %vm1332, 0.0, %v1973
        %v1975 = vrot.slane %v1966, 4
        %v1976 = vsel %vm1332, 0.0, %v1975
        %v1977 = vrot.slane %v1970, 4
        %v1978 = vsel %vm1332, 0.0, %v1977
        %v1979 = vsel %vm1332, %v1973, %v1954
        %v1981 = vunpack.c.l.s4 1983009808
        %v1982 = vunpack.c.0.s8 %v1981
        %v1983 = vperm.slane %v1979, %v1982
        %v1984 = vrot.slane %v1974, 4
        %v1985 = vsel %vm1332, %v1984, %v1972
        %v1987 = vunpack.c.l.s4 1983009808
        %v1988 = vunpack.c.0.s8 %v1987
        %v1989 = vperm.slane %v1985, %v1988
        %v1990 = vsel %vm1332, %v1977, %v1966
        %v1992 = vunpack.c.l.s4 1983009808
        %v1993 = vunpack.c.0.s8 %v1992
        %v1994 = vperm.slane %v1990, %v1993
        %v1995 = vrot.slane %v1978, 4
        %v1996 = vsel %vm1332, %v1995, %v1976
        %v1998 = vunpack.c.l.s4 1983009808
        %v1999 = vunpack.c.0.s8 %v1998
        %v2000 = vperm.slane %v1996, %v1999
        %v2001 = vrot.slane %v1989, 4
        %v2002 = vsel %vm1332, %v2001, %v1983
        %v2003 = vrot.slane %v1983, 4
        %v2004 = vsel %vm1332, %v1989, %v2003
        %v2006 = vunpack.c.l.s4 1934713408
        %v2007 = vunpack.c.0.s8 %v2006
        %v2008 = vperm.slane %v2002, %v2007
        %v2010 = vunpack.c.l.s4 1934713408
        %v2011 = vunpack.c.0.s8 %v2010
        %v2012 = vperm.slane %v2004, %v2011
        %v2013 = vrot.slane %v2000, 4
        %v2014 = vsel %vm1332, %v2013, %v1994
        %v2015 = vrot.slane %v1994, 4
        %v2016 = vsel %vm1332, %v2000, %v2015
        %v2018 = vunpack.c.l.s4 1934713408
        %v2019 = vunpack.c.0.s8 %v2018
        %v2020 = vperm.slane %v2014, %v2019
        %v2022 = vunpack.c.l.s4 1934713408
        %v2023 = vunpack.c.0.s8 %v2022
        %v2024 = vperm.slane %v2016, %v2023
        %v2025 = vrot.slane %v2020, 4
        %v2026 = vsel %vm1332, %v2025, %v2008
        %v2027 = vrot.slane %v2008, 4
        %v2028 = vsel %vm1332, %v2020, %v2027
        %v2029 = vrot.slane %v2024, 4
        %v2030 = vsel %vm1332, %v2029, %v2012
        %v2031 = vrot.slane %v2012, 4
        %v2032 = vsel %vm1332, %v2024, %v2031
        %2034 = vrot.lane.b32.xlu0 %v2028, 8
        %v2035 = vpop.permute.xlu0 %2034
        %2038 = vrot.lane.b32.xlu0 %v2030, 16
        %v2039 = vpop.permute.xlu0 %2038
        %2042 = vrot.lane.b32.xlu0 %v2032, 24
        %v2043 = vpop.permute.xlu0 %2042
        %v2045 = vsel %vm1682, %v2026, %v2035
        %vm2046 = vcmask 130048
        %v2047 = vsel %vm2046, %v2045, %v2039
        %vm2048 = vcmask 195584
        %v2049 = vsel %vm2048, %v2047, %v2043
        %v2051 = vperm.slane %v1184, 0
        %v2054 = vsel %vm1207, %v2049, 0
        %2056 = vmatpush.msra.mxu0 0.0
        %2057 = vmatpush.msra.mxu0 0.0
        %2058 = vmatpush.msra.mxu0 0.0
        %2059 = vmatpush.msra.mxu0 0.0
        %2060 = vmatpush.msra.mxu0 0.0
        %2061 = vmatpush.msra.mxu0 0.0
        %2062 = vmatpush.msra.mxu0 0.0
        %2063 = vmatpush.msra.mxu0 0.0
        %2064 = vmatpush.msra.mxu0 0.0
        %2065 = vmatpush.msra.mxu0 0.0
        %2066 = vmatpush.msra.mxu0 0.0
        %2067 = vmatpush.msra.mxu0 0.0
        %2068 = vmatpush.msra.mxu0 %v1183
        %2069 = vmatpush.msra.mxu0 %v1182
        %2070 = vmatpush.msra.mxu0 %v1181
        %2071 = vmatpush.msra.mxu0 %v1180
        %2072 = vmatmul.f32.gmra.mxu0 %v2054
        %v2073 = vpop.f32.mrf.mxu0
        %v2074 = vadd.f32 %v2051, %v2073
        %2075 = vdwg.mxu0
        %v2076 = vadd.f32 %v1159, %v2074
        %v2077 = vld [vmem:[%s45] sm:$0x1]
        %v2078 = vld [vmem:[%s47] sm:$0x1]
        %v2079 = vsel %vm1207, %v2076, 0.0
        %2080 = vadd.xlane.f32.xlu0 %v2079
        %v2081 = vpop.xlane.xlu0 %2080
        %v2082 = vmul.f32 %v2081, %v1217
        %v2083 = vsub.f32 %v2076, %v2082
        %v2084 = vmul.f32 %v2083, %v2083
        %v2085 = vsel %vm1207, %v2084, 0.0
        %2086 = vadd.xlane.f32.xlu0 %v2085
        %v2087 = vpop.xlane.xlu0 %2086
        %v2088 = vmul.f32 %v2087, %v1217
        %v2089 = vadd.f32 %v2088, 1e-05
        %v2090 = vrsqrt.pop %v2089
        %v2091 = vmul.f32 %v2090, %v2089
        %v2092 = vmul.f32 %v2091, %v2090
        %v2093 = vmul.f32 0.5, %v2092
        %v2094 = vsub.f32 1.5, %v2093
        %v2095 = vmul.f32 %v2090, %v2094
        %vm2096 = vweird.f32 %v2089
        %vm2097 = vweird.f32 %v2090
        %vm2098 = vmor %vm2096, %vm2097
        %v2099 = vsel %vm2098, %v2090, %v2095
        %v2100 = vmul.f32 %v2083, %v2099
        %v2102 = vperm.slane %v2077, 0
        %v2104 = vmul.f32 %v2100, %v2102
        %v2106 = vperm.slane %v2078, 0
        %v2108 = vadd.f32 %v2104, %v2106
        %v2109 = vadd.f32 %v2108, %v1162
        %v2110 = vadd.f32 %v1160, %v1163
        %v2111 = vadd.f32 %v1161, %v1164
        %v2113 = vperm.slane %v1189, 0
        %v2116 = vsel %vm1207, %v2109, 0
        %2118 = vmatpush.msra.mxu0 0.0
        %2119 = vmatpush.msra.mxu0 0.0
        %2120 = vmatpush.msra.mxu0 0.0
        %2121 = vmatpush.msra.mxu0 0.0
        %2122 = vmatpush.msra.mxu0 0.0
        %2123 = vmatpush.msra.mxu0 0.0
        %2124 = vmatpush.msra.mxu0 0.0
        %2125 = vmatpush.msra.mxu0 0.0
        %2126 = vmatpush.msra.mxu0 0.0
        %2127 = vmatpush.msra.mxu0 0.0
        %2128 = vmatpush.msra.mxu0 0.0
        %2129 = vmatpush.msra.mxu0 0.0
        %2130 = vmatpush.msra.mxu0 %v1188
        %2131 = vmatpush.msra.mxu0 %v1187
        %2132 = vmatpush.msra.mxu0 %v1186
        %2133 = vmatpush.msra.mxu0 %v1185
        %2134 = vmatmul.f32.gmra.mxu0 %v2116
        %v2135 = vpop.f32.mrf.mxu0
        %v2136 = vadd.f32 %v2113, %v2135
        %2137 = vdwg.mxu0
        %v2139 = vperm.slane %v1194, 0
        %v2142 = vsel %vm1207, %v2110, 0
        %v2145 = vsel %vm1207, %v2111, 0
        %2147 = vmatpush.msra.mxu0 0.0
        %2148 = vmatpush.msra.mxu0 0.0
        %2149 = vmatpush.msra.mxu0 0.0
        %2150 = vmatpush.msra.mxu0 0.0
        %2151 = vmatpush.msra.mxu0 0.0
        %2152 = vmatpush.msra.mxu0 0.0
        %2153 = vmatpush.msra.mxu0 0.0
        %2154 = vmatpush.msra.mxu0 0.0
        %2155 = vmatpush.msra.mxu0 0.0
        %2156 = vmatpush.msra.mxu0 0.0
        %2157 = vmatpush.msra.mxu0 0.0
        %2158 = vmatpush.msra.mxu0 0.0
        %2159 = vmatpush.msra.mxu0 %v1193
        %2160 = vmatpush.msra.mxu0 %v1192
        %2161 = vmatpush.msra.mxu0 %v1191
        %2162 = vmatpush.msra.mxu0 %v1190
        %2163 = vmatmul.f32.gmra.mxu0 %v2142
        %v2164 = vpop.f32.mrf.mxu0
        %v2165 = vadd.f32 %v2139, %v2164
        %2166 = vmatmul.f32.gmra.mxu0 %v2145
        %v2167 = vpop.f32.mrf.mxu0
        %v2168 = vadd.f32 %v2139, %v2167
        %2169 = vdwg.mxu0
        %v2171 = vperm.slane %v1199, 0
        %v2174 = vsel %vm1207, %v1160, 0
        %v2177 = vsel %vm1207, %v1161, 0
        %2179 = vmatpush.msra.mxu0 0.0
        %2180 = vmatpush.msra.mxu0 0.0
        %2181 = vmatpush.msra.mxu0 0.0
        %2182 = vmatpush.msra.mxu0 0.0
        %2183 = vmatpush.msra.mxu0 0.0
        %2184 = vmatpush.msra.mxu0 0.0
        %2185 = vmatpush.msra.mxu0 0.0
        %2186 = vmatpush.msra.mxu0 0.0
        %2187 = vmatpush.msra.mxu0 0.0
        %2188 = vmatpush.msra.mxu0 0.0
        %2189 = vmatpush.msra.mxu0 0.0
        %2190 = vmatpush.msra.mxu0 0.0
        %2191 = vmatpush.msra.mxu0 %v1198
        %2192 = vmatpush.msra.mxu0 %v1197
        %2193 = vmatpush.msra.mxu0 %v1196
        %2194 = vmatpush.msra.mxu0 %v1195
        %2195 = vmatmul.f32.gmra.mxu0 %v2174
        %v2196 = vpop.f32.mrf.mxu0
        %v2197 = vadd.f32 %v2171, %v2196
        %2198 = vmatmul.f32.gmra.mxu0 %v2177
        %v2199 = vpop.f32.mrf.mxu0
        %v2200 = vadd.f32 %v2171, %v2199
        %2201 = vdwg.mxu0
        %2203 = vrot.lane.b32.xlu0 %v2136, 120
        %v2204 = vpop.permute.xlu0 %2203
        %2206 = vrot.lane.b32.xlu0 %v2136, 112
        %v2207 = vpop.permute.xlu0 %2206
        %2209 = vrot.lane.b32.xlu0 %v2136, 104
        %v2210 = vpop.permute.xlu0 %2209
        %v2212 = vrot.slane %v2207, 4
        %v2213 = vsel %vm1332, %v2212, %v2136
        %v2214 = vrot.slane %v2136, 4
        %v2215 = vsel %vm1332, %v2207, %v2214
        %v2217 = vunpack.c.l.s4 1983009808
        %v2218 = vunpack.c.0.s8 %v2217
        %v2219 = vperm.slane %v2213, %v2218
        %v2221 = vunpack.c.l.s4 1983009808
        %v2222 = vunpack.c.0.s8 %v2221
        %v2223 = vperm.slane %v2215, %v2222
        %v2224 = vrot.slane %v2210, 4
        %v2225 = vsel %vm1332, %v2224, %v2204
        %v2226 = vrot.slane %v2204, 4
        %v2227 = vsel %vm1332, %v2210, %v2226
        %v2229 = vunpack.c.l.s4 1983009808
        %v2230 = vunpack.c.0.s8 %v2229
        %v2231 = vperm.slane %v2225, %v2230
        %v2233 = vunpack.c.l.s4 1983009808
        %v2234 = vunpack.c.0.s8 %v2233
        %v2235 = vperm.slane %v2227, %v2234
        %v2236 = vrot.slane %v2231, 4
        %v2237 = vsel %vm1332, %v2236, %v2219
        %v2238 = vrot.slane %v2219, 4
        %v2239 = vsel %vm1332, %v2231, %v2238
        %v2241 = vunpack.c.l.s4 1934713408
        %v2242 = vunpack.c.0.s8 %v2241
        %v2243 = vperm.slane %v2237, %v2242
        %v2245 = vunpack.c.l.s4 1934713408
        %v2246 = vunpack.c.0.s8 %v2245
        %v2247 = vperm.slane %v2239, %v2246
        %v2248 = vrot.slane %v2235, 4
        %v2249 = vsel %vm1332, %v2248, %v2223
        %v2250 = vrot.slane %v2223, 4
        %v2251 = vsel %vm1332, %v2235, %v2250
        %v2253 = vunpack.c.l.s4 1934713408
        %v2254 = vunpack.c.0.s8 %v2253
        %v2255 = vperm.slane %v2249, %v2254
        %v2257 = vunpack.c.l.s4 1934713408
        %v2258 = vunpack.c.0.s8 %v2257
        %v2259 = vperm.slane %v2251, %v2258
        %v2260 = vrot.slane %v2243, 4
        %v2261 = vsel %vm1332, 0.0, %v2260
        %v2262 = vrot.slane %v2247, 4
        %v2263 = vsel %vm1332, 0.0, %v2262
        %v2264 = vrot.slane %v2255, 4
        %v2265 = vsel %vm1332, 0.0, %v2264
        %v2266 = vrot.slane %v2259, 4
        %v2267 = vsel %vm1332, 0.0, %v2266
        %v2268 = vsel %vm1332, %v2262, %v2243
        %v2270 = vunpack.c.l.s4 1983009808
        %v2271 = vunpack.c.0.s8 %v2270
        %v2272 = vperm.slane %v2268, %v2271
        %v2273 = vrot.slane %v2263, 4
        %v2274 = vsel %vm1332, %v2273, %v2261
        %v2276 = vunpack.c.l.s4 1983009808
        %v2277 = vunpack.c.0.s8 %v2276
        %v2278 = vperm.slane %v2274, %v2277
        %v2279 = vsel %vm1332, %v2266, %v2255
        %v2281 = vunpack.c.l.s4 1983009808
        %v2282 = vunpack.c.0.s8 %v2281
        %v2283 = vperm.slane %v2279, %v2282
        %v2284 = vrot.slane %v2267, 4
        %v2285 = vsel %vm1332, %v2284, %v2265
        %v2287 = vunpack.c.l.s4 1983009808
        %v2288 = vunpack.c.0.s8 %v2287
        %v2289 = vperm.slane %v2285, %v2288
        %v2290 = vrot.slane %v2278, 4
        %v2291 = vsel %vm1332, %v2290, %v2272
        %v2292 = vrot.slane %v2272, 4
        %v2293 = vsel %vm1332, %v2278, %v2292
        %v2295 = vunpack.c.l.s4 1934713408
        %v2296 = vunpack.c.0.s8 %v2295
        %v2297 = vperm.slane %v2291, %v2296
        %v2299 = vunpack.c.l.s4 1934713408
        %v2300 = vunpack.c.0.s8 %v2299
        %v2301 = vperm.slane %v2293, %v2300
        %v2302 = vrot.slane %v2289, 4
        %v2303 = vsel %vm1332, %v2302, %v2283
        %v2304 = vrot.slane %v2283, 4
        %v2305 = vsel %vm1332, %v2289, %v2304
        %v2307 = vunpack.c.l.s4 1934713408
        %v2308 = vunpack.c.0.s8 %v2307
        %v2309 = vperm.slane %v2303, %v2308
        %v2311 = vunpack.c.l.s4 1934713408
        %v2312 = vunpack.c.0.s8 %v2311
        %v2313 = vperm.slane %v2305, %v2312
        %v2314 = vrot.slane %v2309, 4
        %v2315 = vsel %vm1332, %v2314, %v2297
        %v2316 = vrot.slane %v2297, 4
        %v2317 = vsel %vm1332, %v2309, %v2316
        %v2318 = vrot.slane %v2313, 4
        %v2319 = vsel %vm1332, %v2318, %v2301
        %v2320 = vrot.slane %v2301, 4
        %v2321 = vsel %vm1332, %v2313, %v2320
        %2324 = vrot.lane.b32.xlu0 %v2165, 120
        %v2325 = vpop.permute.xlu0 %2324
        %2326 = vrot.lane.b32.xlu0 %v2168, 120
        %v2327 = vpop.permute.xlu0 %2326
        %2330 = vrot.lane.b32.xlu0 %v2165, 112
        %v2331 = vpop.permute.xlu0 %2330
        %2332 = vrot.lane.b32.xlu0 %v2168, 112
        %v2333 = vpop.permute.xlu0 %2332
        %2336 = vrot.lane.b32.xlu0 %v2165, 104
        %v2337 = vpop.permute.xlu0 %2336
        %2338 = vrot.lane.b32.xlu0 %v2168, 104
        %v2339 = vpop.permute.xlu0 %2338
        %v2342 = vrot.slane %v2331, 4
        %v2343 = vsel %vm1332, %v2342, %v2165
        %v2344 = vrot.slane %v2165, 4
        %v2345 = vsel %vm1332, %v2331, %v2344
        %v2347 = vunpack.c.l.s4 1983009808
        %v2348 = vunpack.c.0.s8 %v2347
        %v2349 = vperm.slane %v2343, %v2348
        %v2351 = vunpack.c.l.s4 1983009808
        %v2352 = vunpack.c.0.s8 %v2351
        %v2353 = vperm.slane %v2345, %v2352
        %v2354 = vrot.slane %v2337, 4
        %v2355 = vsel %vm1332, %v2354, %v2325
        %v2356 = vrot.slane %v2325, 4
        %v2357 = vsel %vm1332, %v2337, %v2356
        %v2359 = vunpack.c.l.s4 1983009808
        %v2360 = vunpack.c.0.s8 %v2359
        %v2361 = vperm.slane %v2355, %v2360
        %v2363 = vunpack.c.l.s4 1983009808
        %v2364 = vunpack.c.0.s8 %v2363
        %v2365 = vperm.slane %v2357, %v2364
        %v2366 = vrot.slane %v2361, 4
        %v2367 = vsel %vm1332, %v2366, %v2349
        %v2368 = vrot.slane %v2349, 4
        %v2369 = vsel %vm1332, %v2361, %v2368
        %v2371 = vunpack.c.l.s4 1934713408
        %v2372 = vunpack.c.0.s8 %v2371
        %v2373 = vperm.slane %v2367, %v2372
        %v2375 = vunpack.c.l.s4 1934713408
        %v2376 = vunpack.c.0.s8 %v2375
        %v2377 = vperm.slane %v2369, %v2376
        %v2378 = vrot.slane %v2365, 4
        %v2379 = vsel %vm1332, %v2378, %v2353
        %v2380 = vrot.slane %v2353, 4
        %v2381 = vsel %vm1332, %v2365, %v2380
        %v2383 = vunpack.c.l.s4 1934713408
        %v2384 = vunpack.c.0.s8 %v2383
        %v2385 = vperm.slane %v2379, %v2384
        %v2387 = vunpack.c.l.s4 1934713408
        %v2388 = vunpack.c.0.s8 %v2387
        %v2389 = vperm.slane %v2381, %v2388
        %v2390 = vrot.slane %v2373, 4
        %v2391 = vsel %vm1332, 0.0, %v2390
        %v2392 = vrot.slane %v2377, 4
        %v2393 = vsel %vm1332, 0.0, %v2392
        %v2394 = vrot.slane %v2385, 4
        %v2395 = vsel %vm1332, 0.0, %v2394
        %v2396 = vrot.slane %v2389, 4
        %v2397 = vsel %vm1332, 0.0, %v2396
        %v2398 = vrot.slane %v2333, 4
        %v2399 = vsel %vm1332, %v2398, %v2168
        %v2400 = vrot.slane %v2168, 4
        %v2401 = vsel %vm1332, %v2333, %v2400
        %v2403 = vunpack.c.l.s4 1983009808
        %v2404 = vunpack.c.0.s8 %v2403
        %v2405 = vperm.slane %v2399, %v2404
        %v2407 = vunpack.c.l.s4 1983009808
        %v2408 = vunpack.c.0.s8 %v2407
        %v2409 = vperm.slane %v2401, %v2408
        %v2410 = vrot.slane %v2339, 4
        %v2411 = vsel %vm1332, %v2410, %v2327
        %v2412 = vrot.slane %v2327, 4
        %v2413 = vsel %vm1332, %v2339, %v2412
        %v2415 = vunpack.c.l.s4 1983009808
        %v2416 = vunpack.c.0.s8 %v2415
        %v2417 = vperm.slane %v2411, %v2416
        %v2419 = vunpack.c.l.s4 1983009808
        %v2420 = vunpack.c.0.s8 %v2419
        %v2421 = vperm.slane %v2413, %v2420
        %v2422 = vrot.slane %v2417, 4
        %v2423 = vsel %vm1332, %v2422, %v2405
        %v2424 = vrot.slane %v2405, 4
        %v2425 = vsel %vm1332, %v2417, %v2424
        %v2427 = vunpack.c.l.s4 1934713408
        %v2428 = vunpack.c.0.s8 %v2427
        %v2429 = vperm.slane %v2423, %v2428
        %v2431 = vunpack.c.l.s4 1934713408
        %v2432 = vunpack.c.0.s8 %v2431
        %v2433 = vperm.slane %v2425, %v2432
        %v2434 = vrot.slane %v2421, 4
        %v2435 = vsel %vm1332, %v2434, %v2409
        %v2436 = vrot.slane %v2409, 4
        %v2437 = vsel %vm1332, %v2421, %v2436
        %v2439 = vunpack.c.l.s4 1934713408
        %v2440 = vunpack.c.0.s8 %v2439
        %v2441 = vperm.slane %v2435, %v2440
        %v2443 = vunpack.c.l.s4 1934713408
        %v2444 = vunpack.c.0.s8 %v2443
        %v2445 = vperm.slane %v2437, %v2444
        %v2446 = vrot.slane %v2429, 4
        %v2447 = vsel %vm1332, 0.0, %v2446
        %v2448 = vrot.slane %v2433, 4
        %v2449 = vsel %vm1332, 0.0, %v2448
        %v2450 = vrot.slane %v2441, 4
        %v2451 = vsel %vm1332, 0.0, %v2450
        %v2452 = vrot.slane %v2445, 4
        %v2453 = vsel %vm1332, 0.0, %v2452
        %v2454 = vsel %vm1332, %v2392, %v2373
        %v2456 = vunpack.c.l.s4 1983009808
        %v2457 = vunpack.c.0.s8 %v2456
        %v2458 = vperm.slane %v2454, %v2457
        %v2459 = vrot.slane %v2393, 4
        %v2460 = vsel %vm1332, %v2459, %v2391
        %v2462 = vunpack.c.l.s4 1983009808
        %v2463 = vunpack.c.0.s8 %v2462
        %v2464 = vperm.slane %v2460, %v2463
        %v2465 = vsel %vm1332, %v2396, %v2385
        %v2467 = vunpack.c.l.s4 1983009808
        %v2468 = vunpack.c.0.s8 %v2467
        %v2469 = vperm.slane %v2465, %v2468
        %v2470 = vrot.slane %v2397, 4
        %v2471 = vsel %vm1332, %v2470, %v2395
        %v2473 = vunpack.c.l.s4 1983009808
        %v2474 = vunpack.c.0.s8 %v2473
        %v2475 = vperm.slane %v2471, %v2474
        %v2476 = vrot.slane %v2464, 4
        %v2477 = vsel %vm1332, %v2476, %v2458
        %v2478 = vrot.slane %v2458, 4
        %v2479 = vsel %vm1332, %v2464, %v2478
        %v2481 = vunpack.c.l.s4 1934713408
        %v2482 = vunpack.c.0.s8 %v2481
        %v2483 = vperm.slane %v2477, %v2482
        %v2485 = vunpack.c.l.s4 1934713408
        %v2486 = vunpack.c.0.s8 %v2485
        %v2487 = vperm.slane %v2479, %v2486
        %v2488 = vrot.slane %v2475, 4
        %v2489 = vsel %vm1332, %v2488, %v2469
        %v2490 = vrot.slane %v2469, 4
        %v2491 = vsel %vm1332, %v2475, %v2490
        %v2493 = vunpack.c.l.s4 1934713408
        %v2494 = vunpack.c.0.s8 %v2493
        %v2495 = vperm.slane %v2489, %v2494
        %v2497 = vunpack.c.l.s4 1934713408
        %v2498 = vunpack.c.0.s8 %v2497
        %v2499 = vperm.slane %v2491, %v2498
        %v2500 = vrot.slane %v2495, 4
        %v2501 = vsel %vm1332, %v2500, %v2483
        %v2502 = vrot.slane %v2483, 4
        %v2503 = vsel %vm1332, %v2495, %v2502
        %v2504 = vrot.slane %v2499, 4
        %v2505 = vsel %vm1332, %v2504, %v2487
        %v2506 = vrot.slane %v2487, 4
        %v2507 = vsel %vm1332, %v2499, %v2506
        %v2508 = vsel %vm1332, %v2448, %v2429
        %v2510 = vunpack.c.l.s4 1983009808
        %v2511 = vunpack.c.0.s8 %v2510
        %v2512 = vperm.slane %v2508, %v2511
        %v2513 = vrot.slane %v2449, 4
        %v2514 = vsel %vm1332, %v2513, %v2447
        %v2516 = vunpack.c.l.s4 1983009808
        %v2517 = vunpack.c.0.s8 %v2516
        %v2518 = vperm.slane %v2514, %v2517
        %v2519 = vsel %vm1332, %v2452, %v2441
        %v2521 = vunpack.c.l.s4 1983009808
        %v2522 = vunpack.c.0.s8 %v2521
        %v2523 = vperm.slane %v2519, %v2522
        %v2524 = vrot.slane %v2453, 4
        %v2525 = vsel %vm1332, %v2524, %v2451
        %v2527 = vunpack.c.l.s4 1983009808
        %v2528 = vunpack.c.0.s8 %v2527
        %v2529 = vperm.slane %v2525, %v2528
        %v2530 = vrot.slane %v2518, 4
        %v2531 = vsel %vm1332, %v2530, %v2512
        %v2532 = vrot.slane %v2512, 4
        %v2533 = vsel %vm1332, %v2518, %v2532
        %v2535 = vunpack.c.l.s4 1934713408
        %v2536 = vunpack.c.0.s8 %v2535
        %v2537 = vperm.slane %v2531, %v2536
        %v2539 = vunpack.c.l.s4 1934713408
        %v2540 = vunpack.c.0.s8 %v2539
        %v2541 = vperm.slane %v2533, %v2540
        %v2542 = vrot.slane %v2529, 4
        %v2543 = vsel %vm1332, %v2542, %v2523
        %v2544 = vrot.slane %v2523, 4
        %v2545 = vsel %vm1332, %v2529, %v2544
        %v2547 = vunpack.c.l.s4 1934713408
        %v2548 = vunpack.c.0.s8 %v2547
        %v2549 = vperm.slane %v2543, %v2548
        %v2551 = vunpack.c.l.s4 1934713408
        %v2552 = vunpack.c.0.s8 %v2551
        %v2553 = vperm.slane %v2545, %v2552
        %v2554 = vrot.slane %v2549, 4
        %v2555 = vsel %vm1332, %v2554, %v2537
        %v2556 = vrot.slane %v2537, 4
        %v2557 = vsel %vm1332, %v2549, %v2556
        %v2558 = vrot.slane %v2553, 4
        %v2559 = vsel %vm1332, %v2558, %v2541
        %v2560 = vrot.slane %v2541, 4
        %v2561 = vsel %vm1332, %v2553, %v2560
        %2564 = vrot.lane.b32.xlu0 %v2197, 120
        %v2565 = vpop.permute.xlu0 %2564
        %2566 = vrot.lane.b32.xlu0 %v2200, 120
        %v2567 = vpop.permute.xlu0 %2566
        %2570 = vrot.lane.b32.xlu0 %v2197, 112
        %v2571 = vpop.permute.xlu0 %2570
        %2572 = vrot.lane.b32.xlu0 %v2200, 112
        %v2573 = vpop.permute.xlu0 %2572
        %2576 = vrot.lane.b32.xlu0 %v2197, 104
        %v2577 = vpop.permute.xlu0 %2576
        %2578 = vrot.lane.b32.xlu0 %v2200, 104
        %v2579 = vpop.permute.xlu0 %2578
        %v2582 = vrot.slane %v2571, 4
        %v2583 = vsel %vm1332, %v2582, %v2197
        %v2584 = vrot.slane %v2197, 4
        %v2585 = vsel %vm1332, %v2571, %v2584
        %v2587 = vunpack.c.l.s4 1983009808
        %v2588 = vunpack.c.0.s8 %v2587
        %v2589 = vperm.slane %v2583, %v2588
        %v2591 = vunpack.c.l.s4 1983009808
        %v2592 = vunpack.c.0.s8 %v2591
        %v2593 = vperm.slane %v2585, %v2592
        %v2594 = vrot.slane %v2577, 4
        %v2595 = vsel %vm1332, %v2594, %v2565
        %v2596 = vrot.slane %v2565, 4
        %v2597 = vsel %vm1332, %v2577, %v2596
        %v2599 = vunpack.c.l.s4 1983009808
        %v2600 = vunpack.c.0.s8 %v2599
        %v2601 = vperm.slane %v2595, %v2600
        %v2603 = vunpack.c.l.s4 1983009808
        %v2604 = vunpack.c.0.s8 %v2603
        %v2605 = vperm.slane %v2597, %v2604
        %v2606 = vrot.slane %v2601, 4
        %v2607 = vsel %vm1332, %v2606, %v2589
        %v2608 = vrot.slane %v2589, 4
        %v2609 = vsel %vm1332, %v2601, %v2608
        %v2611 = vunpack.c.l.s4 1934713408
        %v2612 = vunpack.c.0.s8 %v2611
        %v2613 = vperm.slane %v2607, %v2612
        %v2615 = vunpack.c.l.s4 1934713408
        %v2616 = vunpack.c.0.s8 %v2615
        %v2617 = vperm.slane %v2609, %v2616
        %v2618 = vrot.slane %v2605, 4
        %v2619 = vsel %vm1332, %v2618, %v2593
        %v2620 = vrot.slane %v2593, 4
        %v2621 = vsel %vm1332, %v2605, %v2620
        %v2623 = vunpack.c.l.s4 1934713408
        %v2624 = vunpack.c.0.s8 %v2623
        %v2625 = vperm.slane %v2619, %v2624
        %v2627 = vunpack.c.l.s4 1934713408
        %v2628 = vunpack.c.0.s8 %v2627
        %v2629 = vperm.slane %v2621, %v2628
        %v2630 = vrot.slane %v2613, 4
        %v2631 = vsel %vm1332, 0.0, %v2630
        %v2632 = vrot.slane %v2617, 4
        %v2633 = vsel %vm1332, 0.0, %v2632
        %v2634 = vrot.slane %v2625, 4
        %v2635 = vsel %vm1332, 0.0, %v2634
        %v2636 = vrot.slane %v2629, 4
        %v2637 = vsel %vm1332, 0.0, %v2636
        %v2638 = vrot.slane %v2573, 4
        %v2639 = vsel %vm1332, %v2638, %v2200
        %v2640 = vrot.slane %v2200, 4
        %v2641 = vsel %vm1332, %v2573, %v2640
        %v2643 = vunpack.c.l.s4 1983009808
        %v2644 = vunpack.c.0.s8 %v2643
        %v2645 = vperm.slane %v2639, %v2644
        %v2647 = vunpack.c.l.s4 1983009808
        %v2648 = vunpack.c.0.s8 %v2647
        %v2649 = vperm.slane %v2641, %v2648
        %v2650 = vrot.slane %v2579, 4
        %v2651 = vsel %vm1332, %v2650, %v2567
        %v2652 = vrot.slane %v2567, 4
        %v2653 = vsel %vm1332, %v2579, %v2652
        %v2655 = vunpack.c.l.s4 1983009808
        %v2656 = vunpack.c.0.s8 %v2655
        %v2657 = vperm.slane %v2651, %v2656
        %v2659 = vunpack.c.l.s4 1983009808
        %v2660 = vunpack.c.0.s8 %v2659
        %v2661 = vperm.slane %v2653, %v2660
        %v2662 = vrot.slane %v2657, 4
        %v2663 = vsel %vm1332, %v2662, %v2645
        %v2664 = vrot.slane %v2645, 4
        %v2665 = vsel %vm1332, %v2657, %v2664
        %v2667 = vunpack.c.l.s4 1934713408
        %v2668 = vunpack.c.0.s8 %v2667
        %v2669 = vperm.slane %v2663, %v2668
        %v2671 = vunpack.c.l.s4 1934713408
        %v2672 = vunpack.c.0.s8 %v2671
        %v2673 = vperm.slane %v2665, %v2672
        %v2674 = vrot.slane %v2661, 4
        %v2675 = vsel %vm1332, %v2674, %v2649
        %v2676 = vrot.slane %v2649, 4
        %v2677 = vsel %vm1332, %v2661, %v2676
        %v2679 = vunpack.c.l.s4 1934713408
        %v2680 = vunpack.c.0.s8 %v2679
        %v2681 = vperm.slane %v2675, %v2680
        %v2683 = vunpack.c.l.s4 1934713408
        %v2684 = vunpack.c.0.s8 %v2683
        %v2685 = vperm.slane %v2677, %v2684
        %v2686 = vrot.slane %v2669, 4
        %v2687 = vsel %vm1332, 0.0, %v2686
        %v2688 = vrot.slane %v2673, 4
        %v2689 = vsel %vm1332, 0.0, %v2688
        %v2690 = vrot.slane %v2681, 4
        %v2691 = vsel %vm1332, 0.0, %v2690
        %v2692 = vrot.slane %v2685, 4
        %v2693 = vsel %vm1332, 0.0, %v2692
        %v2694 = vsel %vm1332, %v2632, %v2613
        %v2696 = vunpack.c.l.s4 1983009808
        %v2697 = vunpack.c.0.s8 %v2696
        %v2698 = vperm.slane %v2694, %v2697
        %v2699 = vrot.slane %v2633, 4
        %v2700 = vsel %vm1332, %v2699, %v2631
        %v2702 = vunpack.c.l.s4 1983009808
        %v2703 = vunpack.c.0.s8 %v2702
        %v2704 = vperm.slane %v2700, %v2703
        %v2705 = vsel %vm1332, %v2636, %v2625
        %v2707 = vunpack.c.l.s4 1983009808
        %v2708 = vunpack.c.0.s8 %v2707
        %v2709 = vperm.slane %v2705, %v2708
        %v2710 = vrot.slane %v2637, 4
        %v2711 = vsel %vm1332, %v2710, %v2635
        %v2713 = vunpack.c.l.s4 1983009808
        %v2714 = vunpack.c.0.s8 %v2713
        %v2715 = vperm.slane %v2711, %v2714
        %v2716 = vrot.slane %v2704, 4
        %v2717 = vsel %vm1332, %v2716, %v2698
        %v2718 = vrot.slane %v2698, 4
        %v2719 = vsel %vm1332, %v2704, %v2718
        %v2721 = vunpack.c.l.s4 1934713408
        %v2722 = vunpack.c.0.s8 %v2721
        %v2723 = vperm.slane %v2717, %v2722
        %v2725 = vunpack.c.l.s4 1934713408
        %v2726 = vunpack.c.0.s8 %v2725
        %v2727 = vperm.slane %v2719, %v2726
        %v2728 = vrot.slane %v2715, 4
        %v2729 = vsel %vm1332, %v2728, %v2709
        %v2730 = vrot.slane %v2709, 4
        %v2731 = vsel %vm1332, %v2715, %v2730
        %v2733 = vunpack.c.l.s4 1934713408
        %v2734 = vunpack.c.0.s8 %v2733
        %v2735 = vperm.slane %v2729, %v2734
        %v2737 = vunpack.c.l.s4 1934713408
        %v2738 = vunpack.c.0.s8 %v2737
        %v2739 = vperm.slane %v2731, %v2738
        %v2740 = vrot.slane %v2735, 4
        %v2741 = vsel %vm1332, %v2740, %v2723
        %v2742 = vrot.slane %v2723, 4
        %v2743 = vsel %vm1332, %v2735, %v2742
        %v2744 = vrot.slane %v2739, 4
        %v2745 = vsel %vm1332, %v2744, %v2727
        %v2746 = vrot.slane %v2727, 4
        %v2747 = vsel %vm1332, %v2739, %v2746
        %v2748 = vsel %vm1332, %v2688, %v2669
        %v2750 = vunpack.c.l.s4 1983009808
        %v2751 = vunpack.c.0.s8 %v2750
        %v2752 = vperm.slane %v2748, %v2751
        %v2753 = vrot.slane %v2689, 4
        %v2754 = vsel %vm1332, %v2753, %v2687
        %v2756 = vunpack.c.l.s4 1983009808
        %v2757 = vunpack.c.0.s8 %v2756
        %v2758 = vperm.slane %v2754, %v2757
        %v2759 = vsel %vm1332, %v2692, %v2681
        %v2761 = vunpack.c.l.s4 1983009808
        %v2762 = vunpack.c.0.s8 %v2761
        %v2763 = vperm.slane %v2759, %v2762
        %v2764 = vrot.slane %v2693, 4
        %v2765 = vsel %vm1332, %v2764, %v2691
        %v2767 = vunpack.c.l.s4 1983009808
        %v2768 = vunpack.c.0.s8 %v2767
        %v2769 = vperm.slane %v2765, %v2768
        %v2770 = vrot.slane %v2758, 4
        %v2771 = vsel %vm1332, %v2770, %v2752
        %v2772 = vrot.slane %v2752, 4
        %v2773 = vsel %vm1332, %v2758, %v2772
        %v2775 = vunpack.c.l.s4 1934713408
        %v2776 = vunpack.c.0.s8 %v2775
        %v2777 = vperm.slane %v2771, %v2776
        %v2779 = vunpack.c.l.s4 1934713408
        %v2780 = vunpack.c.0.s8 %v2779
        %v2781 = vperm.slane %v2773, %v2780
        %v2782 = vrot.slane %v2769, 4
        %v2783 = vsel %vm1332, %v2782, %v2763
        %v2784 = vrot.slane %v2763, 4
        %v2785 = vsel %vm1332, %v2769, %v2784
        %v2787 = vunpack.c.l.s4 1934713408
        %v2788 = vunpack.c.0.s8 %v2787
        %v2789 = vperm.slane %v2783, %v2788
        %v2791 = vunpack.c.l.s4 1934713408
        %v2792 = vunpack.c.0.s8 %v2791
        %v2793 = vperm.slane %v2785, %v2792
        %v2794 = vrot.slane %v2789, 4
        %v2795 = vsel %vm1332, %v2794, %v2777
        %v2796 = vrot.slane %v2777, 4
        %v2797 = vsel %vm1332, %v2789, %v2796
        %v2798 = vrot.slane %v2793, 4
        %v2799 = vsel %vm1332, %v2798, %v2781
        %v2800 = vrot.slane %v2781, 4
        %v2801 = vsel %vm1332, %v2793, %v2800
        %v2803 = vsel %vm1682, %v2315, 0
        %v2806 = vsel %vm1682, %v2501, 0
        %v2809 = vsel %vm1682, %v2555, 0
        %2811 = vmatpush.xpose.msra.mxu0 0.0
        %2812 = vmatpush.xpose.msra.mxu0 0.0
        %2813 = vmatpush.xpose.msra.mxu0 0.0
        %2814 = vmatpush.xpose.msra.mxu0 0.0
        %2815 = vmatpush.xpose.msra.mxu0 0.0
        %2816 = vmatpush.xpose.msra.mxu0 0.0
        %2817 = vmatpush.xpose.msra.mxu0 0.0
        %2818 = vmatpush.xpose.msra.mxu0 0.0
        %2819 = vmatpush.xpose.msra.mxu0 0.0
        %2820 = vmatpush.xpose.msra.mxu0 0.0
        %2821 = vmatpush.xpose.msra.mxu0 0.0
        %2822 = vmatpush.xpose.msra.mxu0 0.0
        %2823 = vmatpush.xpose.msra.mxu0 0.0
        %2824 = vmatpush.xpose.msra.mxu0 0.0
        %2825 = vmatpush.xpose.msra.mxu0 %v2809
        %2826 = vmatpush.xpose.msra.mxu0 %v2806
        %2827 = vmatmul.f32.gmra.mxu0 %v2803
        %v2828 = vpop.f32.mrf.mxu0
        %v2829 = vadd.f32 0.0, %v2828
        %2830 = vdwg.mxu0
        %v2832 = vsel %vm1682, %v2317, 0
        %v2835 = vsel %vm1682, %v2503, 0
        %v2838 = vsel %vm1682, %v2557, 0
        %2840 = vmatpush.xpose.msra.mxu0 0.0
        %2841 = vmatpush.xpose.msra.mxu0 0.0
        %2842 = vmatpush.xpose.msra.mxu0 0.0
        %2843 = vmatpush.xpose.msra.mxu0 0.0
        %2844 = vmatpush.xpose.msra.mxu0 0.0
        %2845 = vmatpush.xpose.msra.mxu0 0.0
        %2846 = vmatpush.xpose.msra.mxu0 0.0
        %2847 = vmatpush.xpose.msra.mxu0 0.0
        %2848 = vmatpush.xpose.msra.mxu0 0.0
        %2849 = vmatpush.xpose.msra.mxu0 0.0
        %2850 = vmatpush.xpose.msra.mxu0 0.0
        %2851 = vmatpush.xpose.msra.mxu0 0.0
        %2852 = vmatpush.xpose.msra.mxu0 0.0
        %2853 = vmatpush.xpose.msra.mxu0 0.0
        %2854 = vmatpush.xpose.msra.mxu0 %v2838
        %2855 = vmatpush.xpose.msra.mxu0 %v2835
        %2856 = vmatmul.f32.gmra.mxu0 %v2832
        %v2857 = vpop.f32.mrf.mxu0
        %v2858 = vadd.f32 0.0, %v2857
        %2859 = vdwg.mxu0
        %v2861 = vsel %vm1682, %v2319, 0
        %v2864 = vsel %vm1682, %v2505, 0
        %v2867 = vsel %vm1682, %v2559, 0
        %2869 = vmatpush.xpose.msra.mxu0 0.0
        %2870 = vmatpush.xpose.msra.mxu0 0.0
        %2871 = vmatpush.xpose.msra.mxu0 0.0
        %2872 = vmatpush.xpose.msra.mxu0 0.0
        %2873 = vmatpush.xpose.msra.mxu0 0.0
        %2874 = vmatpush.xpose.msra.mxu0 0.0
        %2875 = vmatpush.xpose.msra.mxu0 0.0
        %2876 = vmatpush.xpose.msra.mxu0 0.0
        %2877 = vmatpush.xpose.msra.mxu0 0.0
        %2878 = vmatpush.xpose.msra.mxu0 0.0
        %2879 = vmatpush.xpose.msra.mxu0 0.0
        %2880 = vmatpush.xpose.msra.mxu0 0.0
        %2881 = vmatpush.xpose.msra.mxu0 0.0
        %2882 = vmatpush.xpose.msra.mxu0 0.0
        %2883 = vmatpush.xpose.msra.mxu0 %v2867
        %2884 = vmatpush.xpose.msra.mxu0 %v2864
        %2885 = vmatmul.f32.gmra.mxu0 %v2861
        %v2886 = vpop.f32.mrf.mxu0
        %v2887 = vadd.f32 0.0, %v2886
        %2888 = vdwg.mxu0
        %v2890 = vsel %vm1682, %v2321, 0
        %v2893 = vsel %vm1682, %v2507, 0
        %v2896 = vsel %vm1682, %v2561, 0
        %2898 = vmatpush.xpose.msra.mxu0 0.0
        %2899 = vmatpush.xpose.msra.mxu0 0.0
        %2900 = vmatpush.xpose.msra.mxu0 0.0
        %2901 = vmatpush.xpose.msra.mxu0 0.0
        %2902 = vmatpush.xpose.msra.mxu0 0.0
        %2903 = vmatpush.xpose.msra.mxu0 0.0
        %2904 = vmatpush.xpose.msra.mxu0 0.0
        %2905 = vmatpush.xpose.msra.mxu0 0.0
        %2906 = vmatpush.xpose.msra.mxu0 0.0
        %2907 = vmatpush.xpose.msra.mxu0 0.0
        %2908 = vmatpush.xpose.msra.mxu0 0.0
        %2909 = vmatpush.xpose.msra.mxu0 0.0
        %2910 = vmatpush.xpose.msra.mxu0 0.0
        %2911 = vmatpush.xpose.msra.mxu0 0.0
        %2912 = vmatpush.xpose.msra.mxu0 %v2896
        %2913 = vmatpush.xpose.msra.mxu0 %v2893
        %2914 = vmatmul.f32.gmra.mxu0 %v2890
        %v2915 = vpop.f32.mrf.mxu0
        %v2916 = vadd.f32 0.0, %v2915
        %2917 = vdwg.mxu0
        %v2918 = vsel %vm2046, %v2829, -inf
        %2919 = vmax.xlane.f32.xlu0 %v2918
        %v2920 = vpop.xlane.xlu0 %2919
        %v2921 = vsel %vm2046, %v2858, -inf
        %2922 = vmax.xlane.f32.xlu0 %v2921
        %v2923 = vpop.xlane.xlu0 %2922
        %v2924 = vsel %vm2046, %v2887, -inf
        %2925 = vmax.xlane.f32.xlu0 %v2924
        %v2926 = vpop.xlane.xlu0 %2925
        %v2927 = vsel %vm2046, %v2916, -inf
        %2928 = vmax.xlane.f32.xlu0 %v2927
        %v2929 = vpop.xlane.xlu0 %2928
        %v2930 = vsub.f32 %v2829, %v2920
        %v2931 = vsub.f32 %v2858, %v2923
        %v2932 = vsub.f32 %v2887, %v2926
        %v2933 = vsub.f32 %v2916, %v2929
        %v2934 = vmul.f32 %v2930, 1.442695
        %v2935 = vpow.pop %v2934
        %v2936 = vmul.f32 %v2931, 1.442695
        %v2937 = vpow.pop %v2936
        %v2938 = vmul.f32 %v2932, 1.442695
        %v2939 = vpow.pop %v2938
        %v2940 = vmul.f32 %v2933, 1.442695
        %v2941 = vpow.pop %v2940
        %v2942 = vsel %vm2046, %v2935, 0.0
        %2943 = vadd.xlane.f32.xlu0 %v2942
        %v2944 = vpop.xlane.xlu0 %2943
        %v2945 = vsel %vm2046, %v2937, 0.0
        %2946 = vadd.xlane.f32.xlu0 %v2945
        %v2947 = vpop.xlane.xlu0 %2946
        %v2948 = vsel %vm2046, %v2939, 0.0
        %2949 = vadd.xlane.f32.xlu0 %v2948
        %v2950 = vpop.xlane.xlu0 %2949
        %v2951 = vsel %vm2046, %v2941, 0.0
        %2952 = vadd.xlane.f32.xlu0 %v2951
        %v2953 = vpop.xlane.xlu0 %2952
        %v2954 = vrcp.pop %v2944
        %v2955 = vrcp.pop %v2947
        %v2956 = vrcp.pop %v2950
        %v2957 = vrcp.pop %v2953
        %v2958 = vmul.f32 %v2935, %v2954
        %v2959 = vmul.f32 %v2937, %v2955
        %v2960 = vmul.f32 %v2939, %v2956
        %v2961 = vmul.f32 %v2941, %v2957
        %v2963 = vsel %vm2046, %v2958, 0
        %2965 = vmatpush.msra.mxu0 0.0
        %2966 = vmatpush.msra.mxu0 0.0
        %2967 = vmatpush.msra.mxu0 0.0
        %2968 = vmatpush.msra.mxu0 0.0
        %2969 = vmatpush.msra.mxu0 0.0
        %2970 = vmatpush.msra.mxu0 0.0
        %2971 = vmatpush.msra.mxu0 0.0
        %2972 = vmatpush.msra.mxu0 0.0
        %2973 = vmatpush.msra.mxu0 0.0
        %2974 = vmatpush.msra.mxu0 0.0
        %2975 = vmatpush.msra.mxu0 0.0
        %2976 = vmatpush.msra.mxu0 0.0
        %2977 = vmatpush.msra.mxu0 0.0
        %2978 = vmatpush.msra.mxu0 0.0
        %2979 = vmatpush.msra.mxu0 %v2795
        %2980 = vmatpush.msra.mxu0 %v2741
        %2981 = vmatmul.f32.gmra.mxu0 %v2963
        %v2982 = vpop.f32.mrf.mxu0
        %v2983 = vadd.f32 0.0, %v2982
        %2984 = vdwg.mxu0
        %v2986 = vsel %vm2046, %v2959, 0
        %2988 = vmatpush.msra.mxu0 0.0
        %2989 = vmatpush.msra.mxu0 0.0
        %2990 = vmatpush.msra.mxu0 0.0
        %2991 = vmatpush.msra.mxu0 0.0
        %2992 = vmatpush.msra.mxu0 0.0
        %2993 = vmatpush.msra.mxu0 0.0
        %2994 = vmatpush.msra.mxu0 0.0
        %2995 = vmatpush.msra.mxu0 0.0
        %2996 = vmatpush.msra.mxu0 0.0
        %2997 = vmatpush.msra.mxu0 0.0
        %2998 = vmatpush.msra.mxu0 0.0
        %2999 = vmatpush.msra.mxu0 0.0
        %3000 = vmatpush.msra.mxu0 0.0
        %3001 = vmatpush.msra.mxu0 0.0
        %3002 = vmatpush.msra.mxu0 %v2797
        %3003 = vmatpush.msra.mxu0 %v2743
        %3004 = vmatmul.f32.gmra.mxu0 %v2986
        %v3005 = vpop.f32.mrf.mxu0
        %v3006 = vadd.f32 0.0, %v3005
        %3007 = vdwg.mxu0
        %v3009 = vsel %vm2046, %v2960, 0
        %3011 = vmatpush.msra.mxu0 0.0
        %3012 = vmatpush.msra.mxu0 0.0
        %3013 = vmatpush.msra.mxu0 0.0
        %3014 = vmatpush.msra.mxu0 0.0
        %3015 = vmatpush.msra.mxu0 0.0
        %3016 = vmatpush.msra.mxu0 0.0
        %3017 = vmatpush.msra.mxu0 0.0
        %3018 = vmatpush.msra.mxu0 0.0
        %3019 = vmatpush.msra.mxu0 0.0
        %3020 = vmatpush.msra.mxu0 0.0
        %3021 = vmatpush.msra.mxu0 0.0
        %3022 = vmatpush.msra.mxu0 0.0
        %3023 = vmatpush.msra.mxu0 0.0
        %3024 = vmatpush.msra.mxu0 0.0
        %3025 = vmatpush.msra.mxu0 %v2799
        %3026 = vmatpush.msra.mxu0 %v2745
        %3027 = vmatmul.f32.gmra.mxu0 %v3009
        %v3028 = vpop.f32.mrf.mxu0
        %v3029 = vadd.f32 0.0, %v3028
        %3030 = vdwg.mxu0
        %v3032 = vsel %vm2046, %v2961, 0
        %3034 = vmatpush.msra.mxu0 0.0
        %3035 = vmatpush.msra.mxu0 0.0
        %3036 = vmatpush.msra.mxu0 0.0
        %3037 = vmatpush.msra.mxu0 0.0
        %3038 = vmatpush.msra.mxu0 0.0
        %3039 = vmatpush.msra.mxu0 0.0
        %3040 = vmatpush.msra.mxu0 0.0
        %3041 = vmatpush.msra.mxu0 0.0
        %3042 = vmatpush.msra.mxu0 0.0
        %3043 = vmatpush.msra.mxu0 0.0
        %3044 = vmatpush.msra.mxu0 0.0
        %3045 = vmatpush.msra.mxu0 0.0
        %3046 = vmatpush.msra.mxu0 0.0
        %3047 = vmatpush.msra.mxu0 0.0
        %3048 = vmatpush.msra.mxu0 %v2801
        %3049 = vmatpush.msra.mxu0 %v2747
        %3050 = vmatmul.f32.gmra.mxu0 %v3032
        %v3051 = vpop.f32.mrf.mxu0
        %v3052 = vadd.f32 0.0, %v3051
        %3053 = vdwg.mxu0
        %v3054 = vrot.slane %v3029, 4
        %v3055 = vsel %vm1332, %v3054, %v2983
        %v3056 = vrot.slane %v2983, 4
        %v3057 = vsel %vm1332, %v3029, %v3056
        %v3059 = vunpack.c.l.s4 1983009808
        %v3060 = vunpack.c.0.s8 %v3059
        %v3061 = vperm.slane %v3055, %v3060
        %v3063 = vunpack.c.l.s4 1983009808
        %v3064 = vunpack.c.0.s8 %v3063
        %v3065 = vperm.slane %v3057, %v3064
        %v3066 = vrot.slane %v3052, 4
        %v3067 = vsel %vm1332, %v3066, %v3006
        %v3068 = vrot.slane %v3006, 4
        %v3069 = vsel %vm1332, %v3052, %v3068
        %v3071 = vunpack.c.l.s4 1983009808
        %v3072 = vunpack.c.0.s8 %v3071
        %v3073 = vperm.slane %v3067, %v3072
        %v3075 = vunpack.c.l.s4 1983009808
        %v3076 = vunpack.c.0.s8 %v3075
        %v3077 = vperm.slane %v3069, %v3076
        %v3078 = vrot.slane %v3073, 4
        %v3079 = vsel %vm1332, %v3078, %v3061
        %v3080 = vrot.slane %v3061, 4
        %v3081 = vsel %vm1332, %v3073, %v3080
        %v3083 = vunpack.c.l.s4 1934713408
        %v3084 = vunpack.c.0.s8 %v3083
        %v3085 = vperm.slane %v3079, %v3084
        %v3087 = vunpack.c.l.s4 1934713408
        %v3088 = vunpack.c.0.s8 %v3087
        %v3089 = vperm.slane %v3081, %v3088
        %v3090 = vrot.slane %v3077, 4
        %v3091 = vsel %vm1332, %v3090, %v3065
        %v3092 = vrot.slane %v3065, 4
        %v3093 = vsel %vm1332, %v3077, %v3092
        %v3095 = vunpack.c.l.s4 1934713408
        %v3096 = vunpack.c.0.s8 %v3095
        %v3097 = vperm.slane %v3091, %v3096
        %v3099 = vunpack.c.l.s4 1934713408
        %v3100 = vunpack.c.0.s8 %v3099
        %v3101 = vperm.slane %v3093, %v3100
        %v3102 = vrot.slane %v3085, 4
        %v3103 = vsel %vm1332, 0.0, %v3102
        %v3104 = vrot.slane %v3089, 4
        %v3105 = vsel %vm1332, 0.0, %v3104
        %v3106 = vrot.slane %v3097, 4
        %v3107 = vsel %vm1332, 0.0, %v3106
        %v3108 = vrot.slane %v3101, 4
        %v3109 = vsel %vm1332, 0.0, %v3108
        %v3110 = vsel %vm1332, %v3104, %v3085
        %v3112 = vunpack.c.l.s4 1983009808
        %v3113 = vunpack.c.0.s8 %v3112
        %v3114 = vperm.slane %v3110, %v3113
        %v3115 = vrot.slane %v3105, 4
        %v3116 = vsel %vm1332, %v3115, %v3103
        %v3118 = vunpack.c.l.s4 1983009808
        %v3119 = vunpack.c.0.s8 %v3118
        %v3120 = vperm.slane %v3116, %v3119
        %v3121 = vsel %vm1332, %v3108, %v3097
        %v3123 = vunpack.c.l.s4 1983009808
        %v3124 = vunpack.c.0.s8 %v3123
        %v3125 = vperm.slane %v3121, %v3124
        %v3126 = vrot.slane %v3109, 4
        %v3127 = vsel %vm1332, %v3126, %v3107
        %v3129 = vunpack.c.l.s4 1983009808
        %v3130 = vunpack.c.0.s8 %v3129
        %v3131 = vperm.slane %v3127, %v3130
        %v3132 = vrot.slane %v3120, 4
        %v3133 = vsel %vm1332, %v3132, %v3114
        %v3134 = vrot.slane %v3114, 4
        %v3135 = vsel %vm1332, %v3120, %v3134
        %v3137 = vunpack.c.l.s4 1934713408
        %v3138 = vunpack.c.0.s8 %v3137
        %v3139 = vperm.slane %v3133, %v3138
        %v3141 = vunpack.c.l.s4 1934713408
        %v3142 = vunpack.c.0.s8 %v3141
        %v3143 = vperm.slane %v3135, %v3142
        %v3144 = vrot.slane %v3131, 4
        %v3145 = vsel %vm1332, %v3144, %v3125
        %v3146 = vrot.slane %v3125, 4
        %v3147 = vsel %vm1332, %v3131, %v3146
        %v3149 = vunpack.c.l.s4 1934713408
        %v3150 = vunpack.c.0.s8 %v3149
        %v3151 = vperm.slane %v3145, %v3150
        %v3153 = vunpack.c.l.s4 1934713408
        %v3154 = vunpack.c.0.s8 %v3153
        %v3155 = vperm.slane %v3147, %v3154
        %v3156 = vrot.slane %v3151, 4
        %v3157 = vsel %vm1332, %v3156, %v3139
        %v3158 = vrot.slane %v3139, 4
        %v3159 = vsel %vm1332, %v3151, %v3158
        %v3160 = vrot.slane %v3155, 4
        %v3161 = vsel %vm1332, %v3160, %v3143
        %v3162 = vrot.slane %v3143, 4
        %v3163 = vsel %vm1332, %v3155, %v3162
        %3165 = vrot.lane.b32.xlu0 %v3159, 8
        %v3166 = vpop.permute.xlu0 %3165
        %3169 = vrot.lane.b32.xlu0 %v3161, 16
        %v3170 = vpop.permute.xlu0 %3169
        %3173 = vrot.lane.b32.xlu0 %v3163, 24
        %v3174 = vpop.permute.xlu0 %3173
        %v3176 = vsel %vm1682, %v3157, %v3166
        %v3177 = vsel %vm2046, %v3176, %v3170
        %v3178 = vsel %vm2048, %v3177, %v3174
        %v3180 = vperm.slane %v1204, 0
        %v3183 = vsel %vm1207, %v3178, 0
        %3185 = vmatpush.msra.mxu0 0.0
        %3186 = vmatpush.msra.mxu0 0.0
        %3187 = vmatpush.msra.mxu0 0.0
        %3188 = vmatpush.msra.mxu0 0.0
        %3189 = vmatpush.msra.mxu0 0.0
        %3190 = vmatpush.msra.mxu0 0.0
        %3191 = vmatpush.msra.mxu0 0.0
        %3192 = vmatpush.msra.mxu0 0.0
        %3193 = vmatpush.msra.mxu0 0.0
        %3194 = vmatpush.msra.mxu0 0.0
        %3195 = vmatpush.msra.mxu0 0.0
        %3196 = vmatpush.msra.mxu0 0.0
        %3197 = vmatpush.msra.mxu0 %v1203
        %3198 = vmatpush.msra.mxu0 %v1202
        %3199 = vmatpush.msra.mxu0 %v1201
        %3200 = vmatpush.msra.mxu0 %v1200
        %3201 = vmatmul.f32.gmra.mxu0 %v3183
        %v3202 = vpop.f32.mrf.mxu0
        %v3203 = vadd.f32 %v3180, %v3202
        %3204 = vdwg.mxu0
        %v3205 = vadd.f32 %v2076, %v3203
        %v3206 = vld [vmem:[%s49] sm:$0x1]
        %v3207 = vld [vmem:[%s51] sm:$0x1]
        %v3208 = vsel %vm1207, %v3205, 0.0
        %3209 = vadd.xlane.f32.xlu0 %v3208
        %v3210 = vpop.xlane.xlu0 %3209
        %v3211 = vmul.f32 %v3210, %v1217
        %v3212 = vsub.f32 %v3205, %v3211
        %v3213 = vmul.f32 %v3212, %v3212
        %v3214 = vsel %vm1207, %v3213, 0.0
        %3215 = vadd.xlane.f32.xlu0 %v3214
        %v3216 = vpop.xlane.xlu0 %3215
        %v3217 = vmul.f32 %v3216, %v1217
        %v3218 = vadd.f32 %v3217, 1e-05
        %v3219 = vrsqrt.pop %v3218
        %v3220 = vmul.f32 %v3219, %v3218
        %v3221 = vmul.f32 %v3220, %v3219
        %v3222 = vmul.f32 0.5, %v3221
        %v3223 = vsub.f32 1.5, %v3222
        %v3224 = vmul.f32 %v3219, %v3223
        %vm3225 = vweird.f32 %v3218
        %vm3226 = vweird.f32 %v3219
        %vm3227 = vmor %vm3225, %vm3226
        %v3228 = vsel %vm3227, %v3219, %v3224
        %v3229 = vmul.f32 %v3212, %v3228
        %v3231 = vperm.slane %v3206, 0
        %v3233 = vmul.f32 %v3229, %v3231
        %v3235 = vperm.slane %v3207, 0
        %v3237 = vadd.f32 %v3233, %v3235
        %v3238 = vld [vmem:[#allocation17] sm:$0xff]
        %v3239 = vld [vmem:[#allocation17 + $0x8] sm:$0xff]
        %v3240 = vld [vmem:[#allocation17 + $0x10] sm:$0xff]
        %v3241 = vld [vmem:[#allocation17 + $0x18] sm:$0xff]
        %v3242 = vld [vmem:[%s55] sm:$0x1]
        %v3244 = vperm.slane %v3242, 0
        %v3247 = vsel %vm1207, %v3237, 0
        %3249 = vmatpush.msra.mxu0 0.0
        %3250 = vmatpush.msra.mxu0 0.0
        %3251 = vmatpush.msra.mxu0 0.0
        %3252 = vmatpush.msra.mxu0 0.0
        %3253 = vmatpush.msra.mxu0 0.0
        %3254 = vmatpush.msra.mxu0 0.0
        %3255 = vmatpush.msra.mxu0 0.0
        %3256 = vmatpush.msra.mxu0 0.0
        %3257 = vmatpush.msra.mxu0 0.0
        %3258 = vmatpush.msra.mxu0 0.0
        %3259 = vmatpush.msra.mxu0 0.0
        %3260 = vmatpush.msra.mxu0 0.0
        %3261 = vmatpush.msra.mxu0 %v3241
        %3262 = vmatpush.msra.mxu0 %v3240
        %3263 = vmatpush.msra.mxu0 %v3239
        %3264 = vmatpush.msra.mxu0 %v3238
        %3265 = vmatmul.f32.gmra.mxu0 %v3247
        %v3266 = vpop.f32.mrf.mxu0
        %v3267 = vadd.f32 %v3244, %v3266
        %3268 = vdwg.mxu0
        %v3269 = vmax.f32 %v3267, 0.0
        %v3270 = vld [vmem:[%s57] sm:$0xff]
        %v3271 = vld [vmem:[%s57 + $0x8] sm:$0xff]
        %v3272 = vld [vmem:[%s57 + $0x10] sm:$0xff]
        %v3273 = vld [vmem:[%s57 + $0x18] sm:$0xff]
        %v3274 = vld [vmem:[%s57 + $0x20] sm:$0xff]
        %v3275 = vld [vmem:[%s57 + $0x28] sm:$0xff]
        %v3276 = vld [vmem:[%s57 + $0x30] sm:$0xff]
        %v3277 = vld [vmem:[%s57 + $0x38] sm:$0xff]
        %v3278 = vld [vmem:[%s59] sm:$0x1]
        %v3280 = vperm.slane %v3278, 0
        %vm3282 = vcmask 523264
        %v3284 = vsel %vm3282, %v3269, 0
        %3286 = vmatpush.msra.mxu0 0.0
        %3287 = vmatpush.msra.mxu0 0.0
        %3288 = vmatpush.msra.mxu0 0.0
        %3289 = vmatpush.msra.mxu0 0.0
        %3290 = vmatpush.msra.mxu0 0.0
        %3291 = vmatpush.msra.mxu0 0.0
        %3292 = vmatpush.msra.mxu0 0.0
        %3293 = vmatpush.msra.mxu0 0.0
        %3294 = vmatpush.msra.mxu0 %v3277
        %3295 = vmatpush.msra.mxu0 %v3276
        %3296 = vmatpush.msra.mxu0 %v3275
        %3297 = vmatpush.msra.mxu0 %v3274
        %3298 = vmatpush.msra.mxu0 %v3273
        %3299 = vmatpush.msra.mxu0 %v3272
        %3300 = vmatpush.msra.mxu0 %v3271
        %3301 = vmatpush.msra.mxu0 %v3270
        %3302 = vmatmul.f32.gmra.mxu0 %v3284
        %v3303 = vpop.f32.mrf.mxu0
        %v3304 = vadd.f32 %v3280, %v3303
        %3305 = vdwg.mxu0
        %v3306 = vadd.f32 %v3205, %v3304
        %3307 = vst.msk [vmem:[%s1148] sm:$0xff] %vm1207, %v3306
        %s3308 = sand.u32 %s743, 1
        %s3309 = scalar_lea.sflag [#allocation4], %s3308
        %s3310 = sand.u32 %s743, 1
        %s3311 = smul.addr %s3310, 8
        %s3312 = scalar_lea.vmem [#allocation19], %s3311
        // Predicated region
        $region181: #{tpu_custom_call.1} parent=139 // pred_check
          %p3313 = pneg %p753
        $region182: #{tpu_custom_call.1} parent=139 // pred_check_branch
          %3315 = sbr.rel (%p3313) target = $region184
        $region183: #{tpu_custom_call.1} parent=139 // pred_region
          %3317 = vsyncadd %s3309, 0
          %s3318 = smul.addr %s85, 8
          %s3319 = scalar_lea.hbm %s61, %s3318
          %s3321 = sshll.u32 %s3312, 4
          %s3322 = int_to_ptr.vmem [resolvable:$true] %s3321
          %s3323 = sshll.u32 %s3319, 4
          %s3324 = int_to_ptr.hbm [resolvable:$true] %s3323
          %3326 = dma.vmem_to_hbm [thread:$0]  %s3322, 128, %s3324, %s3309
        $region184: #{tpu_custom_call.1} parent=139 // pred_fallthru
          _
      $region140: #{tpu_custom_call.1} parent=5 // pred_fallthru
        _
      %p3327 = scmp.le.s32.totalorder 2, %s80
      // Predicated region
      $region185: #{tpu_custom_call.1} parent=5 // pred_check
        %p3328 = pneg %p3327
      $region186: #{tpu_custom_call.1} parent=5 // pred_check_branch
        %3330 = sbr.rel (%p3328) target = $region188
      $region187: #{tpu_custom_call.1} parent=5 // pred_region
        %s3331 = ssub.s32 %s80, 2
        // Predicated region
        $region189: #{tpu_custom_call.1} parent=187 // pred_check
          %p3332 = pneg %p759
        $region190: #{tpu_custom_call.1} parent=187 // pred_check_branch
          %3334 = sbr.rel (%p3332) target = $region192
        $region191: #{tpu_custom_call.1} parent=187 // pred_region
          %s3335 = sand.u32 %s744, 1
          %s3336 = scalar_lea.sflag [#allocation4], %s3335
          %s3337 = sand.u32 %s744, 1
          %s3338 = smul.addr %s3337, 8
          %s3339 = scalar_lea.vmem [#allocation19], %s3338
          %3341 = dma.done %s3336, 128
        $region192: #{tpu_custom_call.1} parent=187 // pred_fallthru
          _
      $region188: #{tpu_custom_call.1} parent=5 // pred_fallthru
        _
    $region6: #{tpu_custom_call.1} parent=1 // loop_footer
      %s84 = sadd.s32 1, %s80
    $region7: #{tpu_custom_call.1} parent=1 // loop_footer_branch
      %79 = sbr.rel target = $region3
    $region8: #{tpu_custom_call.1} parent=1 // loop_exit
      _
    %3342 = vsyncpa [#allocation3], 1
    %s3343 = scalar_lea.sflag [#allocation3], 1
    %3344 = vsyncpa %s3343, 1
    %3345 = vsyncpa [#allocation6], 1
    %s3346 = scalar_lea.sflag [#allocation6], 1
    %3347 = vsyncpa %s3346, 1
    %3348 = vsyncpa [#allocation9], 1
    %3349 = vsyncpa [#allocation12], 1
    %3350 = vsyncpa [#allocation15], 1
    %3351 = vsyncpa [#allocation18], 1
    %3352 = vsyncpa [#allocation4], 1
    %s3353 = scalar_lea.sflag [#allocation4], 1
    %3354 = vsyncpa %s3353, 1

</llo_original>
